<compile_context>
chip_gen: v7x
topology: tpu7x:2x2x1
jax: 0.10.0
libtpu: 0.0.40
codegen_flags: <defaults>
</compile_context>

<pallas_src>
import jax
import jax.numpy as jnp
from jax.experimental import pallas as pl
from jax.experimental.pallas import tpu as pltpu


# ----------------------------------------------------------------------------
# Pallas kernels
# ----------------------------------------------------------------------------
def conv_bn_relu_pool_kernel(p_ref, w_ref, scale_ref, shift_ref, out_ref):
    # p_ref:       (4, TM, K) bf16 -- im2col patches for the 4 corners of each
    #                                 2x2 pooling window (rows = pooled pixels)
    # w_ref:       (K, Cout)  bf16
    # scale/shift: (1, Cout)  f32  (conv bias + eval-mode BN folded)
    # out_ref:     (TM, Cout) f32  -- pooled, post-ReLU activation
    w = w_ref[...]
    scale = scale_ref[...]
    shift = shift_ref[...]

    def corner(p):
        z = jnp.dot(p_ref[p], w, preferred_element_type=jnp.float32)
        return z * scale + shift

    pooled = jnp.maximum(jnp.maximum(corner(0), corner(1)),
                         jnp.maximum(corner(2), corner(3)))
    out_ref[...] = jnp.maximum(pooled, 0.0)  # ReLU commutes with max-pool


def fc_kernel(x_ref, w_ref, b_ref, out_ref):
    out_ref[...] = (
        jnp.dot(x_ref[...], w_ref[...], preferred_element_type=jnp.float32)
        + b_ref[...]
    )


# ----------------------------------------------------------------------------
# Wrappers (glue in plain JAX, hot path in Pallas)
# ----------------------------------------------------------------------------
def _im2col_pool_corners(x_nhwc, k, pad):
    """(B,H,W,C) -> (4, B*(H//2)*(W//2), k*k*C).

    kxk patches (stride 1, 'same' padding), grouped by 2x2 max-pool window
    corner.  Patch-column order is (kh, kw, cin).
    """
    B, H, W, C = x_nhwc.shape
    xp = jnp.pad(x_nhwc, ((0, 0), (pad, pad), (pad, pad), (0, 0)))
    cols = [xp[:, kh:kh + H, kw:kw + W, :]
            for kh in range(k) for kw in range(k)]
    patches = jnp.stack(cols, axis=3).reshape(B, H, W, k * k * C)
    Ho, Wo = H // 2, W // 2
    corners = [patches[:, dh::2, dw::2, :].reshape(B * Ho * Wo, k * k * C)
               for dh in (0, 1) for dw in (0, 1)]
    return jnp.stack(corners, axis=0)


def conv_bn_relu_pool(x_nhwc, w_pt, b_pt, gamma, beta, run_mean, run_var,
                      eps=1e-5, tile_rows=512):
    """Conv2d(5x5, stride 1, pad 2) + BatchNorm2d(eval) + ReLU + MaxPool2d(2)."""
    B, H, W, Cin = x_nhwc.shape
    Cout, _, k, _ = w_pt.shape
    Ho, Wo = H // 2, W // 2
    Mp = B * Ho * Wo
    K = k * k * Cin

    patches4 = _im2col_pool_corners(x_nhwc, k, k // 2).astype(jnp.bfloat16)
    w_mat = (jnp.transpose(w_pt, (2, 3, 1, 0))          # (kh, kw, cin, cout)
             .reshape(K, Cout).astype(jnp.bfloat16))

    # Fold conv bias + BN(eval) into per-channel scale/shift.
    scale = gamma * jax.lax.rsqrt(run_var + eps)        # (Cout,)
    shift = (b_pt - run_mean) * scale + beta            # (Cout,)
    scale = scale.reshape(1, Cout).astype(jnp.float32)
    shift = shift.reshape(1, Cout).astype(jnp.float32)

    # Tile over pooled output rows; tile_rows is a multiple of 8.
    tm = Mp if Mp <= tile_rows else tile_rows
    grid = (pl.cdiv(Mp, tm),)

    out = pl.pallas_call(
        conv_bn_relu_pool_kernel,
        out_shape=jax.ShapeDtypeStruct((Mp, Cout), jnp.float32),
        grid=grid,
        in_specs=[
            pl.BlockSpec((4, tm, K), lambda i: (0, i, 0)),   # streamed patches
            pl.BlockSpec((K, Cout), lambda i: (0, 0)),       # resident weight
            pl.BlockSpec((1, Cout), lambda i: (0, 0)),       # resident scale
            pl.BlockSpec((1, Cout), lambda i: (0, 0)),       # resident shift
        ],
        out_specs=pl.BlockSpec((tm, Cout), lambda i: (i, 0)),
        compiler_params=pltpu.CompilerParams(
            dimension_semantics=("parallel",)),
    )(patches4, w_mat, scale, shift)
    return out.reshape(B, Ho, Wo, Cout)


def linear_from_nhwc(x_flat, wf_pt, bf_pt, chw, tile_rows=256):
    """FC on an NHWC-flattened activation.

    x_flat: (B, H*W*C) in (h, w, c) order.  wf_pt: (O, C*H*W) in PyTorch's
    NCHW-flatten column order; the permutation is folded into the weight at
    trace time so no runtime activation transpose is needed.
    """
    B, F = x_flat.shape
    O = wf_pt.shape[0]
    C, H, W = chw
    wf_nhwc = (wf_pt.reshape(O, C, H, W)
               .transpose(0, 2, 3, 1)
               .reshape(O, F))
    w_mat = jnp.transpose(wf_nhwc).astype(jnp.bfloat16)   # (F, O)
    b_row = bf_pt.reshape(1, O).astype(jnp.float32)

    tb = B if B <= tile_rows else tile_rows
    grid = (pl.cdiv(B, tb),)
    return pl.pallas_call(
        fc_kernel,
        out_shape=jax.ShapeDtypeStruct((B, O), jnp.float32),
        grid=grid,
        in_specs=[
            pl.BlockSpec((tb, F), lambda i: (i, 0)),
            pl.BlockSpec((F, O), lambda i: (0, 0)),
            pl.BlockSpec((1, O), lambda i: (0, 0)),
        ],
        out_specs=pl.BlockSpec((tb, O), lambda i: (i, 0)),
        compiler_params=pltpu.CompilerParams(
            dimension_semantics=("parallel",)),
    )(x_flat.astype(jnp.bfloat16), w_mat, b_row)


# ----------------------------------------------------------------------------
# Full model
# ----------------------------------------------------------------------------
def init_params(key):
    ks = jax.random.split(key, 8)
    p = {}
    # layer1: Conv2d(1, 16, 5, pad=2) + BN(16)
    p["w1"] = 0.1 * jax.random.normal(ks[0], (16, 1, 5, 5), jnp.float32)
    p["b1"] = 0.1 * jax.random.normal(ks[1], (16,), jnp.float32)
    p["g1"] = 1.0 + 0.1 * jax.random.normal(ks[2], (16,), jnp.float32)
    p["be1"] = 0.1 * jax.random.normal(ks[3], (16,), jnp.float32)
    p["m1"] = jnp.zeros((16,), jnp.float32)
    p["v1"] = jnp.ones((16,), jnp.float32)
    # layer2: Conv2d(16, 32, 5, pad=2) + BN(32)
    p["w2"] = 0.05 * jax.random.normal(ks[4], (32, 16, 5, 5), jnp.float32)
    p["b2"] = 0.1 * jax.random.normal(ks[5], (32,), jnp.float32)
    p["g2"] = 1.0 + 0.1 * jax.random.normal(ks[6], (32,), jnp.float32)
    p["be2"] = 0.1 * jax.random.normal(ks[7], (32,), jnp.float32)
    p["m2"] = jnp.zeros((32,), jnp.float32)
    p["v2"] = jnp.ones((32,), jnp.float32)
    # fc: Linear(7*7*32, 10)
    kf = jax.random.split(jax.random.fold_in(key, 123), 2)
    p["wf"] = 0.02 * jax.random.normal(kf[0], (10, 7 * 7 * 32), jnp.float32)
    p["bf"] = 0.1 * jax.random.normal(kf[1], (10,), jnp.float32)
    return p


@jax.jit
def cnn_forward(x_nchw, params):
    p = params
    x = jnp.transpose(x_nchw, (0, 2, 3, 1))                    # NCHW -> NHWC
    x = conv_bn_relu_pool(x, p["w1"], p["b1"], p["g1"], p["be1"],
                          p["m1"], p["v1"])                    # (B, 14, 14, 16)
    x = conv_bn_relu_pool(x, p["w2"], p["b2"], p["g2"], p["be2"],
                          p["m2"], p["v2"])                    # (B, 7, 7, 32)
    B = x.shape[0]
    x = x.reshape(B, 7 * 7 * 32)                               # free NHWC flatten
    return linear_from_nhwc(x, p["wf"], p["bf"], chw=(32, 7, 7))   # (B, 10)


if __name__ == "__main__":
    key = jax.random.PRNGKey(0)
    k_in, k_par = jax.random.split(key)
    # Module's fc layer implies 28x28 single-channel input.
    x = jax.random.normal(k_in, (2, 1, 28, 28), jnp.float32)
    params = init_params(k_par)

    out = cnn_forward(x, params)
    out = jax.block_until_ready(out)
    assert out.shape == (2, 10) and out.dtype == jnp.float32
    print("KERNEL_OK")
</pallas_src>

<mosaic_0001>
module attributes {stable_mosaic.version = 11 : i64} {
  func.func @conv_bn_relu_pool_kernel(%arg0: i32, %arg1: memref<4x392x25xbf16, #tpu.memory_space<vmem>>, %arg2: memref<25x16xbf16, #tpu.memory_space<vmem>>, %arg3: memref<1x16xf32, #tpu.memory_space<vmem>>, %arg4: memref<1x16xf32, #tpu.memory_space<vmem>>, %arg5: memref<392x16xf32, #tpu.memory_space<vmem>>) attributes {dimension_semantics = [#tpu.dimension_semantics<parallel>], iteration_bounds = array<i64: 1>, scalar_prefetch = 0 : i64, scratch_operands = 0 : i64, tpu.core_type = #tpu.core_type<tc>, window_params = [{transform_indices = @transform_0, window_bounds = array<i64: 4, 392, 25>}, {pipeline_mode = #tpu.pipeline_mode<synchronous>, transform_indices = @transform_1, window_bounds = array<i64: 25, 16>}, {pipeline_mode = #tpu.pipeline_mode<synchronous>, transform_indices = @transform_2, window_bounds = array<i64: 1, 16>}, {pipeline_mode = #tpu.pipeline_mode<synchronous>, transform_indices = @transform_3, window_bounds = array<i64: 1, 16>}, {transform_indices = @transform_4, window_bounds = array<i64: 392, 16>}]} {
    %c0 = arith.constant 0 : index
    %c0_0 = arith.constant 0 : index
    %0 = vector.load %arg2[%c0, %c0_0] : memref<25x16xbf16, #tpu.memory_space<vmem>>, vector<25x16xbf16>
    %c0_1 = arith.constant 0 : index
    %c0_2 = arith.constant 0 : index
    %1 = vector.load %arg3[%c0_1, %c0_2] : memref<1x16xf32, #tpu.memory_space<vmem>>, vector<1x16xf32>
    %c0_3 = arith.constant 0 : index
    %c0_4 = arith.constant 0 : index
    %2 = vector.load %arg4[%c0_3, %c0_4] : memref<1x16xf32, #tpu.memory_space<vmem>>, vector<1x16xf32>
    %c0_5 = arith.constant 0 : index
    %c0_6 = arith.constant 0 : index
    %c0_7 = arith.constant 0 : index
    %3 = vector.load %arg1[%c0_5, %c0_6, %c0_7] : memref<4x392x25xbf16, #tpu.memory_space<vmem>>, vector<1x392x25xbf16>
    %4 = vector.shape_cast %3 : vector<1x392x25xbf16> to vector<392x25xbf16>
    %cst = arith.constant dense<0.000000e+00> : vector<392x16xf32>
    %5 = tpu.matmul %4, %0, %cst {dimension_numbers = #tpu.dot_dimension_numbers<[1], [0], [0], [1], [0, 0, 1, 1], [], []>} : vector<392x25xbf16>, vector<25x16xbf16>, vector<392x16xf32> -> vector<392x16xf32>
    %6 = vector.broadcast %1 : vector<1x16xf32> to vector<392x16xf32>
    %7 = arith.mulf %5, %6 : vector<392x16xf32>
    %8 = vector.broadcast %2 : vector<1x16xf32> to vector<392x16xf32>
    %9 = arith.addf %7, %8 : vector<392x16xf32>
    %c1 = arith.constant 1 : index
    %c0_8 = arith.constant 0 : index
    %c0_9 = arith.constant 0 : index
    %10 = vector.load %arg1[%c1, %c0_8, %c0_9] : memref<4x392x25xbf16, #tpu.memory_space<vmem>>, vector<1x392x25xbf16>
    %11 = vector.shape_cast %10 : vector<1x392x25xbf16> to vector<392x25xbf16>
    %cst_10 = arith.constant dense<0.000000e+00> : vector<392x16xf32>
    %12 = tpu.matmul %11, %0, %cst_10 {dimension_numbers = #tpu.dot_dimension_numbers<[1], [0], [0], [1], [0, 0, 1, 1], [], []>} : vector<392x25xbf16>, vector<25x16xbf16>, vector<392x16xf32> -> vector<392x16xf32>
    %13 = vector.broadcast %1 : vector<1x16xf32> to vector<392x16xf32>
    %14 = arith.mulf %12, %13 : vector<392x16xf32>
    %15 = vector.broadcast %2 : vector<1x16xf32> to vector<392x16xf32>
    %16 = arith.addf %14, %15 : vector<392x16xf32>
    %17 = arith.maximumf %9, %16 : vector<392x16xf32>
    %c2 = arith.constant 2 : index
    %c0_11 = arith.constant 0 : index
    %c0_12 = arith.constant 0 : index
    %18 = vector.load %arg1[%c2, %c0_11, %c0_12] : memref<4x392x25xbf16, #tpu.memory_space<vmem>>, vector<1x392x25xbf16>
    %19 = vector.shape_cast %18 : vector<1x392x25xbf16> to vector<392x25xbf16>
    %cst_13 = arith.constant dense<0.000000e+00> : vector<392x16xf32>
    %20 = tpu.matmul %19, %0, %cst_13 {dimension_numbers = #tpu.dot_dimension_numbers<[1], [0], [0], [1], [0, 0, 1, 1], [], []>} : vector<392x25xbf16>, vector<25x16xbf16>, vector<392x16xf32> -> vector<392x16xf32>
    %21 = vector.broadcast %1 : vector<1x16xf32> to vector<392x16xf32>
    %22 = arith.mulf %20, %21 : vector<392x16xf32>
    %23 = vector.broadcast %2 : vector<1x16xf32> to vector<392x16xf32>
    %24 = arith.addf %22, %23 : vector<392x16xf32>
    %c3 = arith.constant 3 : index
    %c0_14 = arith.constant 0 : index
    %c0_15 = arith.constant 0 : index
    %25 = vector.load %arg1[%c3, %c0_14, %c0_15] : memref<4x392x25xbf16, #tpu.memory_space<vmem>>, vector<1x392x25xbf16>
    %26 = vector.shape_cast %25 : vector<1x392x25xbf16> to vector<392x25xbf16>
    %cst_16 = arith.constant dense<0.000000e+00> : vector<392x16xf32>
    %27 = tpu.matmul %26, %0, %cst_16 {dimension_numbers = #tpu.dot_dimension_numbers<[1], [0], [0], [1], [0, 0, 1, 1], [], []>} : vector<392x25xbf16>, vector<25x16xbf16>, vector<392x16xf32> -> vector<392x16xf32>
    %28 = vector.broadcast %1 : vector<1x16xf32> to vector<392x16xf32>
    %29 = arith.mulf %27, %28 : vector<392x16xf32>
    %30 = vector.broadcast %2 : vector<1x16xf32> to vector<392x16xf32>
    %31 = arith.addf %29, %30 : vector<392x16xf32>
    %32 = arith.maximumf %24, %31 : vector<392x16xf32>
    %33 = arith.maximumf %17, %32 : vector<392x16xf32>
    %cst_17 = arith.constant 0.000000e+00 : f32
    %34 = vector.broadcast %cst_17 : f32 to vector<392x16xf32>
    %35 = arith.maximumf %33, %34 : vector<392x16xf32>
    %c0_18 = arith.constant 0 : index
    %c0_19 = arith.constant 0 : index
    %36 = vector.load %arg5[%c0_18, %c0_19] : memref<392x16xf32, #tpu.memory_space<vmem>>, vector<392x16xf32>
    tpu.vector_store %arg5[%c0_18, %c0_19], %35 {strides = array<i32>} : memref<392x16xf32, #tpu.memory_space<vmem>>, vector<392x16xf32>,
    return
  }
  func.func @transform_0(%arg0: i32) -> (i32, i32, i32) {
    %c0_i32 = arith.constant 0 : i32
    %c0_i32_0 = arith.constant 0 : i32
    %c0_i32_1 = arith.constant 0 : i32
    return %c0_i32, %arg0, %c0_i32_0 : i32, i32, i32
  }
  func.func @transform_1(%arg0: i32) -> (i32, i32) {
    %c0_i32 = arith.constant 0 : i32
    %c0_i32_0 = arith.constant 0 : i32
    %c0_i32_1 = arith.constant 0 : i32
    return %c0_i32, %c0_i32_0 : i32, i32
  }
  func.func @transform_2(%arg0: i32) -> (i32, i32) {
    %c0_i32 = arith.constant 0 : i32
    %c0_i32_0 = arith.constant 0 : i32
    %c0_i32_1 = arith.constant 0 : i32
    return %c0_i32, %c0_i32_0 : i32, i32
  }
  func.func @transform_3(%arg0: i32) -> (i32, i32) {
    %c0_i32 = arith.constant 0 : i32
    %c0_i32_0 = arith.constant 0 : i32
    %c0_i32_1 = arith.constant 0 : i32
    return %c0_i32, %c0_i32_0 : i32, i32
  }
  func.func @transform_4(%arg0: i32) -> (i32, i32) {
    %c0_i32 = arith.constant 0 : i32
    %c0_i32_0 = arith.constant 0 : i32
    return %arg0, %c0_i32 : i32, i32
  }
}

module attributes {stable_mosaic.version = 11 : i64} {
  func.func @conv_bn_relu_pool_kernel(%arg0: i32, %arg1: memref<4x98x400xbf16, #tpu.memory_space<vmem>>, %arg2: memref<400x32xbf16, #tpu.memory_space<vmem>>, %arg3: memref<1x32xf32, #tpu.memory_space<vmem>>, %arg4: memref<1x32xf32, #tpu.memory_space<vmem>>, %arg5: memref<98x32xf32, #tpu.memory_space<vmem>>) attributes {dimension_semantics = [#tpu.dimension_semantics<parallel>], iteration_bounds = array<i64: 1>, scalar_prefetch = 0 : i64, scratch_operands = 0 : i64, tpu.core_type = #tpu.core_type<tc>, window_params = [{transform_indices = @transform_0, window_bounds = array<i64: 4, 98, 400>}, {pipeline_mode = #tpu.pipeline_mode<synchronous>, transform_indices = @transform_1, window_bounds = array<i64: 400, 32>}, {pipeline_mode = #tpu.pipeline_mode<synchronous>, transform_indices = @transform_2, window_bounds = array<i64: 1, 32>}, {pipeline_mode = #tpu.pipeline_mode<synchronous>, transform_indices = @transform_3, window_bounds = array<i64: 1, 32>}, {transform_indices = @transform_4, window_bounds = array<i64: 98, 32>}]} {
    %c0 = arith.constant 0 : index
    %c0_0 = arith.constant 0 : index
    %0 = vector.load %arg2[%c0, %c0_0] : memref<400x32xbf16, #tpu.memory_space<vmem>>, vector<400x32xbf16>
    %c0_1 = arith.constant 0 : index
    %c0_2 = arith.constant 0 : index
    %1 = vector.load %arg3[%c0_1, %c0_2] : memref<1x32xf32, #tpu.memory_space<vmem>>, vector<1x32xf32>
    %c0_3 = arith.constant 0 : index
    %c0_4 = arith.constant 0 : index
    %2 = vector.load %arg4[%c0_3, %c0_4] : memref<1x32xf32, #tpu.memory_space<vmem>>, vector<1x32xf32>
    %c0_5 = arith.constant 0 : index
    %c0_6 = arith.constant 0 : index
    %c0_7 = arith.constant 0 : index
    %3 = vector.load %arg1[%c0_5, %c0_6, %c0_7] : memref<4x98x400xbf16, #tpu.memory_space<vmem>>, vector<1x98x400xbf16>
    %4 = vector.shape_cast %3 : vector<1x98x400xbf16> to vector<98x400xbf16>
    %cst = arith.constant dense<0.000000e+00> : vector<98x32xf32>
    %5 = tpu.matmul %4, %0, %cst {dimension_numbers = #tpu.dot_dimension_numbers<[1], [0], [0], [1], [0, 0, 1, 1], [], []>} : vector<98x400xbf16>, vector<400x32xbf16>, vector<98x32xf32> -> vector<98x32xf32>
    %6 = vector.broadcast %1 : vector<1x32xf32> to vector<98x32xf32>
    %7 = arith.mulf %5, %6 : vector<98x32xf32>
    %8 = vector.broadcast %2 : vector<1x32xf32> to vector<98x32xf32>
    %9 = arith.addf %7, %8 : vector<98x32xf32>
    %c1 = arith.constant 1 : index
    %c0_8 = arith.constant 0 : index
    %c0_9 = arith.constant 0 : index
    %10 = vector.load %arg1[%c1, %c0_8, %c0_9] : memref<4x98x400xbf16, #tpu.memory_space<vmem>>, vector<1x98x400xbf16>
    %11 = vector.shape_cast %10 : vector<1x98x400xbf16> to vector<98x400xbf16>
    %cst_10 = arith.constant dense<0.000000e+00> : vector<98x32xf32>
    %12 = tpu.matmul %11, %0, %cst_10 {dimension_numbers = #tpu.dot_dimension_numbers<[1], [0], [0], [1], [0, 0, 1, 1], [], []>} : vector<98x400xbf16>, vector<400x32xbf16>, vector<98x32xf32> -> vector<98x32xf32>
    %13 = vector.broadcast %1 : vector<1x32xf32> to vector<98x32xf32>
    %14 = arith.mulf %12, %13 : vector<98x32xf32>
    %15 = vector.broadcast %2 : vector<1x32xf32> to vector<98x32xf32>
    %16 = arith.addf %14, %15 : vector<98x32xf32>
    %17 = arith.maximumf %9, %16 : vector<98x32xf32>
    %c2 = arith.constant 2 : index
    %c0_11 = arith.constant 0 : index
    %c0_12 = arith.constant 0 : index
    %18 = vector.load %arg1[%c2, %c0_11, %c0_12] : memref<4x98x400xbf16, #tpu.memory_space<vmem>>, vector<1x98x400xbf16>
    %19 = vector.shape_cast %18 : vector<1x98x400xbf16> to vector<98x400xbf16>
    %cst_13 = arith.constant dense<0.000000e+00> : vector<98x32xf32>
    %20 = tpu.matmul %19, %0, %cst_13 {dimension_numbers = #tpu.dot_dimension_numbers<[1], [0], [0], [1], [0, 0, 1, 1], [], []>} : vector<98x400xbf16>, vector<400x32xbf16>, vector<98x32xf32> -> vector<98x32xf32>
    %21 = vector.broadcast %1 : vector<1x32xf32> to vector<98x32xf32>
    %22 = arith.mulf %20, %21 : vector<98x32xf32>
    %23 = vector.broadcast %2 : vector<1x32xf32> to vector<98x32xf32>
    %24 = arith.addf %22, %23 : vector<98x32xf32>
    %c3 = arith.constant 3 : index
    %c0_14 = arith.constant 0 : index
    %c0_15 = arith.constant 0 : index
    %25 = vector.load %arg1[%c3, %c0_14, %c0_15] : memref<4x98x400xbf16, #tpu.memory_space<vmem>>, vector<1x98x400xbf16>
    %26 = vector.shape_cast %25 : vector<1x98x400xbf16> to vector<98x400xbf16>
    %cst_16 = arith.constant dense<0.000000e+00> : vector<98x32xf32>
    %27 = tpu.matmul %26, %0, %cst_16 {dimension_numbers = #tpu.dot_dimension_numbers<[1], [0], [0], [1], [0, 0, 1, 1], [], []>} : vector<98x400xbf16>, vector<400x32xbf16>, vector<98x32xf32> -> vector<98x32xf32>
    %28 = vector.broadcast %1 : vector<1x32xf32> to vector<98x32xf32>
    %29 = arith.mulf %27, %28 : vector<98x32xf32>
    %30 = vector.broadcast %2 : vector<1x32xf32> to vector<98x32xf32>
    %31 = arith.addf %29, %30 : vector<98x32xf32>
    %32 = arith.maximumf %24, %31 : vector<98x32xf32>
    %33 = arith.maximumf %17, %32 : vector<98x32xf32>
    %cst_17 = arith.constant 0.000000e+00 : f32
    %34 = vector.broadcast %cst_17 : f32 to vector<98x32xf32>
    %35 = arith.maximumf %33, %34 : vector<98x32xf32>
    %c0_18 = arith.constant 0 : index
    %c0_19 = arith.constant 0 : index
    %36 = vector.load %arg5[%c0_18, %c0_19] : memref<98x32xf32, #tpu.memory_space<vmem>>, vector<98x32xf32>
    tpu.vector_store %arg5[%c0_18, %c0_19], %35 {strides = array<i32>} : memref<98x32xf32, #tpu.memory_space<vmem>>, vector<98x32xf32>,
    return
  }
  func.func @transform_0(%arg0: i32) -> (i32, i32, i32) {
    %c0_i32 = arith.constant 0 : i32
    %c0_i32_0 = arith.constant 0 : i32
    %c0_i32_1 = arith.constant 0 : i32
    return %c0_i32, %arg0, %c0_i32_0 : i32, i32, i32
  }
  func.func @transform_1(%arg0: i32) -> (i32, i32) {
    %c0_i32 = arith.constant 0 : i32
    %c0_i32_0 = arith.constant 0 : i32
    %c0_i32_1 = arith.constant 0 : i32
    return %c0_i32, %c0_i32_0 : i32, i32
  }
  func.func @transform_2(%arg0: i32) -> (i32, i32) {
    %c0_i32 = arith.constant 0 : i32
    %c0_i32_0 = arith.constant 0 : i32
    %c0_i32_1 = arith.constant 0 : i32
    return %c0_i32, %c0_i32_0 : i32, i32
  }
  func.func @transform_3(%arg0: i32) -> (i32, i32) {
    %c0_i32 = arith.constant 0 : i32
    %c0_i32_0 = arith.constant 0 : i32
    %c0_i32_1 = arith.constant 0 : i32
    return %c0_i32, %c0_i32_0 : i32, i32
  }
  func.func @transform_4(%arg0: i32) -> (i32, i32) {
    %c0_i32 = arith.constant 0 : i32
    %c0_i32_0 = arith.constant 0 : i32
    return %arg0, %c0_i32 : i32, i32
  }
}

module attributes {stable_mosaic.version = 11 : i64} {
  func.func @fc_kernel(%arg0: i32, %arg1: memref<2x1568xbf16, #tpu.memory_space<vmem>>, %arg2: memref<1568x10xbf16, #tpu.memory_space<vmem>>, %arg3: memref<1x10xf32, #tpu.memory_space<vmem>>, %arg4: memref<2x10xf32, #tpu.memory_space<vmem>>) attributes {dimension_semantics = [#tpu.dimension_semantics<parallel>], iteration_bounds = array<i64: 1>, scalar_prefetch = 0 : i64, scratch_operands = 0 : i64, tpu.core_type = #tpu.core_type<tc>, window_params = [{transform_indices = @transform_0, window_bounds = array<i64: 2, 1568>}, {pipeline_mode = #tpu.pipeline_mode<synchronous>, transform_indices = @transform_1, window_bounds = array<i64: 1568, 10>}, {pipeline_mode = #tpu.pipeline_mode<synchronous>, transform_indices = @transform_2, window_bounds = array<i64: 1, 10>}, {transform_indices = @transform_3, window_bounds = array<i64: 2, 10>}]} {
    %c0 = arith.constant 0 : index
    %c0_0 = arith.constant 0 : index
    %0 = vector.load %arg1[%c0, %c0_0] : memref<2x1568xbf16, #tpu.memory_space<vmem>>, vector<2x1568xbf16>
    %c0_1 = arith.constant 0 : index
    %c0_2 = arith.constant 0 : index
    %1 = vector.load %arg2[%c0_1, %c0_2] : memref<1568x10xbf16, #tpu.memory_space<vmem>>, vector<1568x10xbf16>
    %cst = arith.constant dense<0.000000e+00> : vector<2x10xf32>
    %2 = tpu.matmul %0, %1, %cst {dimension_numbers = #tpu.dot_dimension_numbers<[1], [0], [0], [1], [0, 0, 1, 1], [], []>} : vector<2x1568xbf16>, vector<1568x10xbf16>, vector<2x10xf32> -> vector<2x10xf32>
    %c0_3 = arith.constant 0 : index
    %c0_4 = arith.constant 0 : index
    %3 = vector.load %arg3[%c0_3, %c0_4] : memref<1x10xf32, #tpu.memory_space<vmem>>, vector<1x10xf32>
    %4 = vector.broadcast %3 : vector<1x10xf32> to vector<2x10xf32>
    %5 = arith.addf %2, %4 : vector<2x10xf32>
    %c0_5 = arith.constant 0 : index
    %c0_6 = arith.constant 0 : index
    %6 = vector.load %arg4[%c0_5, %c0_6] : memref<2x10xf32, #tpu.memory_space<vmem>>, vector<2x10xf32>
    tpu.vector_store %arg4[%c0_5, %c0_6], %5 {strides = array<i32>} : memref<2x10xf32, #tpu.memory_space<vmem>>, vector<2x10xf32>,
    return
  }
  func.func @transform_0(%arg0: i32) -> (i32, i32) {
    %c0_i32 = arith.constant 0 : i32
    %c0_i32_0 = arith.constant 0 : i32
    return %arg0, %c0_i32 : i32, i32
  }
  func.func @transform_1(%arg0: i32) -> (i32, i32) {
    %c0_i32 = arith.constant 0 : i32
    %c0_i32_0 = arith.constant 0 : i32
    %c0_i32_1 = arith.constant 0 : i32
    return %c0_i32, %c0_i32_0 : i32, i32
  }
  func.func @transform_2(%arg0: i32) -> (i32, i32) {
    %c0_i32 = arith.constant 0 : i32
    %c0_i32_0 = arith.constant 0 : i32
    %c0_i32_1 = arith.constant 0 : i32
    return %c0_i32, %c0_i32_0 : i32, i32
  }
  func.func @transform_3(%arg0: i32) -> (i32, i32) {
    %c0_i32 = arith.constant 0 : i32
    %c0_i32_0 = arith.constant 0 : i32
    return %arg0, %c0_i32 : i32, i32
  }
}

</mosaic_0001>

<llo_original>
// kernel: cnn_forward.3
$region0: #{cnn_forward.3}
  #allocation0 [shape = 'u32[]', space=smem, size = 0x4, offset = 0x4, fixed_abs, tag = 'smem constant byte address 0x4 - core index']
  #allocation1 [shape = 'u32[144,128]{1,0:T(1,128)}', space=vmem, size = 0x12000, scoped, tag = 'internal scratch']
  %s0 = inlined_call_operand.vmem [shape: bf16[4,392,25], index: 0, kind: input, shape index: {}]
  %s1 = inlined_call_operand.vmem [shape: bf16[25,16], index: 1, kind: input, shape index: {}]
  %s2 = inlined_call_operand.vmem [shape: f32[1,16], index: 2, kind: input, shape index: {}]
  %s3 = inlined_call_operand.vmem [shape: f32[1,16], index: 3, kind: input, shape index: {}]
  %s4 = inlined_call_operand.vmem [shape: f32[392,16], index: 4, kind: output, shape index: {}]
  %s5 = sld [smem:[#allocation0]]
  $region26: #{cnn_forward.3} parent=0
    _
  %s7 = ssub.s32 1, %s5
  %s8 = scalar_select 0, %s7, %s5
  // Predicated region
  $region2: #{cnn_forward.3} parent=0 // pred_check
    _
  $region3: #{cnn_forward.3} parent=0 // pred_check_branch
    %10 = sbr.rel (0) target = $region5
  $region4: #{cnn_forward.3} parent=0 // pred_region
    _
  $region5: #{cnn_forward.3} parent=0 // pred_fallthru
    _
  // Predicated region
  $region6: #{cnn_forward.3} parent=0 // pred_check
    _
  $region7: #{cnn_forward.3} parent=0 // pred_check_branch
    %12 = sbr.rel (0) target = $region9
  $region8: #{cnn_forward.3} parent=0 // pred_region
    _
  $region9: #{cnn_forward.3} parent=0 // pred_fallthru
    _
  // Predicated region
  $region10: #{cnn_forward.3} parent=0 // pred_check
    _
  $region11: #{cnn_forward.3} parent=0 // pred_check_branch
    %14 = sbr.rel (0) target = $region13
  $region12: #{cnn_forward.3} parent=0 // pred_region
    _
  $region13: #{cnn_forward.3} parent=0 // pred_fallthru
    _
  // Predicated region
  $region14: #{cnn_forward.3} parent=0 // pred_check
    _
  $region15: #{cnn_forward.3} parent=0 // pred_check_branch
    %16 = sbr.rel (0) target = $region17
  $region16: #{cnn_forward.3} parent=0 // pred_region
    _
  $region17: #{cnn_forward.3} parent=0 // pred_fallthru
    _
  %v18 = vld [vmem:[%s1] sm:$0xf]
  %v19 = vld [vmem:[%s1 + $0x4] sm:$0xf]
  %v20 = vld [vmem:[%s1 + $0x8] sm:$0xf]
  %v21 = vld [vmem:[%s1 + $0xc] sm:$0x1]
  %v22 = vld [vmem:[%s2] sm:$0x1]
  %v23 = vld [vmem:[%s3] sm:$0x1]
  %v24 = vld [vmem:[%s0] sm:$0xf]
  %v25 = vld [vmem:[%s0 + $0x4] sm:$0xf]
  %v26 = vld [vmem:[%s0 + $0x8] sm:$0xf]
  %v27 = vld [vmem:[%s0 + $0xc] sm:$0xf]
  %v28 = vld [vmem:[%s0 + $0x10] sm:$0xf]
  %v29 = vld [vmem:[%s0 + $0x14] sm:$0xf]
  %v30 = vld [vmem:[%s0 + $0x18] sm:$0xf]
  %v31 = vld [vmem:[%s0 + $0x1c] sm:$0xf]
  %v32 = vld [vmem:[%s0 + $0x20] sm:$0xf]
  %v33 = vld [vmem:[%s0 + $0x24] sm:$0xf]
  %v34 = vld [vmem:[%s0 + $0x28] sm:$0xf]
  %v35 = vld [vmem:[%s0 + $0x2c] sm:$0xf]
  %v36 = vld [vmem:[%s0 + $0x30] sm:$0xf]
  %v37 = vld [vmem:[%s0 + $0x34] sm:$0xf]
  %v38 = vld [vmem:[%s0 + $0x38] sm:$0xf]
  %v39 = vld [vmem:[%s0 + $0x3c] sm:$0xf]
  %v40 = vld [vmem:[%s0 + $0x40] sm:$0xf]
  %v41 = vld [vmem:[%s0 + $0x44] sm:$0xf]
  %v42 = vld [vmem:[%s0 + $0x48] sm:$0xf]
  %v43 = vld [vmem:[%s0 + $0x4c] sm:$0xf]
  %v44 = vld [vmem:[%s0 + $0x50] sm:$0xf]
  %v45 = vld [vmem:[%s0 + $0x54] sm:$0xf]
  %v46 = vld [vmem:[%s0 + $0x58] sm:$0xf]
  %v47 = vld [vmem:[%s0 + $0x5c] sm:$0xf]
  %v48 = vld [vmem:[%s0 + $0x60] sm:$0xf]
  %v49 = vld [vmem:[%s0 + $0x64] sm:$0xf]
  %v50 = vld [vmem:[%s0 + $0x68] sm:$0xf]
  %v51 = vld [vmem:[%s0 + $0x6c] sm:$0xf]
  %v52 = vld [vmem:[%s0 + $0x70] sm:$0xf]
  %v53 = vld [vmem:[%s0 + $0x74] sm:$0xf]
  %v54 = vld [vmem:[%s0 + $0x78] sm:$0xf]
  %v55 = vld [vmem:[%s0 + $0x7c] sm:$0xf]
  %v56 = vld [vmem:[%s0 + $0x80] sm:$0xf]
  %v57 = vld [vmem:[%s0 + $0x84] sm:$0xf]
  %v58 = vld [vmem:[%s0 + $0x88] sm:$0xf]
  %v59 = vld [vmem:[%s0 + $0x8c] sm:$0xf]
  %v60 = vld [vmem:[%s0 + $0x90] sm:$0xf]
  %v61 = vld [vmem:[%s0 + $0x94] sm:$0xf]
  %v62 = vld [vmem:[%s0 + $0x98] sm:$0xf]
  %v63 = vld [vmem:[%s0 + $0x9c] sm:$0xf]
  %v64 = vld [vmem:[%s0 + $0xa0] sm:$0xf]
  %v65 = vld [vmem:[%s0 + $0xa4] sm:$0xf]
  %v66 = vld [vmem:[%s0 + $0xa8] sm:$0xf]
  %v67 = vld [vmem:[%s0 + $0xac] sm:$0xf]
  %v68 = vld [vmem:[%s0 + $0xb0] sm:$0xf]
  %v69 = vld [vmem:[%s0 + $0xb4] sm:$0xf]
  %v70 = vld [vmem:[%s0 + $0xb8] sm:$0xf]
  %v71 = vld [vmem:[%s0 + $0xbc] sm:$0xf]
  %v72 = vld [vmem:[%s0 + $0xc0] sm:$0xf]
  %v122 = vunpack.c.l.b16 %v24
  %v123 = vunpack.c.l.b16 %v25
  %v124 = vunpack.c.l.b16 %v26
  %v125 = vunpack.c.l.b16 %v27
  %v126 = vunpack.c.l.b16 %v28
  %v127 = vunpack.c.l.b16 %v29
  %v128 = vunpack.c.l.b16 %v30
  %v129 = vunpack.c.l.b16 %v31
  %v130 = vunpack.c.l.b16 %v32
  %v131 = vunpack.c.l.b16 %v33
  %v132 = vunpack.c.l.b16 %v34
  %v133 = vunpack.c.l.b16 %v35
  %v134 = vunpack.c.l.b16 %v36
  %v135 = vunpack.c.l.b16 %v37
  %v136 = vunpack.c.l.b16 %v38
  %v137 = vunpack.c.l.b16 %v39
  %v138 = vunpack.c.l.b16 %v40
  %v139 = vunpack.c.l.b16 %v41
  %v140 = vunpack.c.l.b16 %v42
  %v141 = vunpack.c.l.b16 %v43
  %v142 = vunpack.c.l.b16 %v44
  %v143 = vunpack.c.l.b16 %v45
  %v144 = vunpack.c.l.b16 %v46
  %v145 = vunpack.c.l.b16 %v47
  %v146 = vunpack.c.l.b16 %v48
  %v147 = vunpack.c.l.b16 %v49
  %v148 = vunpack.c.l.b16 %v50
  %v149 = vunpack.c.l.b16 %v51
  %v150 = vunpack.c.l.b16 %v52
  %v151 = vunpack.c.l.b16 %v53
  %v152 = vunpack.c.l.b16 %v54
  %v153 = vunpack.c.l.b16 %v55
  %v154 = vunpack.c.l.b16 %v56
  %v155 = vunpack.c.l.b16 %v57
  %v156 = vunpack.c.l.b16 %v58
  %v157 = vunpack.c.l.b16 %v59
  %v158 = vunpack.c.l.b16 %v60
  %v159 = vunpack.c.l.b16 %v61
  %v160 = vunpack.c.l.b16 %v62
  %v161 = vunpack.c.l.b16 %v63
  %v162 = vunpack.c.l.b16 %v64
  %v163 = vunpack.c.l.b16 %v65
  %v164 = vunpack.c.l.b16 %v66
  %v165 = vunpack.c.l.b16 %v67
  %v166 = vunpack.c.l.b16 %v68
  %v167 = vunpack.c.l.b16 %v69
  %v168 = vunpack.c.l.b16 %v70
  %v169 = vunpack.c.l.b16 %v71
  %v170 = vunpack.c.l.b16 %v72
  %v171 = vpack.c.b16 %v123, %v122
  %v172 = vpack.c.b16 %v125, %v124
  %v173 = vpack.c.b16 %v127, %v126
  %v174 = vpack.c.b16 %v129, %v128
  %v175 = vpack.c.b16 %v131, %v130
  %v176 = vpack.c.b16 %v133, %v132
  %v177 = vpack.c.b16 %v135, %v134
  %v178 = vpack.c.b16 %v137, %v136
  %v179 = vpack.c.b16 %v139, %v138
  %v180 = vpack.c.b16 %v141, %v140
  %v181 = vpack.c.b16 %v143, %v142
  %v182 = vpack.c.b16 %v145, %v144
  %v183 = vpack.c.b16 %v147, %v146
  %v184 = vpack.c.b16 %v149, %v148
  %v185 = vpack.c.b16 %v151, %v150
  %v186 = vpack.c.b16 %v153, %v152
  %v187 = vpack.c.b16 %v155, %v154
  %v188 = vpack.c.b16 %v157, %v156
  %v189 = vpack.c.b16 %v159, %v158
  %v190 = vpack.c.b16 %v161, %v160
  %v191 = vpack.c.b16 %v163, %v162
  %v192 = vpack.c.b16 %v165, %v164
  %v193 = vpack.c.b16 %v167, %v166
  %v194 = vpack.c.b16 %v169, %v168
  %v195 = vpack.c.b16 %v170, %v170
  %v200 = vunpack.c.l.b16 %v18
  %v201 = vunpack.c.l.b16 %v19
  %v202 = vunpack.c.l.b16 %v20
  %v203 = vunpack.c.l.b16 %v21
  %v204 = vpack.c.b16 %v201, %v200
  %v205 = vpack.c.b16 %v203, %v202
  %vm207 = vcmask 203776
  %v209 = vsel %vm207, %v171, 0
  %v212 = vsel %vm207, %v172, 0
  %v215 = vsel %vm207, %v173, 0
  %v218 = vsel %vm207, %v174, 0
  %v221 = vsel %vm207, %v175, 0
  %v224 = vsel %vm207, %v176, 0
  %v227 = vsel %vm207, %v177, 0
  %v230 = vsel %vm207, %v178, 0
  %v233 = vsel %vm207, %v179, 0
  %v236 = vsel %vm207, %v180, 0
  %v239 = vsel %vm207, %v181, 0
  %v242 = vsel %vm207, %v182, 0
  %v245 = vsel %vm207, %v183, 0
  %v248 = vsel %vm207, %v184, 0
  %v251 = vsel %vm207, %v185, 0
  %v254 = vsel %vm207, %v186, 0
  %v257 = vsel %vm207, %v187, 0
  %v260 = vsel %vm207, %v188, 0
  %v263 = vsel %vm207, %v189, 0
  %v266 = vsel %vm207, %v190, 0
  %v269 = vsel %vm207, %v191, 0
  %v272 = vsel %vm207, %v192, 0
  %v275 = vsel %vm207, %v193, 0
  %v278 = vsel %vm207, %v194, 0
  %v281 = vsel %vm207, %v195, 0
  %vm283 = vcmask 1043456
  %vm284 = vcmask 1044480
  %v285 = vsel %vm283, 4294967295, 65535
  %v286 = vsel %vm284, %v285, 0
  %v288 = vand.u32 %v205, %v286
  %290 = vmatprep.subr.bf16.mxu0 0
  %291 = vmatpush1.bf16.msra.mxu0 %v204
  %292 = vmatprep.subr.bf16.mxu0 0
  %293 = vmatpush1.bf16.msra.mxu0 %v288
  %294 = vmatprep.subr.bf16.mxu0 0
  %295 = vmatpush1.bf16.msra.mxu0 0
  %296 = vmatprep.subr.bf16.mxu0 0
  %297 = vmatpush1.bf16.msra.mxu0 0
  %298 = vmatprep.subr.bf16.mxu0 0
  %299 = vmatpush1.bf16.msra.mxu0 0
  %300 = vmatprep.subr.bf16.mxu0 0
  %301 = vmatpush1.bf16.msra.mxu0 0
  %302 = vmatprep.subr.bf16.mxu0 0
  %303 = vmatpush1.bf16.msra.mxu0 0
  %304 = vmatprep.subr.bf16.mxu0 0
  %305 = vmatpush1.bf16.msra.mxu0 0
  %306 = vmatprep.subr.bf16.mxu0 0
  %307 = vmatpush1.bf16.msra.mxu0 0
  %308 = vmatprep.subr.bf16.mxu0 0
  %309 = vmatpush1.bf16.msra.mxu0 0
  %310 = vmatprep.subr.bf16.mxu0 0
  %311 = vmatpush1.bf16.msra.mxu0 0
  %312 = vmatprep.subr.bf16.mxu0 0
  %313 = vmatpush1.bf16.msra.mxu0 0
  %314 = vmatprep.subr.bf16.mxu0 0
  %315 = vmatpush1.bf16.msra.mxu0 0
  %316 = vmatprep.subr.bf16.mxu0 0
  %317 = vmatpush1.bf16.msra.mxu0 0
  %318 = vmatprep.subr.bf16.mxu0 0
  %319 = vmatpush1.bf16.msra.mxu0 0
  %320 = vmatprep.subr.bf16.mxu0 0
  %321 = vmatpush1.bf16.msra.mxu0 0
  %322 = vmatprep.mubr.bf16.mxu0 0
  %323 = vmatmul.mubr.bf16.gmra.mrb[0].mxu0 %v209
  %v324 = vpop.f32.mrb[0].mxu0
  %v325 = vadd.f32 0.0, %v324
  %v326 = vpop.f32.mrb[0].mxu0
  %v327 = vpop.f32.mrb[0].mxu0
  %v328 = vadd.f32 0.0, %v327
  %v329 = vpop.f32.mrb[0].mxu0
  %330 = vmatprep.mubr.bf16.mxu0 0
  %331 = vmatmul.mubr.bf16.gmra.mrb[0].mxu0 %v212
  %v332 = vpop.f32.mrb[0].mxu0
  %v333 = vadd.f32 0.0, %v332
  %v334 = vpop.f32.mrb[0].mxu0
  %v335 = vpop.f32.mrb[0].mxu0
  %v336 = vadd.f32 0.0, %v335
  %v337 = vpop.f32.mrb[0].mxu0
  %338 = vmatprep.mubr.bf16.mxu0 0
  %339 = vmatmul.mubr.bf16.gmra.mrb[0].mxu0 %v215
  %v340 = vpop.f32.mrb[0].mxu0
  %v341 = vadd.f32 0.0, %v340
  %v342 = vpop.f32.mrb[0].mxu0
  %v343 = vpop.f32.mrb[0].mxu0
  %v344 = vadd.f32 0.0, %v343
  %v345 = vpop.f32.mrb[0].mxu0
  %346 = vmatprep.mubr.bf16.mxu0 0
  %347 = vmatmul.mubr.bf16.gmra.mrb[0].mxu0 %v218
  %v348 = vpop.f32.mrb[0].mxu0
  %v349 = vadd.f32 0.0, %v348
  %v350 = vpop.f32.mrb[0].mxu0
  %v351 = vpop.f32.mrb[0].mxu0
  %v352 = vadd.f32 0.0, %v351
  %v353 = vpop.f32.mrb[0].mxu0
  %354 = vmatprep.mubr.bf16.mxu0 0
  %355 = vmatmul.mubr.bf16.gmra.mrb[0].mxu0 %v221
  %v356 = vpop.f32.mrb[0].mxu0
  %v357 = vadd.f32 0.0, %v356
  %v358 = vpop.f32.mrb[0].mxu0
  %v359 = vpop.f32.mrb[0].mxu0
  %v360 = vadd.f32 0.0, %v359
  %v361 = vpop.f32.mrb[0].mxu0
  %362 = vmatprep.mubr.bf16.mxu0 0
  %363 = vmatmul.mubr.bf16.gmra.mrb[0].mxu0 %v224
  %v364 = vpop.f32.mrb[0].mxu0
  %v365 = vadd.f32 0.0, %v364
  %v366 = vpop.f32.mrb[0].mxu0
  %v367 = vpop.f32.mrb[0].mxu0
  %v368 = vadd.f32 0.0, %v367
  %v369 = vpop.f32.mrb[0].mxu0
  %370 = vmatprep.mubr.bf16.mxu0 0
  %371 = vmatmul.mubr.bf16.gmra.mrb[0].mxu0 %v227
  %v372 = vpop.f32.mrb[0].mxu0
  %v373 = vadd.f32 0.0, %v372
  %v374 = vpop.f32.mrb[0].mxu0
  %v375 = vpop.f32.mrb[0].mxu0
  %v376 = vadd.f32 0.0, %v375
  %v377 = vpop.f32.mrb[0].mxu0
  %378 = vmatprep.mubr.bf16.mxu0 0
  %379 = vmatmul.mubr.bf16.gmra.mrb[0].mxu0 %v230
  %v380 = vpop.f32.mrb[0].mxu0
  %v381 = vadd.f32 0.0, %v380
  %v382 = vpop.f32.mrb[0].mxu0
  %v383 = vpop.f32.mrb[0].mxu0
  %v384 = vadd.f32 0.0, %v383
  %v385 = vpop.f32.mrb[0].mxu0
  %386 = vmatprep.mubr.bf16.mxu0 0
  %387 = vmatmul.mubr.bf16.gmra.mrb[0].mxu0 %v233
  %v388 = vpop.f32.mrb[0].mxu0
  %v389 = vadd.f32 0.0, %v388
  %v390 = vpop.f32.mrb[0].mxu0
  %v391 = vpop.f32.mrb[0].mxu0
  %v392 = vadd.f32 0.0, %v391
  %v393 = vpop.f32.mrb[0].mxu0
  %394 = vmatprep.mubr.bf16.mxu0 0
  %395 = vmatmul.mubr.bf16.gmra.mrb[0].mxu0 %v236
  %v396 = vpop.f32.mrb[0].mxu0
  %v397 = vadd.f32 0.0, %v396
  %v398 = vpop.f32.mrb[0].mxu0
  %v399 = vpop.f32.mrb[0].mxu0
  %v400 = vadd.f32 0.0, %v399
  %v401 = vpop.f32.mrb[0].mxu0
  %402 = vmatprep.mubr.bf16.mxu0 0
  %403 = vmatmul.mubr.bf16.gmra.mrb[0].mxu0 %v239
  %v404 = vpop.f32.mrb[0].mxu0
  %v405 = vadd.f32 0.0, %v404
  %v406 = vpop.f32.mrb[0].mxu0
  %v407 = vpop.f32.mrb[0].mxu0
  %v408 = vadd.f32 0.0, %v407
  %v409 = vpop.f32.mrb[0].mxu0
  %410 = vmatprep.mubr.bf16.mxu0 0
  %411 = vmatmul.mubr.bf16.gmra.mrb[0].mxu0 %v242
  %v412 = vpop.f32.mrb[0].mxu0
  %v413 = vadd.f32 0.0, %v412
  %v414 = vpop.f32.mrb[0].mxu0
  %v415 = vpop.f32.mrb[0].mxu0
  %v416 = vadd.f32 0.0, %v415
  %v417 = vpop.f32.mrb[0].mxu0
  %418 = vmatprep.mubr.bf16.mxu0 0
  %419 = vmatmul.mubr.bf16.gmra.mrb[0].mxu0 %v245
  %v420 = vpop.f32.mrb[0].mxu0
  %v421 = vadd.f32 0.0, %v420
  %v422 = vpop.f32.mrb[0].mxu0
  %v423 = vpop.f32.mrb[0].mxu0
  %v424 = vadd.f32 0.0, %v423
  %v425 = vpop.f32.mrb[0].mxu0
  %426 = vmatprep.mubr.bf16.mxu0 0
  %427 = vmatmul.mubr.bf16.gmra.mrb[0].mxu0 %v248
  %v428 = vpop.f32.mrb[0].mxu0
  %v429 = vadd.f32 0.0, %v428
  %v430 = vpop.f32.mrb[0].mxu0
  %v431 = vpop.f32.mrb[0].mxu0
  %v432 = vadd.f32 0.0, %v431
  %v433 = vpop.f32.mrb[0].mxu0
  %434 = vmatprep.mubr.bf16.mxu0 0
  %435 = vmatmul.mubr.bf16.gmra.mrb[0].mxu0 %v251
  %v436 = vpop.f32.mrb[0].mxu0
  %v437 = vadd.f32 0.0, %v436
  %v438 = vpop.f32.mrb[0].mxu0
  %v439 = vpop.f32.mrb[0].mxu0
  %v440 = vadd.f32 0.0, %v439
  %v441 = vpop.f32.mrb[0].mxu0
  %442 = vmatprep.mubr.bf16.mxu0 0
  %443 = vmatmul.mubr.bf16.gmra.mrb[0].mxu0 %v254
  %v444 = vpop.f32.mrb[0].mxu0
  %v445 = vadd.f32 0.0, %v444
  %v446 = vpop.f32.mrb[0].mxu0
  %v447 = vpop.f32.mrb[0].mxu0
  %v448 = vadd.f32 0.0, %v447
  %v449 = vpop.f32.mrb[0].mxu0
  %450 = vmatprep.mubr.bf16.mxu0 0
  %451 = vmatmul.mubr.bf16.gmra.mrb[0].mxu0 %v257
  %v452 = vpop.f32.mrb[0].mxu0
  %v453 = vadd.f32 0.0, %v452
  %v454 = vpop.f32.mrb[0].mxu0
  %v455 = vpop.f32.mrb[0].mxu0
  %v456 = vadd.f32 0.0, %v455
  %v457 = vpop.f32.mrb[0].mxu0
  %458 = vmatprep.mubr.bf16.mxu0 0
  %459 = vmatmul.mubr.bf16.gmra.mrb[0].mxu0 %v260
  %v460 = vpop.f32.mrb[0].mxu0
  %v461 = vadd.f32 0.0, %v460
  %v462 = vpop.f32.mrb[0].mxu0
  %v463 = vpop.f32.mrb[0].mxu0
  %v464 = vadd.f32 0.0, %v463
  %v465 = vpop.f32.mrb[0].mxu0
  %466 = vmatprep.mubr.bf16.mxu0 0
  %467 = vmatmul.mubr.bf16.gmra.mrb[0].mxu0 %v263
  %v468 = vpop.f32.mrb[0].mxu0
  %v469 = vadd.f32 0.0, %v468
  %v470 = vpop.f32.mrb[0].mxu0
  %v471 = vpop.f32.mrb[0].mxu0
  %v472 = vadd.f32 0.0, %v471
  %v473 = vpop.f32.mrb[0].mxu0
  %474 = vmatprep.mubr.bf16.mxu0 0
  %475 = vmatmul.mubr.bf16.gmra.mrb[0].mxu0 %v266
  %v476 = vpop.f32.mrb[0].mxu0
  %v477 = vadd.f32 0.0, %v476
  %v478 = vpop.f32.mrb[0].mxu0
  %v479 = vpop.f32.mrb[0].mxu0
  %v480 = vadd.f32 0.0, %v479
  %v481 = vpop.f32.mrb[0].mxu0
  %482 = vmatprep.mubr.bf16.mxu0 0
  %483 = vmatmul.mubr.bf16.gmra.mrb[0].mxu0 %v269
  %v484 = vpop.f32.mrb[0].mxu0
  %v485 = vadd.f32 0.0, %v484
  %v486 = vpop.f32.mrb[0].mxu0
  %v487 = vpop.f32.mrb[0].mxu0
  %v488 = vadd.f32 0.0, %v487
  %v489 = vpop.f32.mrb[0].mxu0
  %490 = vmatprep.mubr.bf16.mxu0 0
  %491 = vmatmul.mubr.bf16.gmra.mrb[0].mxu0 %v272
  %v492 = vpop.f32.mrb[0].mxu0
  %v493 = vadd.f32 0.0, %v492
  %v494 = vpop.f32.mrb[0].mxu0
  %v495 = vpop.f32.mrb[0].mxu0
  %v496 = vadd.f32 0.0, %v495
  %v497 = vpop.f32.mrb[0].mxu0
  %498 = vmatprep.mubr.bf16.mxu0 0
  %499 = vmatmul.mubr.bf16.gmra.mrb[0].mxu0 %v275
  %v500 = vpop.f32.mrb[0].mxu0
  %v501 = vadd.f32 0.0, %v500
  %v502 = vpop.f32.mrb[0].mxu0
  %v503 = vpop.f32.mrb[0].mxu0
  %v504 = vadd.f32 0.0, %v503
  %v505 = vpop.f32.mrb[0].mxu0
  %506 = vmatprep.mubr.bf16.mxu0 0
  %507 = vmatmul.mubr.bf16.gmra.mrb[0].mxu0 %v278
  %v508 = vpop.f32.mrb[0].mxu0
  %v509 = vadd.f32 0.0, %v508
  %v510 = vpop.f32.mrb[0].mxu0
  %v511 = vpop.f32.mrb[0].mxu0
  %v512 = vadd.f32 0.0, %v511
  %v513 = vpop.f32.mrb[0].mxu0
  %514 = vmatprep.mubr.bf16.mxu0 0
  %515 = vmatmul.mubr.bf16.gmra.mrb[0].mxu0 %v281
  %v516 = vpop.f32.mrb[0].mxu0
  %v517 = vadd.f32 0.0, %v516
  %v518 = vpop.f32.mrb[0].mxu0
  %v519 = vpop.f32.mrb[0].mxu0
  %v520 = vpop.f32.mrb[0].mxu0
  %521 = vdwg.mxu0
  %v523 = vlaneseq
  %v524 = vshrl.u32 %v523, 7
  %v525 = vsub.s32 0, %v524
  %v526 = vrot.slane %v22, %v525
  %v528 = vmul.f32 %v325, %v526
  %v529 = vmul.f32 %v328, %v526
  %v530 = vmul.f32 %v333, %v526
  %v531 = vmul.f32 %v336, %v526
  %v532 = vmul.f32 %v341, %v526
  %v533 = vmul.f32 %v344, %v526
  %v534 = vmul.f32 %v349, %v526
  %v535 = vmul.f32 %v352, %v526
  %v536 = vmul.f32 %v357, %v526
  %v537 = vmul.f32 %v360, %v526
  %v538 = vmul.f32 %v365, %v526
  %v539 = vmul.f32 %v368, %v526
  %v540 = vmul.f32 %v373, %v526
  %v541 = vmul.f32 %v376, %v526
  %v542 = vmul.f32 %v381, %v526
  %v543 = vmul.f32 %v384, %v526
  %v544 = vmul.f32 %v389, %v526
  %v545 = vmul.f32 %v392, %v526
  %v546 = vmul.f32 %v397, %v526
  %v547 = vmul.f32 %v400, %v526
  %v548 = vmul.f32 %v405, %v526
  %v549 = vmul.f32 %v408, %v526
  %v550 = vmul.f32 %v413, %v526
  %v551 = vmul.f32 %v416, %v526
  %v552 = vmul.f32 %v421, %v526
  %v553 = vmul.f32 %v424, %v526
  %v554 = vmul.f32 %v429, %v526
  %v555 = vmul.f32 %v432, %v526
  %v556 = vmul.f32 %v437, %v526
  %v557 = vmul.f32 %v440, %v526
  %v558 = vmul.f32 %v445, %v526
  %v559 = vmul.f32 %v448, %v526
  %v560 = vmul.f32 %v453, %v526
  %v561 = vmul.f32 %v456, %v526
  %v562 = vmul.f32 %v461, %v526
  %v563 = vmul.f32 %v464, %v526
  %v564 = vmul.f32 %v469, %v526
  %v565 = vmul.f32 %v472, %v526
  %v566 = vmul.f32 %v477, %v526
  %v567 = vmul.f32 %v480, %v526
  %v568 = vmul.f32 %v485, %v526
  %v569 = vmul.f32 %v488, %v526
  %v570 = vmul.f32 %v493, %v526
  %v571 = vmul.f32 %v496, %v526
  %v572 = vmul.f32 %v501, %v526
  %v573 = vmul.f32 %v504, %v526
  %v574 = vmul.f32 %v509, %v526
  %v575 = vmul.f32 %v512, %v526
  %v576 = vmul.f32 %v517, %v526
  %v578 = vlaneseq
  %v579 = vshrl.u32 %v578, 7
  %v580 = vsub.s32 0, %v579
  %v581 = vrot.slane %v23, %v580
  %v583 = vadd.f32 %v528, %v581
  %v584 = vadd.f32 %v529, %v581
  %v585 = vadd.f32 %v530, %v581
  %v586 = vadd.f32 %v531, %v581
  %v587 = vadd.f32 %v532, %v581
  %v588 = vadd.f32 %v533, %v581
  %v589 = vadd.f32 %v534, %v581
  %v590 = vadd.f32 %v535, %v581
  %v591 = vadd.f32 %v536, %v581
  %v592 = vadd.f32 %v537, %v581
  %v593 = vadd.f32 %v538, %v581
  %v594 = vadd.f32 %v539, %v581
  %v595 = vadd.f32 %v540, %v581
  %v596 = vadd.f32 %v541, %v581
  %v597 = vadd.f32 %v542, %v581
  %v598 = vadd.f32 %v543, %v581
  %v599 = vadd.f32 %v544, %v581
  %v600 = vadd.f32 %v545, %v581
  %v601 = vadd.f32 %v546, %v581
  %v602 = vadd.f32 %v547, %v581
  %v603 = vadd.f32 %v548, %v581
  %v604 = vadd.f32 %v549, %v581
  %v605 = vadd.f32 %v550, %v581
  %v606 = vadd.f32 %v551, %v581
  %v607 = vadd.f32 %v552, %v581
  %v608 = vadd.f32 %v553, %v581
  %v609 = vadd.f32 %v554, %v581
  %v610 = vadd.f32 %v555, %v581
  %v611 = vadd.f32 %v556, %v581
  %v612 = vadd.f32 %v557, %v581
  %v613 = vadd.f32 %v558, %v581
  %v614 = vadd.f32 %v559, %v581
  %v615 = vadd.f32 %v560, %v581
  %v616 = vadd.f32 %v561, %v581
  %v617 = vadd.f32 %v562, %v581
  %v618 = vadd.f32 %v563, %v581
  %v619 = vadd.f32 %v564, %v581
  %v620 = vadd.f32 %v565, %v581
  %v621 = vadd.f32 %v566, %v581
  %v622 = vadd.f32 %v567, %v581
  %v623 = vadd.f32 %v568, %v581
  %v624 = vadd.f32 %v569, %v581
  %v625 = vadd.f32 %v570, %v581
  %v626 = vadd.f32 %v571, %v581
  %v627 = vadd.f32 %v572, %v581
  %v628 = vadd.f32 %v573, %v581
  %v629 = vadd.f32 %v574, %v581
  %v630 = vadd.f32 %v575, %v581
  %v631 = vadd.f32 %v576, %v581
  %s632 = scalar_lea.vmem %s0, 196
  %v633 = vld [vmem:[%s632] sm:$0xf]
  %v634 = vld [vmem:[%s632 + $0x4] sm:$0xf]
  %v635 = vld [vmem:[%s632 + $0x8] sm:$0xf]
  %v636 = vld [vmem:[%s632 + $0xc] sm:$0xf]
  %v637 = vld [vmem:[%s632 + $0x10] sm:$0xf]
  %v638 = vld [vmem:[%s632 + $0x14] sm:$0xf]
  %v639 = vld [vmem:[%s632 + $0x18] sm:$0xf]
  %v640 = vld [vmem:[%s632 + $0x1c] sm:$0xf]
  %v641 = vld [vmem:[%s632 + $0x20] sm:$0xf]
  %v642 = vld [vmem:[%s632 + $0x24] sm:$0xf]
  %v643 = vld [vmem:[%s632 + $0x28] sm:$0xf]
  %v644 = vld [vmem:[%s632 + $0x2c] sm:$0xf]
  %v645 = vld [vmem:[%s632 + $0x30] sm:$0xf]
  %v646 = vld [vmem:[%s632 + $0x34] sm:$0xf]
  %v647 = vld [vmem:[%s632 + $0x38] sm:$0xf]
  %v648 = vld [vmem:[%s632 + $0x3c] sm:$0xf]
  %v649 = vld [vmem:[%s632 + $0x40] sm:$0xf]
  %v650 = vld [vmem:[%s632 + $0x44] sm:$0xf]
  %v651 = vld [vmem:[%s632 + $0x48] sm:$0xf]
  %v652 = vld [vmem:[%s632 + $0x4c] sm:$0xf]
  %v653 = vld [vmem:[%s632 + $0x50] sm:$0xf]
  %v654 = vld [vmem:[%s632 + $0x54] sm:$0xf]
  %v655 = vld [vmem:[%s632 + $0x58] sm:$0xf]
  %v656 = vld [vmem:[%s632 + $0x5c] sm:$0xf]
  %v657 = vld [vmem:[%s632 + $0x60] sm:$0xf]
  %v658 = vld [vmem:[%s632 + $0x64] sm:$0xf]
  %v659 = vld [vmem:[%s632 + $0x68] sm:$0xf]
  %v660 = vld [vmem:[%s632 + $0x6c] sm:$0xf]
  %v661 = vld [vmem:[%s632 + $0x70] sm:$0xf]
  %v662 = vld [vmem:[%s632 + $0x74] sm:$0xf]
  %v663 = vld [vmem:[%s632 + $0x78] sm:$0xf]
  %v664 = vld [vmem:[%s632 + $0x7c] sm:$0xf]
  %v665 = vld [vmem:[%s632 + $0x80] sm:$0xf]
  %v666 = vld [vmem:[%s632 + $0x84] sm:$0xf]
  %v667 = vld [vmem:[%s632 + $0x88] sm:$0xf]
  %v668 = vld [vmem:[%s632 + $0x8c] sm:$0xf]
  %v669 = vld [vmem:[%s632 + $0x90] sm:$0xf]
  %v670 = vld [vmem:[%s632 + $0x94] sm:$0xf]
  %v671 = vld [vmem:[%s632 + $0x98] sm:$0xf]
  %v672 = vld [vmem:[%s632 + $0x9c] sm:$0xf]
  %v673 = vld [vmem:[%s632 + $0xa0] sm:$0xf]
  %v674 = vld [vmem:[%s632 + $0xa4] sm:$0xf]
  %v675 = vld [vmem:[%s632 + $0xa8] sm:$0xf]
  %v676 = vld [vmem:[%s632 + $0xac] sm:$0xf]
  %v677 = vld [vmem:[%s632 + $0xb0] sm:$0xf]
  %v678 = vld [vmem:[%s632 + $0xb4] sm:$0xf]
  %v679 = vld [vmem:[%s632 + $0xb8] sm:$0xf]
  %v680 = vld [vmem:[%s632 + $0xbc] sm:$0xf]
  %v681 = vld [vmem:[%s632 + $0xc0] sm:$0xf]
  %v731 = vunpack.c.l.b16 %v633
  %v732 = vunpack.c.l.b16 %v634
  %v733 = vunpack.c.l.b16 %v635
  %v734 = vunpack.c.l.b16 %v636
  %v735 = vunpack.c.l.b16 %v637
  %v736 = vunpack.c.l.b16 %v638
  %v737 = vunpack.c.l.b16 %v639
  %v738 = vunpack.c.l.b16 %v640
  %v739 = vunpack.c.l.b16 %v641
  %v740 = vunpack.c.l.b16 %v642
  %v741 = vunpack.c.l.b16 %v643
  %v742 = vunpack.c.l.b16 %v644
  %v743 = vunpack.c.l.b16 %v645
  %v744 = vunpack.c.l.b16 %v646
  %v745 = vunpack.c.l.b16 %v647
  %v746 = vunpack.c.l.b16 %v648
  %v747 = vunpack.c.l.b16 %v649
  %v748 = vunpack.c.l.b16 %v650
  %v749 = vunpack.c.l.b16 %v651
  %v750 = vunpack.c.l.b16 %v652
  %v751 = vunpack.c.l.b16 %v653
  %v752 = vunpack.c.l.b16 %v654
  %v753 = vunpack.c.l.b16 %v655
  %v754 = vunpack.c.l.b16 %v656
  %v755 = vunpack.c.l.b16 %v657
  %v756 = vunpack.c.l.b16 %v658
  %v757 = vunpack.c.l.b16 %v659
  %v758 = vunpack.c.l.b16 %v660
  %v759 = vunpack.c.l.b16 %v661
  %v760 = vunpack.c.l.b16 %v662
  %v761 = vunpack.c.l.b16 %v663
  %v762 = vunpack.c.l.b16 %v664
  %v763 = vunpack.c.l.b16 %v665
  %v764 = vunpack.c.l.b16 %v666
  %v765 = vunpack.c.l.b16 %v667
  %v766 = vunpack.c.l.b16 %v668
  %v767 = vunpack.c.l.b16 %v669
  %v768 = vunpack.c.l.b16 %v670
  %v769 = vunpack.c.l.b16 %v671
  %v770 = vunpack.c.l.b16 %v672
  %v771 = vunpack.c.l.b16 %v673
  %v772 = vunpack.c.l.b16 %v674
  %v773 = vunpack.c.l.b16 %v675
  %v774 = vunpack.c.l.b16 %v676
  %v775 = vunpack.c.l.b16 %v677
  %v776 = vunpack.c.l.b16 %v678
  %v777 = vunpack.c.l.b16 %v679
  %v778 = vunpack.c.l.b16 %v680
  %v779 = vunpack.c.l.b16 %v681
  %v780 = vpack.c.b16 %v732, %v731
  %v781 = vpack.c.b16 %v734, %v733
  %v782 = vpack.c.b16 %v736, %v735
  %v783 = vpack.c.b16 %v738, %v737
  %v784 = vpack.c.b16 %v740, %v739
  %v785 = vpack.c.b16 %v742, %v741
  %v786 = vpack.c.b16 %v744, %v743
  %v787 = vpack.c.b16 %v746, %v745
  %v788 = vpack.c.b16 %v748, %v747
  %v789 = vpack.c.b16 %v750, %v749
  %v790 = vpack.c.b16 %v752, %v751
  %v791 = vpack.c.b16 %v754, %v753
  %v792 = vpack.c.b16 %v756, %v755
  %v793 = vpack.c.b16 %v758, %v757
  %v794 = vpack.c.b16 %v760, %v759
  %v795 = vpack.c.b16 %v762, %v761
  %v796 = vpack.c.b16 %v764, %v763
  %v797 = vpack.c.b16 %v766, %v765
  %v798 = vpack.c.b16 %v768, %v767
  %v799 = vpack.c.b16 %v770, %v769
  %v800 = vpack.c.b16 %v772, %v771
  %v801 = vpack.c.b16 %v774, %v773
  %v802 = vpack.c.b16 %v776, %v775
  %v803 = vpack.c.b16 %v778, %v777
  %v804 = vpack.c.b16 %v779, %v779
  %v806 = vsel %vm207, %v780, 0
  %v809 = vsel %vm207, %v781, 0
  %v812 = vsel %vm207, %v782, 0
  %v815 = vsel %vm207, %v783, 0
  %v818 = vsel %vm207, %v784, 0
  %v821 = vsel %vm207, %v785, 0
  %v824 = vsel %vm207, %v786, 0
  %v827 = vsel %vm207, %v787, 0
  %v830 = vsel %vm207, %v788, 0
  %v833 = vsel %vm207, %v789, 0
  %v836 = vsel %vm207, %v790, 0
  %v839 = vsel %vm207, %v791, 0
  %v842 = vsel %vm207, %v792, 0
  %v845 = vsel %vm207, %v793, 0
  %v848 = vsel %vm207, %v794, 0
  %v851 = vsel %vm207, %v795, 0
  %v854 = vsel %vm207, %v796, 0
  %v857 = vsel %vm207, %v797, 0
  %v860 = vsel %vm207, %v798, 0
  %v863 = vsel %vm207, %v799, 0
  %v866 = vsel %vm207, %v800, 0
  %v869 = vsel %vm207, %v801, 0
  %v872 = vsel %vm207, %v802, 0
  %v875 = vsel %vm207, %v803, 0
  %v878 = vsel %vm207, %v804, 0
  %880 = vmatprep.subr.bf16.mxu0 0
  %881 = vmatpush1.bf16.msra.mxu0 %v204
  %882 = vmatprep.subr.bf16.mxu0 0
  %883 = vmatpush1.bf16.msra.mxu0 %v288
  %884 = vmatprep.subr.bf16.mxu0 0
  %885 = vmatpush1.bf16.msra.mxu0 0
  %886 = vmatprep.subr.bf16.mxu0 0
  %887 = vmatpush1.bf16.msra.mxu0 0
  %888 = vmatprep.subr.bf16.mxu0 0
  %889 = vmatpush1.bf16.msra.mxu0 0
  %890 = vmatprep.subr.bf16.mxu0 0
  %891 = vmatpush1.bf16.msra.mxu0 0
  %892 = vmatprep.subr.bf16.mxu0 0
  %893 = vmatpush1.bf16.msra.mxu0 0
  %894 = vmatprep.subr.bf16.mxu0 0
  %895 = vmatpush1.bf16.msra.mxu0 0
  %896 = vmatprep.subr.bf16.mxu0 0
  %897 = vmatpush1.bf16.msra.mxu0 0
  %898 = vmatprep.subr.bf16.mxu0 0
  %899 = vmatpush1.bf16.msra.mxu0 0
  %900 = vmatprep.subr.bf16.mxu0 0
  %901 = vmatpush1.bf16.msra.mxu0 0
  %902 = vmatprep.subr.bf16.mxu0 0
  %903 = vmatpush1.bf16.msra.mxu0 0
  %904 = vmatprep.subr.bf16.mxu0 0
  %905 = vmatpush1.bf16.msra.mxu0 0
  %906 = vmatprep.subr.bf16.mxu0 0
  %907 = vmatpush1.bf16.msra.mxu0 0
  %908 = vmatprep.subr.bf16.mxu0 0
  %909 = vmatpush1.bf16.msra.mxu0 0
  %910 = vmatprep.subr.bf16.mxu0 0
  %911 = vmatpush1.bf16.msra.mxu0 0
  %912 = vmatprep.mubr.bf16.mxu0 0
  %913 = vmatmul.mubr.bf16.gmra.mrb[0].mxu0 %v806
  %v914 = vpop.f32.mrb[0].mxu0
  %v915 = vadd.f32 0.0, %v914
  %v916 = vpop.f32.mrb[0].mxu0
  %v917 = vpop.f32.mrb[0].mxu0
  %v918 = vadd.f32 0.0, %v917
  %v919 = vpop.f32.mrb[0].mxu0
  %920 = vmatprep.mubr.bf16.mxu0 0
  %921 = vmatmul.mubr.bf16.gmra.mrb[0].mxu0 %v809
  %v922 = vpop.f32.mrb[0].mxu0
  %v923 = vadd.f32 0.0, %v922
  %v924 = vpop.f32.mrb[0].mxu0
  %v925 = vpop.f32.mrb[0].mxu0
  %v926 = vadd.f32 0.0, %v925
  %v927 = vpop.f32.mrb[0].mxu0
  %928 = vmatprep.mubr.bf16.mxu0 0
  %929 = vmatmul.mubr.bf16.gmra.mrb[0].mxu0 %v812
  %v930 = vpop.f32.mrb[0].mxu0
  %v931 = vadd.f32 0.0, %v930
  %v932 = vpop.f32.mrb[0].mxu0
  %v933 = vpop.f32.mrb[0].mxu0
  %v934 = vadd.f32 0.0, %v933
  %v935 = vpop.f32.mrb[0].mxu0
  %936 = vmatprep.mubr.bf16.mxu0 0
  %937 = vmatmul.mubr.bf16.gmra.mrb[0].mxu0 %v815
  %v938 = vpop.f32.mrb[0].mxu0
  %v939 = vadd.f32 0.0, %v938
  %v940 = vpop.f32.mrb[0].mxu0
  %v941 = vpop.f32.mrb[0].mxu0
  %v942 = vadd.f32 0.0, %v941
  %v943 = vpop.f32.mrb[0].mxu0
  %944 = vmatprep.mubr.bf16.mxu0 0
  %945 = vmatmul.mubr.bf16.gmra.mrb[0].mxu0 %v818
  %v946 = vpop.f32.mrb[0].mxu0
  %v947 = vadd.f32 0.0, %v946
  %v948 = vpop.f32.mrb[0].mxu0
  %v949 = vpop.f32.mrb[0].mxu0
  %v950 = vadd.f32 0.0, %v949
  %v951 = vpop.f32.mrb[0].mxu0
  %952 = vmatprep.mubr.bf16.mxu0 0
  %953 = vmatmul.mubr.bf16.gmra.mrb[0].mxu0 %v821
  %v954 = vpop.f32.mrb[0].mxu0
  %v955 = vadd.f32 0.0, %v954
  %v956 = vpop.f32.mrb[0].mxu0
  %v957 = vpop.f32.mrb[0].mxu0
  %v958 = vadd.f32 0.0, %v957
  %v959 = vpop.f32.mrb[0].mxu0
  %960 = vmatprep.mubr.bf16.mxu0 0
  %961 = vmatmul.mubr.bf16.gmra.mrb[0].mxu0 %v824
  %v962 = vpop.f32.mrb[0].mxu0
  %v963 = vadd.f32 0.0, %v962
  %v964 = vpop.f32.mrb[0].mxu0
  %v965 = vpop.f32.mrb[0].mxu0
  %v966 = vadd.f32 0.0, %v965
  %v967 = vpop.f32.mrb[0].mxu0
  %968 = vmatprep.mubr.bf16.mxu0 0
  %969 = vmatmul.mubr.bf16.gmra.mrb[0].mxu0 %v827
  %v970 = vpop.f32.mrb[0].mxu0
  %v971 = vadd.f32 0.0, %v970
  %v972 = vpop.f32.mrb[0].mxu0
  %v973 = vpop.f32.mrb[0].mxu0
  %v974 = vadd.f32 0.0, %v973
  %v975 = vpop.f32.mrb[0].mxu0
  %976 = vmatprep.mubr.bf16.mxu0 0
  %977 = vmatmul.mubr.bf16.gmra.mrb[0].mxu0 %v830
  %v978 = vpop.f32.mrb[0].mxu0
  %v979 = vadd.f32 0.0, %v978
  %v980 = vpop.f32.mrb[0].mxu0
  %v981 = vpop.f32.mrb[0].mxu0
  %v982 = vadd.f32 0.0, %v981
  %v983 = vpop.f32.mrb[0].mxu0
  %984 = vmatprep.mubr.bf16.mxu0 0
  %985 = vmatmul.mubr.bf16.gmra.mrb[0].mxu0 %v833
  %v986 = vpop.f32.mrb[0].mxu0
  %v987 = vadd.f32 0.0, %v986
  %v988 = vpop.f32.mrb[0].mxu0
  %v989 = vpop.f32.mrb[0].mxu0
  %v990 = vadd.f32 0.0, %v989
  %v991 = vpop.f32.mrb[0].mxu0
  %992 = vmatprep.mubr.bf16.mxu0 0
  %993 = vmatmul.mubr.bf16.gmra.mrb[0].mxu0 %v836
  %v994 = vpop.f32.mrb[0].mxu0
  %v995 = vadd.f32 0.0, %v994
  %v996 = vpop.f32.mrb[0].mxu0
  %v997 = vpop.f32.mrb[0].mxu0
  %v998 = vadd.f32 0.0, %v997
  %v999 = vpop.f32.mrb[0].mxu0
  %1000 = vmatprep.mubr.bf16.mxu0 0
  %1001 = vmatmul.mubr.bf16.gmra.mrb[0].mxu0 %v839
  %v1002 = vpop.f32.mrb[0].mxu0
  %v1003 = vadd.f32 0.0, %v1002
  %v1004 = vpop.f32.mrb[0].mxu0
  %v1005 = vpop.f32.mrb[0].mxu0
  %v1006 = vadd.f32 0.0, %v1005
  %v1007 = vpop.f32.mrb[0].mxu0
  %1008 = vmatprep.mubr.bf16.mxu0 0
  %1009 = vmatmul.mubr.bf16.gmra.mrb[0].mxu0 %v842
  %v1010 = vpop.f32.mrb[0].mxu0
  %v1011 = vadd.f32 0.0, %v1010
  %v1012 = vpop.f32.mrb[0].mxu0
  %v1013 = vpop.f32.mrb[0].mxu0
  %v1014 = vadd.f32 0.0, %v1013
  %v1015 = vpop.f32.mrb[0].mxu0
  %1016 = vmatprep.mubr.bf16.mxu0 0
  %1017 = vmatmul.mubr.bf16.gmra.mrb[0].mxu0 %v845
  %v1018 = vpop.f32.mrb[0].mxu0
  %v1019 = vadd.f32 0.0, %v1018
  %v1020 = vpop.f32.mrb[0].mxu0
  %v1021 = vpop.f32.mrb[0].mxu0
  %v1022 = vadd.f32 0.0, %v1021
  %v1023 = vpop.f32.mrb[0].mxu0
  %1024 = vmatprep.mubr.bf16.mxu0 0
  %1025 = vmatmul.mubr.bf16.gmra.mrb[0].mxu0 %v848
  %v1026 = vpop.f32.mrb[0].mxu0
  %v1027 = vadd.f32 0.0, %v1026
  %v1028 = vpop.f32.mrb[0].mxu0
  %v1029 = vpop.f32.mrb[0].mxu0
  %v1030 = vadd.f32 0.0, %v1029
  %v1031 = vpop.f32.mrb[0].mxu0
  %1032 = vmatprep.mubr.bf16.mxu0 0
  %1033 = vmatmul.mubr.bf16.gmra.mrb[0].mxu0 %v851
  %v1034 = vpop.f32.mrb[0].mxu0
  %v1035 = vadd.f32 0.0, %v1034
  %v1036 = vpop.f32.mrb[0].mxu0
  %v1037 = vpop.f32.mrb[0].mxu0
  %v1038 = vadd.f32 0.0, %v1037
  %v1039 = vpop.f32.mrb[0].mxu0
  %1040 = vmatprep.mubr.bf16.mxu0 0
  %1041 = vmatmul.mubr.bf16.gmra.mrb[0].mxu0 %v854
  %v1042 = vpop.f32.mrb[0].mxu0
  %v1043 = vadd.f32 0.0, %v1042
  %v1044 = vpop.f32.mrb[0].mxu0
  %v1045 = vpop.f32.mrb[0].mxu0
  %v1046 = vadd.f32 0.0, %v1045
  %v1047 = vpop.f32.mrb[0].mxu0
  %1048 = vmatprep.mubr.bf16.mxu0 0
  %1049 = vmatmul.mubr.bf16.gmra.mrb[0].mxu0 %v857
  %v1050 = vpop.f32.mrb[0].mxu0
  %v1051 = vadd.f32 0.0, %v1050
  %v1052 = vpop.f32.mrb[0].mxu0
  %v1053 = vpop.f32.mrb[0].mxu0
  %v1054 = vadd.f32 0.0, %v1053
  %v1055 = vpop.f32.mrb[0].mxu0
  %1056 = vmatprep.mubr.bf16.mxu0 0
  %1057 = vmatmul.mubr.bf16.gmra.mrb[0].mxu0 %v860
  %v1058 = vpop.f32.mrb[0].mxu0
  %v1059 = vadd.f32 0.0, %v1058
  %v1060 = vpop.f32.mrb[0].mxu0
  %v1061 = vpop.f32.mrb[0].mxu0
  %v1062 = vadd.f32 0.0, %v1061
  %v1063 = vpop.f32.mrb[0].mxu0
  %1064 = vmatprep.mubr.bf16.mxu0 0
  %1065 = vmatmul.mubr.bf16.gmra.mrb[0].mxu0 %v863
  %v1066 = vpop.f32.mrb[0].mxu0
  %v1067 = vadd.f32 0.0, %v1066
  %v1068 = vpop.f32.mrb[0].mxu0
  %v1069 = vpop.f32.mrb[0].mxu0
  %v1070 = vadd.f32 0.0, %v1069
  %v1071 = vpop.f32.mrb[0].mxu0
  %1072 = vmatprep.mubr.bf16.mxu0 0
  %1073 = vmatmul.mubr.bf16.gmra.mrb[0].mxu0 %v866
  %v1074 = vpop.f32.mrb[0].mxu0
  %v1075 = vadd.f32 0.0, %v1074
  %v1076 = vpop.f32.mrb[0].mxu0
  %v1077 = vpop.f32.mrb[0].mxu0
  %v1078 = vadd.f32 0.0, %v1077
  %v1079 = vpop.f32.mrb[0].mxu0
  %1080 = vmatprep.mubr.bf16.mxu0 0
  %1081 = vmatmul.mubr.bf16.gmra.mrb[0].mxu0 %v869
  %v1082 = vpop.f32.mrb[0].mxu0
  %v1083 = vadd.f32 0.0, %v1082
  %v1084 = vpop.f32.mrb[0].mxu0
  %v1085 = vpop.f32.mrb[0].mxu0
  %v1086 = vadd.f32 0.0, %v1085
  %v1087 = vpop.f32.mrb[0].mxu0
  %1088 = vmatprep.mubr.bf16.mxu0 0
  %1089 = vmatmul.mubr.bf16.gmra.mrb[0].mxu0 %v872
  %v1090 = vpop.f32.mrb[0].mxu0
  %v1091 = vadd.f32 0.0, %v1090
  %v1092 = vpop.f32.mrb[0].mxu0
  %v1093 = vpop.f32.mrb[0].mxu0
  %v1094 = vadd.f32 0.0, %v1093
  %v1095 = vpop.f32.mrb[0].mxu0
  %1096 = vmatprep.mubr.bf16.mxu0 0
  %1097 = vmatmul.mubr.bf16.gmra.mrb[0].mxu0 %v875
  %v1098 = vpop.f32.mrb[0].mxu0
  %v1099 = vadd.f32 0.0, %v1098
  %v1100 = vpop.f32.mrb[0].mxu0
  %v1101 = vpop.f32.mrb[0].mxu0
  %v1102 = vadd.f32 0.0, %v1101
  %v1103 = vpop.f32.mrb[0].mxu0
  %1104 = vmatprep.mubr.bf16.mxu0 0
  %1105 = vmatmul.mubr.bf16.gmra.mrb[0].mxu0 %v878
  %v1106 = vpop.f32.mrb[0].mxu0
  %v1107 = vadd.f32 0.0, %v1106
  %v1108 = vpop.f32.mrb[0].mxu0
  %v1109 = vpop.f32.mrb[0].mxu0
  %v1110 = vpop.f32.mrb[0].mxu0
  %1111 = vdwg.mxu0
  %v1112 = vmul.f32 %v915, %v526
  %v1113 = vmul.f32 %v918, %v526
  %v1114 = vmul.f32 %v923, %v526
  %v1115 = vmul.f32 %v926, %v526
  %v1116 = vmul.f32 %v931, %v526
  %v1117 = vmul.f32 %v934, %v526
  %v1118 = vmul.f32 %v939, %v526
  %v1119 = vmul.f32 %v942, %v526
  %v1120 = vmul.f32 %v947, %v526
  %v1121 = vmul.f32 %v950, %v526
  %v1122 = vmul.f32 %v955, %v526
  %v1123 = vmul.f32 %v958, %v526
  %v1124 = vmul.f32 %v963, %v526
  %v1125 = vmul.f32 %v966, %v526
  %v1126 = vmul.f32 %v971, %v526
  %v1127 = vmul.f32 %v974, %v526
  %v1128 = vmul.f32 %v979, %v526
  %v1129 = vmul.f32 %v982, %v526
  %v1130 = vmul.f32 %v987, %v526
  %v1131 = vmul.f32 %v990, %v526
  %v1132 = vmul.f32 %v995, %v526
  %v1133 = vmul.f32 %v998, %v526
  %v1134 = vmul.f32 %v1003, %v526
  %v1135 = vmul.f32 %v1006, %v526
  %v1136 = vmul.f32 %v1011, %v526
  %v1137 = vmul.f32 %v1014, %v526
  %v1138 = vmul.f32 %v1019, %v526
  %v1139 = vmul.f32 %v1022, %v526
  %v1140 = vmul.f32 %v1027, %v526
  %v1141 = vmul.f32 %v1030, %v526
  %v1142 = vmul.f32 %v1035, %v526
  %v1143 = vmul.f32 %v1038, %v526
  %v1144 = vmul.f32 %v1043, %v526
  %v1145 = vmul.f32 %v1046, %v526
  %v1146 = vmul.f32 %v1051, %v526
  %v1147 = vmul.f32 %v1054, %v526
  %v1148 = vmul.f32 %v1059, %v526
  %v1149 = vmul.f32 %v1062, %v526
  %v1150 = vmul.f32 %v1067, %v526
  %v1151 = vmul.f32 %v1070, %v526
  %v1152 = vmul.f32 %v1075, %v526
  %v1153 = vmul.f32 %v1078, %v526
  %v1154 = vmul.f32 %v1083, %v526
  %v1155 = vmul.f32 %v1086, %v526
  %v1156 = vmul.f32 %v1091, %v526
  %v1157 = vmul.f32 %v1094, %v526
  %v1158 = vmul.f32 %v1099, %v526
  %v1159 = vmul.f32 %v1102, %v526
  %v1160 = vmul.f32 %v1107, %v526
  %v1161 = vadd.f32 %v1112, %v581
  %v1162 = vadd.f32 %v1113, %v581
  %v1163 = vadd.f32 %v1114, %v581
  %v1164 = vadd.f32 %v1115, %v581
  %v1165 = vadd.f32 %v1116, %v581
  %v1166 = vadd.f32 %v1117, %v581
  %v1167 = vadd.f32 %v1118, %v581
  %v1168 = vadd.f32 %v1119, %v581
  %v1169 = vadd.f32 %v1120, %v581
  %v1170 = vadd.f32 %v1121, %v581
  %v1171 = vadd.f32 %v1122, %v581
  %v1172 = vadd.f32 %v1123, %v581
  %v1173 = vadd.f32 %v1124, %v581
  %v1174 = vadd.f32 %v1125, %v581
  %v1175 = vadd.f32 %v1126, %v581
  %v1176 = vadd.f32 %v1127, %v581
  %v1177 = vadd.f32 %v1128, %v581
  %v1178 = vadd.f32 %v1129, %v581
  %v1179 = vadd.f32 %v1130, %v581
  %v1180 = vadd.f32 %v1131, %v581
  %v1181 = vadd.f32 %v1132, %v581
  %v1182 = vadd.f32 %v1133, %v581
  %v1183 = vadd.f32 %v1134, %v581
  %v1184 = vadd.f32 %v1135, %v581
  %v1185 = vadd.f32 %v1136, %v581
  %v1186 = vadd.f32 %v1137, %v581
  %v1187 = vadd.f32 %v1138, %v581
  %v1188 = vadd.f32 %v1139, %v581
  %v1189 = vadd.f32 %v1140, %v581
  %v1190 = vadd.f32 %v1141, %v581
  %v1191 = vadd.f32 %v1142, %v581
  %v1192 = vadd.f32 %v1143, %v581
  %v1193 = vadd.f32 %v1144, %v581
  %v1194 = vadd.f32 %v1145, %v581
  %v1195 = vadd.f32 %v1146, %v581
  %v1196 = vadd.f32 %v1147, %v581
  %v1197 = vadd.f32 %v1148, %v581
  %v1198 = vadd.f32 %v1149, %v581
  %v1199 = vadd.f32 %v1150, %v581
  %v1200 = vadd.f32 %v1151, %v581
  %v1201 = vadd.f32 %v1152, %v581
  %v1202 = vadd.f32 %v1153, %v581
  %v1203 = vadd.f32 %v1154, %v581
  %v1204 = vadd.f32 %v1155, %v581
  %v1205 = vadd.f32 %v1156, %v581
  %v1206 = vadd.f32 %v1157, %v581
  %v1207 = vadd.f32 %v1158, %v581
  %v1208 = vadd.f32 %v1159, %v581
  %v1209 = vadd.f32 %v1160, %v581
  %v1210 = vmax.f32 %v583, %v1161
  %v1211 = vmax.f32 %v584, %v1162
  %v1212 = vmax.f32 %v585, %v1163
  %v1213 = vmax.f32 %v586, %v1164
  %v1214 = vmax.f32 %v587, %v1165
  %v1215 = vmax.f32 %v588, %v1166
  %v1216 = vmax.f32 %v589, %v1167
  %v1217 = vmax.f32 %v590, %v1168
  %v1218 = vmax.f32 %v591, %v1169
  %v1219 = vmax.f32 %v592, %v1170
  %v1220 = vmax.f32 %v593, %v1171
  %v1221 = vmax.f32 %v594, %v1172
  %v1222 = vmax.f32 %v595, %v1173
  %v1223 = vmax.f32 %v596, %v1174
  %v1224 = vmax.f32 %v597, %v1175
  %v1225 = vmax.f32 %v598, %v1176
  %v1226 = vmax.f32 %v599, %v1177
  %v1227 = vmax.f32 %v600, %v1178
  %v1228 = vmax.f32 %v601, %v1179
  %v1229 = vmax.f32 %v602, %v1180
  %v1230 = vmax.f32 %v603, %v1181
  %v1231 = vmax.f32 %v604, %v1182
  %v1232 = vmax.f32 %v605, %v1183
  %v1233 = vmax.f32 %v606, %v1184
  %v1234 = vmax.f32 %v607, %v1185
  %v1235 = vmax.f32 %v608, %v1186
  %v1236 = vmax.f32 %v609, %v1187
  %v1237 = vmax.f32 %v610, %v1188
  %v1238 = vmax.f32 %v611, %v1189
  %v1239 = vmax.f32 %v612, %v1190
  %v1240 = vmax.f32 %v613, %v1191
  %v1241 = vmax.f32 %v614, %v1192
  %v1242 = vmax.f32 %v615, %v1193
  %v1243 = vmax.f32 %v616, %v1194
  %v1244 = vmax.f32 %v617, %v1195
  %v1245 = vmax.f32 %v618, %v1196
  %v1246 = vmax.f32 %v619, %v1197
  %v1247 = vmax.f32 %v620, %v1198
  %v1248 = vmax.f32 %v621, %v1199
  %v1249 = vmax.f32 %v622, %v1200
  %v1250 = vmax.f32 %v623, %v1201
  %v1251 = vmax.f32 %v624, %v1202
  %v1252 = vmax.f32 %v625, %v1203
  %v1253 = vmax.f32 %v626, %v1204
  %v1254 = vmax.f32 %v627, %v1205
  %v1255 = vmax.f32 %v628, %v1206
  %v1256 = vmax.f32 %v629, %v1207
  %v1257 = vmax.f32 %v630, %v1208
  %v1258 = vmax.f32 %v631, %v1209
  %s1259 = scalar_lea.vmem %s0, 392
  %v1260 = vld [vmem:[%s1259] sm:$0xf]
  %v1261 = vld [vmem:[%s1259 + $0x4] sm:$0xf]
  %v1262 = vld [vmem:[%s1259 + $0x8] sm:$0xf]
  %v1263 = vld [vmem:[%s1259 + $0xc] sm:$0xf]
  %v1264 = vld [vmem:[%s1259 + $0x10] sm:$0xf]
  %v1265 = vld [vmem:[%s1259 + $0x14] sm:$0xf]
  %v1266 = vld [vmem:[%s1259 + $0x18] sm:$0xf]
  %v1267 = vld [vmem:[%s1259 + $0x1c] sm:$0xf]
  %v1268 = vld [vmem:[%s1259 + $0x20] sm:$0xf]
  %v1269 = vld [vmem:[%s1259 + $0x24] sm:$0xf]
  %v1270 = vld [vmem:[%s1259 + $0x28] sm:$0xf]
  %v1271 = vld [vmem:[%s1259 + $0x2c] sm:$0xf]
  %v1272 = vld [vmem:[%s1259 + $0x30] sm:$0xf]
  %v1273 = vld [vmem:[%s1259 + $0x34] sm:$0xf]
  %v1274 = vld [vmem:[%s1259 + $0x38] sm:$0xf]
  %v1275 = vld [vmem:[%s1259 + $0x3c] sm:$0xf]
  %v1276 = vld [vmem:[%s1259 + $0x40] sm:$0xf]
  %v1277 = vld [vmem:[%s1259 + $0x44] sm:$0xf]
  %v1278 = vld [vmem:[%s1259 + $0x48] sm:$0xf]
  %v1279 = vld [vmem:[%s1259 + $0x4c] sm:$0xf]
  %v1280 = vld [vmem:[%s1259 + $0x50] sm:$0xf]
  %v1281 = vld [vmem:[%s1259 + $0x54] sm:$0xf]
  %v1282 = vld [vmem:[%s1259 + $0x58] sm:$0xf]
  %v1283 = vld [vmem:[%s1259 + $0x5c] sm:$0xf]
  %v1284 = vld [vmem:[%s1259 + $0x60] sm:$0xf]
  %v1285 = vld [vmem:[%s1259 + $0x64] sm:$0xf]
  %v1286 = vld [vmem:[%s1259 + $0x68] sm:$0xf]
  %v1287 = vld [vmem:[%s1259 + $0x6c] sm:$0xf]
  %v1288 = vld [vmem:[%s1259 + $0x70] sm:$0xf]
  %v1289 = vld [vmem:[%s1259 + $0x74] sm:$0xf]
  %v1290 = vld [vmem:[%s1259 + $0x78] sm:$0xf]
  %v1291 = vld [vmem:[%s1259 + $0x7c] sm:$0xf]
  %v1292 = vld [vmem:[%s1259 + $0x80] sm:$0xf]
  %v1293 = vld [vmem:[%s1259 + $0x84] sm:$0xf]
  %v1294 = vld [vmem:[%s1259 + $0x88] sm:$0xf]
  %v1295 = vld [vmem:[%s1259 + $0x8c] sm:$0xf]
  %v1296 = vld [vmem:[%s1259 + $0x90] sm:$0xf]
  %v1297 = vld [vmem:[%s1259 + $0x94] sm:$0xf]
  %v1298 = vld [vmem:[%s1259 + $0x98] sm:$0xf]
  %v1299 = vld [vmem:[%s1259 + $0x9c] sm:$0xf]
  %v1300 = vld [vmem:[%s1259 + $0xa0] sm:$0xf]
  %v1301 = vld [vmem:[%s1259 + $0xa4] sm:$0xf]
  %v1302 = vld [vmem:[%s1259 + $0xa8] sm:$0xf]
  %v1303 = vld [vmem:[%s1259 + $0xac] sm:$0xf]
  %v1304 = vld [vmem:[%s1259 + $0xb0] sm:$0xf]
  %v1305 = vld [vmem:[%s1259 + $0xb4] sm:$0xf]
  %v1306 = vld [vmem:[%s1259 + $0xb8] sm:$0xf]
  %v1307 = vld [vmem:[%s1259 + $0xbc] sm:$0xf]
  %v1308 = vld [vmem:[%s1259 + $0xc0] sm:$0xf]
  %v1358 = vunpack.c.l.b16 %v1260
  %v1359 = vunpack.c.l.b16 %v1261
  %v1360 = vunpack.c.l.b16 %v1262
  %v1361 = vunpack.c.l.b16 %v1263
  %v1362 = vunpack.c.l.b16 %v1264
  %v1363 = vunpack.c.l.b16 %v1265
  %v1364 = vunpack.c.l.b16 %v1266
  %v1365 = vunpack.c.l.b16 %v1267
  %v1366 = vunpack.c.l.b16 %v1268
  %v1367 = vunpack.c.l.b16 %v1269
  %v1368 = vunpack.c.l.b16 %v1270
  %v1369 = vunpack.c.l.b16 %v1271
  %v1370 = vunpack.c.l.b16 %v1272
  %v1371 = vunpack.c.l.b16 %v1273
  %v1372 = vunpack.c.l.b16 %v1274
  %v1373 = vunpack.c.l.b16 %v1275
  %v1374 = vunpack.c.l.b16 %v1276
  %v1375 = vunpack.c.l.b16 %v1277
  %v1376 = vunpack.c.l.b16 %v1278
  %v1377 = vunpack.c.l.b16 %v1279
  %v1378 = vunpack.c.l.b16 %v1280
  %v1379 = vunpack.c.l.b16 %v1281
  %v1380 = vunpack.c.l.b16 %v1282
  %v1381 = vunpack.c.l.b16 %v1283
  %v1382 = vunpack.c.l.b16 %v1284
  %v1383 = vunpack.c.l.b16 %v1285
  %v1384 = vunpack.c.l.b16 %v1286
  %v1385 = vunpack.c.l.b16 %v1287
  %v1386 = vunpack.c.l.b16 %v1288
  %v1387 = vunpack.c.l.b16 %v1289
  %v1388 = vunpack.c.l.b16 %v1290
  %v1389 = vunpack.c.l.b16 %v1291
  %v1390 = vunpack.c.l.b16 %v1292
  %v1391 = vunpack.c.l.b16 %v1293
  %v1392 = vunpack.c.l.b16 %v1294
  %v1393 = vunpack.c.l.b16 %v1295
  %v1394 = vunpack.c.l.b16 %v1296
  %v1395 = vunpack.c.l.b16 %v1297
  %v1396 = vunpack.c.l.b16 %v1298
  %v1397 = vunpack.c.l.b16 %v1299
  %v1398 = vunpack.c.l.b16 %v1300
  %v1399 = vunpack.c.l.b16 %v1301
  %v1400 = vunpack.c.l.b16 %v1302
  %v1401 = vunpack.c.l.b16 %v1303
  %v1402 = vunpack.c.l.b16 %v1304
  %v1403 = vunpack.c.l.b16 %v1305
  %v1404 = vunpack.c.l.b16 %v1306
  %v1405 = vunpack.c.l.b16 %v1307
  %v1406 = vunpack.c.l.b16 %v1308
  %v1407 = vpack.c.b16 %v1359, %v1358
  %v1408 = vpack.c.b16 %v1361, %v1360
  %v1409 = vpack.c.b16 %v1363, %v1362
  %v1410 = vpack.c.b16 %v1365, %v1364
  %v1411 = vpack.c.b16 %v1367, %v1366
  %v1412 = vpack.c.b16 %v1369, %v1368
  %v1413 = vpack.c.b16 %v1371, %v1370
  %v1414 = vpack.c.b16 %v1373, %v1372
  %v1415 = vpack.c.b16 %v1375, %v1374
  %v1416 = vpack.c.b16 %v1377, %v1376
  %v1417 = vpack.c.b16 %v1379, %v1378
  %v1418 = vpack.c.b16 %v1381, %v1380
  %v1419 = vpack.c.b16 %v1383, %v1382
  %v1420 = vpack.c.b16 %v1385, %v1384
  %v1421 = vpack.c.b16 %v1387, %v1386
  %v1422 = vpack.c.b16 %v1389, %v1388
  %v1423 = vpack.c.b16 %v1391, %v1390
  %v1424 = vpack.c.b16 %v1393, %v1392
  %v1425 = vpack.c.b16 %v1395, %v1394
  %v1426 = vpack.c.b16 %v1397, %v1396
  %v1427 = vpack.c.b16 %v1399, %v1398
  %v1428 = vpack.c.b16 %v1401, %v1400
  %v1429 = vpack.c.b16 %v1403, %v1402
  %v1430 = vpack.c.b16 %v1405, %v1404
  %v1431 = vpack.c.b16 %v1406, %v1406
  %v1433 = vsel %vm207, %v1407, 0
  %v1436 = vsel %vm207, %v1408, 0
  %v1439 = vsel %vm207, %v1409, 0
  %v1442 = vsel %vm207, %v1410, 0
  %v1445 = vsel %vm207, %v1411, 0
  %v1448 = vsel %vm207, %v1412, 0
  %v1451 = vsel %vm207, %v1413, 0
  %v1454 = vsel %vm207, %v1414, 0
  %v1457 = vsel %vm207, %v1415, 0
  %v1460 = vsel %vm207, %v1416, 0
  %v1463 = vsel %vm207, %v1417, 0
  %v1466 = vsel %vm207, %v1418, 0
  %v1469 = vsel %vm207, %v1419, 0
  %v1472 = vsel %vm207, %v1420, 0
  %v1475 = vsel %vm207, %v1421, 0
  %v1478 = vsel %vm207, %v1422, 0
  %v1481 = vsel %vm207, %v1423, 0
  %v1484 = vsel %vm207, %v1424, 0
  %v1487 = vsel %vm207, %v1425, 0
  %v1490 = vsel %vm207, %v1426, 0
  %v1493 = vsel %vm207, %v1427, 0
  %v1496 = vsel %vm207, %v1428, 0
  %v1499 = vsel %vm207, %v1429, 0
  %v1502 = vsel %vm207, %v1430, 0
  %v1505 = vsel %vm207, %v1431, 0
  %1507 = vmatprep.subr.bf16.mxu0 0
  %1508 = vmatpush1.bf16.msra.mxu0 %v204
  %1509 = vmatprep.subr.bf16.mxu0 0
  %1510 = vmatpush1.bf16.msra.mxu0 %v288
  %1511 = vmatprep.subr.bf16.mxu0 0
  %1512 = vmatpush1.bf16.msra.mxu0 0
  %1513 = vmatprep.subr.bf16.mxu0 0
  %1514 = vmatpush1.bf16.msra.mxu0 0
  %1515 = vmatprep.subr.bf16.mxu0 0
  %1516 = vmatpush1.bf16.msra.mxu0 0
  %1517 = vmatprep.subr.bf16.mxu0 0
  %1518 = vmatpush1.bf16.msra.mxu0 0
  %1519 = vmatprep.subr.bf16.mxu0 0
  %1520 = vmatpush1.bf16.msra.mxu0 0
  %1521 = vmatprep.subr.bf16.mxu0 0
  %1522 = vmatpush1.bf16.msra.mxu0 0
  %1523 = vmatprep.subr.bf16.mxu0 0
  %1524 = vmatpush1.bf16.msra.mxu0 0
  %1525 = vmatprep.subr.bf16.mxu0 0
  %1526 = vmatpush1.bf16.msra.mxu0 0
  %1527 = vmatprep.subr.bf16.mxu0 0
  %1528 = vmatpush1.bf16.msra.mxu0 0
  %1529 = vmatprep.subr.bf16.mxu0 0
  %1530 = vmatpush1.bf16.msra.mxu0 0
  %1531 = vmatprep.subr.bf16.mxu0 0
  %1532 = vmatpush1.bf16.msra.mxu0 0
  %1533 = vmatprep.subr.bf16.mxu0 0
  %1534 = vmatpush1.bf16.msra.mxu0 0
  %1535 = vmatprep.subr.bf16.mxu0 0
  %1536 = vmatpush1.bf16.msra.mxu0 0
  %1537 = vmatprep.subr.bf16.mxu0 0
  %1538 = vmatpush1.bf16.msra.mxu0 0
  %1539 = vmatprep.mubr.bf16.mxu0 0
  %1540 = vmatmul.mubr.bf16.gmra.mrb[0].mxu0 %v1433
  %v1541 = vpop.f32.mrb[0].mxu0
  %v1542 = vadd.f32 0.0, %v1541
  %v1543 = vpop.f32.mrb[0].mxu0
  %v1544 = vpop.f32.mrb[0].mxu0
  %v1545 = vadd.f32 0.0, %v1544
  %v1546 = vpop.f32.mrb[0].mxu0
  %1547 = vmatprep.mubr.bf16.mxu0 0
  %1548 = vmatmul.mubr.bf16.gmra.mrb[0].mxu0 %v1436
  %v1549 = vpop.f32.mrb[0].mxu0
  %v1550 = vadd.f32 0.0, %v1549
  %v1551 = vpop.f32.mrb[0].mxu0
  %v1552 = vpop.f32.mrb[0].mxu0
  %v1553 = vadd.f32 0.0, %v1552
  %v1554 = vpop.f32.mrb[0].mxu0
  %1555 = vmatprep.mubr.bf16.mxu0 0
  %1556 = vmatmul.mubr.bf16.gmra.mrb[0].mxu0 %v1439
  %v1557 = vpop.f32.mrb[0].mxu0
  %v1558 = vadd.f32 0.0, %v1557
  %v1559 = vpop.f32.mrb[0].mxu0
  %v1560 = vpop.f32.mrb[0].mxu0
  %v1561 = vadd.f32 0.0, %v1560
  %v1562 = vpop.f32.mrb[0].mxu0
  %1563 = vmatprep.mubr.bf16.mxu0 0
  %1564 = vmatmul.mubr.bf16.gmra.mrb[0].mxu0 %v1442
  %v1565 = vpop.f32.mrb[0].mxu0
  %v1566 = vadd.f32 0.0, %v1565
  %v1567 = vpop.f32.mrb[0].mxu0
  %v1568 = vpop.f32.mrb[0].mxu0
  %v1569 = vadd.f32 0.0, %v1568
  %v1570 = vpop.f32.mrb[0].mxu0
  %1571 = vmatprep.mubr.bf16.mxu0 0
  %1572 = vmatmul.mubr.bf16.gmra.mrb[0].mxu0 %v1445
  %v1573 = vpop.f32.mrb[0].mxu0
  %v1574 = vadd.f32 0.0, %v1573
  %v1575 = vpop.f32.mrb[0].mxu0
  %v1576 = vpop.f32.mrb[0].mxu0
  %v1577 = vadd.f32 0.0, %v1576
  %v1578 = vpop.f32.mrb[0].mxu0
  %1579 = vmatprep.mubr.bf16.mxu0 0
  %1580 = vmatmul.mubr.bf16.gmra.mrb[0].mxu0 %v1448
  %v1581 = vpop.f32.mrb[0].mxu0
  %v1582 = vadd.f32 0.0, %v1581
  %v1583 = vpop.f32.mrb[0].mxu0
  %v1584 = vpop.f32.mrb[0].mxu0
  %v1585 = vadd.f32 0.0, %v1584
  %v1586 = vpop.f32.mrb[0].mxu0
  %1587 = vmatprep.mubr.bf16.mxu0 0
  %1588 = vmatmul.mubr.bf16.gmra.mrb[0].mxu0 %v1451
  %v1589 = vpop.f32.mrb[0].mxu0
  %v1590 = vadd.f32 0.0, %v1589
  %v1591 = vpop.f32.mrb[0].mxu0
  %v1592 = vpop.f32.mrb[0].mxu0
  %v1593 = vadd.f32 0.0, %v1592
  %v1594 = vpop.f32.mrb[0].mxu0
  %1595 = vmatprep.mubr.bf16.mxu0 0
  %1596 = vmatmul.mubr.bf16.gmra.mrb[0].mxu0 %v1454
  %v1597 = vpop.f32.mrb[0].mxu0
  %v1598 = vadd.f32 0.0, %v1597
  %v1599 = vpop.f32.mrb[0].mxu0
  %v1600 = vpop.f32.mrb[0].mxu0
  %v1601 = vadd.f32 0.0, %v1600
  %v1602 = vpop.f32.mrb[0].mxu0
  %1603 = vmatprep.mubr.bf16.mxu0 0
  %1604 = vmatmul.mubr.bf16.gmra.mrb[0].mxu0 %v1457
  %v1605 = vpop.f32.mrb[0].mxu0
  %v1606 = vadd.f32 0.0, %v1605
  %v1607 = vpop.f32.mrb[0].mxu0
  %v1608 = vpop.f32.mrb[0].mxu0
  %v1609 = vadd.f32 0.0, %v1608
  %v1610 = vpop.f32.mrb[0].mxu0
  %1611 = vmatprep.mubr.bf16.mxu0 0
  %1612 = vmatmul.mubr.bf16.gmra.mrb[0].mxu0 %v1460
  %v1613 = vpop.f32.mrb[0].mxu0
  %v1614 = vadd.f32 0.0, %v1613
  %v1615 = vpop.f32.mrb[0].mxu0
  %v1616 = vpop.f32.mrb[0].mxu0
  %v1617 = vadd.f32 0.0, %v1616
  %v1618 = vpop.f32.mrb[0].mxu0
  %1619 = vmatprep.mubr.bf16.mxu0 0
  %1620 = vmatmul.mubr.bf16.gmra.mrb[0].mxu0 %v1463
  %v1621 = vpop.f32.mrb[0].mxu0
  %v1622 = vadd.f32 0.0, %v1621
  %v1623 = vpop.f32.mrb[0].mxu0
  %v1624 = vpop.f32.mrb[0].mxu0
  %v1625 = vadd.f32 0.0, %v1624
  %v1626 = vpop.f32.mrb[0].mxu0
  %1627 = vmatprep.mubr.bf16.mxu0 0
  %1628 = vmatmul.mubr.bf16.gmra.mrb[0].mxu0 %v1466
  %v1629 = vpop.f32.mrb[0].mxu0
  %v1630 = vadd.f32 0.0, %v1629
  %v1631 = vpop.f32.mrb[0].mxu0
  %v1632 = vpop.f32.mrb[0].mxu0
  %v1633 = vadd.f32 0.0, %v1632
  %v1634 = vpop.f32.mrb[0].mxu0
  %1635 = vmatprep.mubr.bf16.mxu0 0
  %1636 = vmatmul.mubr.bf16.gmra.mrb[0].mxu0 %v1469
  %v1637 = vpop.f32.mrb[0].mxu0
  %v1638 = vadd.f32 0.0, %v1637
  %v1639 = vpop.f32.mrb[0].mxu0
  %v1640 = vpop.f32.mrb[0].mxu0
  %v1641 = vadd.f32 0.0, %v1640
  %v1642 = vpop.f32.mrb[0].mxu0
  %1643 = vmatprep.mubr.bf16.mxu0 0
  %1644 = vmatmul.mubr.bf16.gmra.mrb[0].mxu0 %v1472
  %v1645 = vpop.f32.mrb[0].mxu0
  %v1646 = vadd.f32 0.0, %v1645
  %v1647 = vpop.f32.mrb[0].mxu0
  %v1648 = vpop.f32.mrb[0].mxu0
  %v1649 = vadd.f32 0.0, %v1648
  %v1650 = vpop.f32.mrb[0].mxu0
  %1651 = vmatprep.mubr.bf16.mxu0 0
  %1652 = vmatmul.mubr.bf16.gmra.mrb[0].mxu0 %v1475
  %v1653 = vpop.f32.mrb[0].mxu0
  %v1654 = vadd.f32 0.0, %v1653
  %v1655 = vpop.f32.mrb[0].mxu0
  %v1656 = vpop.f32.mrb[0].mxu0
  %v1657 = vadd.f32 0.0, %v1656
  %v1658 = vpop.f32.mrb[0].mxu0
  %1659 = vmatprep.mubr.bf16.mxu0 0
  %1660 = vmatmul.mubr.bf16.gmra.mrb[0].mxu0 %v1478
  %v1661 = vpop.f32.mrb[0].mxu0
  %v1662 = vadd.f32 0.0, %v1661
  %v1663 = vpop.f32.mrb[0].mxu0
  %v1664 = vpop.f32.mrb[0].mxu0
  %v1665 = vadd.f32 0.0, %v1664
  %v1666 = vpop.f32.mrb[0].mxu0
  %1667 = vmatprep.mubr.bf16.mxu0 0
  %1668 = vmatmul.mubr.bf16.gmra.mrb[0].mxu0 %v1481
  %v1669 = vpop.f32.mrb[0].mxu0
  %v1670 = vadd.f32 0.0, %v1669
  %v1671 = vpop.f32.mrb[0].mxu0
  %v1672 = vpop.f32.mrb[0].mxu0
  %v1673 = vadd.f32 0.0, %v1672
  %v1674 = vpop.f32.mrb[0].mxu0
  %1675 = vmatprep.mubr.bf16.mxu0 0
  %1676 = vmatmul.mubr.bf16.gmra.mrb[0].mxu0 %v1484
  %v1677 = vpop.f32.mrb[0].mxu0
  %v1678 = vadd.f32 0.0, %v1677
  %v1679 = vpop.f32.mrb[0].mxu0
  %v1680 = vpop.f32.mrb[0].mxu0
  %v1681 = vadd.f32 0.0, %v1680
  %v1682 = vpop.f32.mrb[0].mxu0
  %1683 = vmatprep.mubr.bf16.mxu0 0
  %1684 = vmatmul.mubr.bf16.gmra.mrb[0].mxu0 %v1487
  %v1685 = vpop.f32.mrb[0].mxu0
  %v1686 = vadd.f32 0.0, %v1685
  %v1687 = vpop.f32.mrb[0].mxu0
  %v1688 = vpop.f32.mrb[0].mxu0
  %v1689 = vadd.f32 0.0, %v1688
  %v1690 = vpop.f32.mrb[0].mxu0
  %1691 = vmatprep.mubr.bf16.mxu0 0
  %1692 = vmatmul.mubr.bf16.gmra.mrb[0].mxu0 %v1490
  %v1693 = vpop.f32.mrb[0].mxu0
  %v1694 = vadd.f32 0.0, %v1693
  %v1695 = vpop.f32.mrb[0].mxu0
  %v1696 = vpop.f32.mrb[0].mxu0
  %v1697 = vadd.f32 0.0, %v1696
  %v1698 = vpop.f32.mrb[0].mxu0
  %1699 = vmatprep.mubr.bf16.mxu0 0
  %1700 = vmatmul.mubr.bf16.gmra.mrb[0].mxu0 %v1493
  %v1701 = vpop.f32.mrb[0].mxu0
  %v1702 = vadd.f32 0.0, %v1701
  %v1703 = vpop.f32.mrb[0].mxu0
  %v1704 = vpop.f32.mrb[0].mxu0
  %v1705 = vadd.f32 0.0, %v1704
  %v1706 = vpop.f32.mrb[0].mxu0
  %1707 = vmatprep.mubr.bf16.mxu0 0
  %1708 = vmatmul.mubr.bf16.gmra.mrb[0].mxu0 %v1496
  %v1709 = vpop.f32.mrb[0].mxu0
  %v1710 = vadd.f32 0.0, %v1709
  %v1711 = vpop.f32.mrb[0].mxu0
  %v1712 = vpop.f32.mrb[0].mxu0
  %v1713 = vadd.f32 0.0, %v1712
  %v1714 = vpop.f32.mrb[0].mxu0
  %1715 = vmatprep.mubr.bf16.mxu0 0
  %1716 = vmatmul.mubr.bf16.gmra.mrb[0].mxu0 %v1499
  %v1717 = vpop.f32.mrb[0].mxu0
  %v1718 = vadd.f32 0.0, %v1717
  %v1719 = vpop.f32.mrb[0].mxu0
  %v1720 = vpop.f32.mrb[0].mxu0
  %v1721 = vadd.f32 0.0, %v1720
  %v1722 = vpop.f32.mrb[0].mxu0
  %1723 = vmatprep.mubr.bf16.mxu0 0
  %1724 = vmatmul.mubr.bf16.gmra.mrb[0].mxu0 %v1502
  %v1725 = vpop.f32.mrb[0].mxu0
  %v1726 = vadd.f32 0.0, %v1725
  %v1727 = vpop.f32.mrb[0].mxu0
  %v1728 = vpop.f32.mrb[0].mxu0
  %v1729 = vadd.f32 0.0, %v1728
  %v1730 = vpop.f32.mrb[0].mxu0
  %1731 = vmatprep.mubr.bf16.mxu0 0
  %1732 = vmatmul.mubr.bf16.gmra.mrb[0].mxu0 %v1505
  %v1733 = vpop.f32.mrb[0].mxu0
  %v1734 = vadd.f32 0.0, %v1733
  %v1735 = vpop.f32.mrb[0].mxu0
  %v1736 = vpop.f32.mrb[0].mxu0
  %v1737 = vpop.f32.mrb[0].mxu0
  %1738 = vdwg.mxu0
  %v1739 = vmul.f32 %v1542, %v526
  %v1740 = vmul.f32 %v1545, %v526
  %v1741 = vmul.f32 %v1550, %v526
  %v1742 = vmul.f32 %v1553, %v526
  %v1743 = vmul.f32 %v1558, %v526
  %v1744 = vmul.f32 %v1561, %v526
  %v1745 = vmul.f32 %v1566, %v526
  %v1746 = vmul.f32 %v1569, %v526
  %v1747 = vmul.f32 %v1574, %v526
  %v1748 = vmul.f32 %v1577, %v526
  %v1749 = vmul.f32 %v1582, %v526
  %v1750 = vmul.f32 %v1585, %v526
  %v1751 = vmul.f32 %v1590, %v526
  %v1752 = vmul.f32 %v1593, %v526
  %v1753 = vmul.f32 %v1598, %v526
  %v1754 = vmul.f32 %v1601, %v526
  %v1755 = vmul.f32 %v1606, %v526
  %v1756 = vmul.f32 %v1609, %v526
  %v1757 = vmul.f32 %v1614, %v526
  %v1758 = vmul.f32 %v1617, %v526
  %v1759 = vmul.f32 %v1622, %v526
  %v1760 = vmul.f32 %v1625, %v526
  %v1761 = vmul.f32 %v1630, %v526
  %v1762 = vmul.f32 %v1633, %v526
  %v1763 = vmul.f32 %v1638, %v526
  %v1764 = vmul.f32 %v1641, %v526
  %v1765 = vmul.f32 %v1646, %v526
  %v1766 = vmul.f32 %v1649, %v526
  %v1767 = vmul.f32 %v1654, %v526
  %v1768 = vmul.f32 %v1657, %v526
  %v1769 = vmul.f32 %v1662, %v526
  %v1770 = vmul.f32 %v1665, %v526
  %v1771 = vmul.f32 %v1670, %v526
  %v1772 = vmul.f32 %v1673, %v526
  %v1773 = vmul.f32 %v1678, %v526
  %v1774 = vmul.f32 %v1681, %v526
  %v1775 = vmul.f32 %v1686, %v526
  %v1776 = vmul.f32 %v1689, %v526
  %v1777 = vmul.f32 %v1694, %v526
  %v1778 = vmul.f32 %v1697, %v526
  %v1779 = vmul.f32 %v1702, %v526
  %v1780 = vmul.f32 %v1705, %v526
  %v1781 = vmul.f32 %v1710, %v526
  %v1782 = vmul.f32 %v1713, %v526
  %v1783 = vmul.f32 %v1718, %v526
  %v1784 = vmul.f32 %v1721, %v526
  %v1785 = vmul.f32 %v1726, %v526
  %v1786 = vmul.f32 %v1729, %v526
  %v1787 = vmul.f32 %v1734, %v526
  %v1788 = vadd.f32 %v1739, %v581
  %v1789 = vadd.f32 %v1740, %v581
  %v1790 = vadd.f32 %v1741, %v581
  %v1791 = vadd.f32 %v1742, %v581
  %v1792 = vadd.f32 %v1743, %v581
  %v1793 = vadd.f32 %v1744, %v581
  %v1794 = vadd.f32 %v1745, %v581
  %v1795 = vadd.f32 %v1746, %v581
  %v1796 = vadd.f32 %v1747, %v581
  %v1797 = vadd.f32 %v1748, %v581
  %v1798 = vadd.f32 %v1749, %v581
  %v1799 = vadd.f32 %v1750, %v581
  %v1800 = vadd.f32 %v1751, %v581
  %v1801 = vadd.f32 %v1752, %v581
  %v1802 = vadd.f32 %v1753, %v581
  %v1803 = vadd.f32 %v1754, %v581
  %v1804 = vadd.f32 %v1755, %v581
  %v1805 = vadd.f32 %v1756, %v581
  %v1806 = vadd.f32 %v1757, %v581
  %v1807 = vadd.f32 %v1758, %v581
  %v1808 = vadd.f32 %v1759, %v581
  %v1809 = vadd.f32 %v1760, %v581
  %v1810 = vadd.f32 %v1761, %v581
  %v1811 = vadd.f32 %v1762, %v581
  %v1812 = vadd.f32 %v1763, %v581
  %v1813 = vadd.f32 %v1764, %v581
  %v1814 = vadd.f32 %v1765, %v581
  %v1815 = vadd.f32 %v1766, %v581
  %v1816 = vadd.f32 %v1767, %v581
  %v1817 = vadd.f32 %v1768, %v581
  %v1818 = vadd.f32 %v1769, %v581
  %v1819 = vadd.f32 %v1770, %v581
  %v1820 = vadd.f32 %v1771, %v581
  %v1821 = vadd.f32 %v1772, %v581
  %v1822 = vadd.f32 %v1773, %v581
  %v1823 = vadd.f32 %v1774, %v581
  %v1824 = vadd.f32 %v1775, %v581
  %v1825 = vadd.f32 %v1776, %v581
  %v1826 = vadd.f32 %v1777, %v581
  %v1827 = vadd.f32 %v1778, %v581
  %v1828 = vadd.f32 %v1779, %v581
  %v1829 = vadd.f32 %v1780, %v581
  %v1830 = vadd.f32 %v1781, %v581
  %v1831 = vadd.f32 %v1782, %v581
  %v1832 = vadd.f32 %v1783, %v581
  %v1833 = vadd.f32 %v1784, %v581
  %v1834 = vadd.f32 %v1785, %v581
  %v1835 = vadd.f32 %v1786, %v581
  %v1836 = vadd.f32 %v1787, %v581
  %s1837 = scalar_lea.vmem %s0, 588
  %v1838 = vld [vmem:[%s1837] sm:$0xf]
  %v1839 = vld [vmem:[%s1837 + $0x4] sm:$0xf]
  %v1840 = vld [vmem:[%s1837 + $0x8] sm:$0xf]
  %v1841 = vld [vmem:[%s1837 + $0xc] sm:$0xf]
  %v1842 = vld [vmem:[%s1837 + $0x10] sm:$0xf]
  %v1843 = vld [vmem:[%s1837 + $0x14] sm:$0xf]
  %v1844 = vld [vmem:[%s1837 + $0x18] sm:$0xf]
  %v1845 = vld [vmem:[%s1837 + $0x1c] sm:$0xf]
  %v1846 = vld [vmem:[%s1837 + $0x20] sm:$0xf]
  %v1847 = vld [vmem:[%s1837 + $0x24] sm:$0xf]
  %v1848 = vld [vmem:[%s1837 + $0x28] sm:$0xf]
  %v1849 = vld [vmem:[%s1837 + $0x2c] sm:$0xf]
  %v1850 = vld [vmem:[%s1837 + $0x30] sm:$0xf]
  %v1851 = vld [vmem:[%s1837 + $0x34] sm:$0xf]
  %v1852 = vld [vmem:[%s1837 + $0x38] sm:$0xf]
  %v1853 = vld [vmem:[%s1837 + $0x3c] sm:$0xf]
  %v1854 = vld [vmem:[%s1837 + $0x40] sm:$0xf]
  %v1855 = vld [vmem:[%s1837 + $0x44] sm:$0xf]
  %v1856 = vld [vmem:[%s1837 + $0x48] sm:$0xf]
  %v1857 = vld [vmem:[%s1837 + $0x4c] sm:$0xf]
  %v1858 = vld [vmem:[%s1837 + $0x50] sm:$0xf]
  %v1859 = vld [vmem:[%s1837 + $0x54] sm:$0xf]
  %v1860 = vld [vmem:[%s1837 + $0x58] sm:$0xf]
  %v1861 = vld [vmem:[%s1837 + $0x5c] sm:$0xf]
  %v1862 = vld [vmem:[%s1837 + $0x60] sm:$0xf]
  %v1863 = vld [vmem:[%s1837 + $0x64] sm:$0xf]
  %v1864 = vld [vmem:[%s1837 + $0x68] sm:$0xf]
  %v1865 = vld [vmem:[%s1837 + $0x6c] sm:$0xf]
  %v1866 = vld [vmem:[%s1837 + $0x70] sm:$0xf]
  %v1867 = vld [vmem:[%s1837 + $0x74] sm:$0xf]
  %v1868 = vld [vmem:[%s1837 + $0x78] sm:$0xf]
  %v1869 = vld [vmem:[%s1837 + $0x7c] sm:$0xf]
  %v1870 = vld [vmem:[%s1837 + $0x80] sm:$0xf]
  %v1871 = vld [vmem:[%s1837 + $0x84] sm:$0xf]
  %v1872 = vld [vmem:[%s1837 + $0x88] sm:$0xf]
  %v1873 = vld [vmem:[%s1837 + $0x8c] sm:$0xf]
  %v1874 = vld [vmem:[%s1837 + $0x90] sm:$0xf]
  %v1875 = vld [vmem:[%s1837 + $0x94] sm:$0xf]
  %v1876 = vld [vmem:[%s1837 + $0x98] sm:$0xf]
  %v1877 = vld [vmem:[%s1837 + $0x9c] sm:$0xf]
  %v1878 = vld [vmem:[%s1837 + $0xa0] sm:$0xf]
  %v1879 = vld [vmem:[%s1837 + $0xa4] sm:$0xf]
  %v1880 = vld [vmem:[%s1837 + $0xa8] sm:$0xf]
  %v1881 = vld [vmem:[%s1837 + $0xac] sm:$0xf]
  %v1882 = vld [vmem:[%s1837 + $0xb0] sm:$0xf]
  %v1883 = vld [vmem:[%s1837 + $0xb4] sm:$0xf]
  %v1884 = vld [vmem:[%s1837 + $0xb8] sm:$0xf]
  %v1885 = vld [vmem:[%s1837 + $0xbc] sm:$0xf]
  %v1886 = vld [vmem:[%s1837 + $0xc0] sm:$0xf]
  %v1936 = vunpack.c.l.b16 %v1838
  %v1937 = vunpack.c.l.b16 %v1839
  %v1938 = vunpack.c.l.b16 %v1840
  %v1939 = vunpack.c.l.b16 %v1841
  %v1940 = vunpack.c.l.b16 %v1842
  %v1941 = vunpack.c.l.b16 %v1843
  %v1942 = vunpack.c.l.b16 %v1844
  %v1943 = vunpack.c.l.b16 %v1845
  %v1944 = vunpack.c.l.b16 %v1846
  %v1945 = vunpack.c.l.b16 %v1847
  %v1946 = vunpack.c.l.b16 %v1848
  %v1947 = vunpack.c.l.b16 %v1849
  %v1948 = vunpack.c.l.b16 %v1850
  %v1949 = vunpack.c.l.b16 %v1851
  %v1950 = vunpack.c.l.b16 %v1852
  %v1951 = vunpack.c.l.b16 %v1853
  %v1952 = vunpack.c.l.b16 %v1854
  %v1953 = vunpack.c.l.b16 %v1855
  %v1954 = vunpack.c.l.b16 %v1856
  %v1955 = vunpack.c.l.b16 %v1857
  %v1956 = vunpack.c.l.b16 %v1858
  %v1957 = vunpack.c.l.b16 %v1859
  %v1958 = vunpack.c.l.b16 %v1860
  %v1959 = vunpack.c.l.b16 %v1861
  %v1960 = vunpack.c.l.b16 %v1862
  %v1961 = vunpack.c.l.b16 %v1863
  %v1962 = vunpack.c.l.b16 %v1864
  %v1963 = vunpack.c.l.b16 %v1865
  %v1964 = vunpack.c.l.b16 %v1866
  %v1965 = vunpack.c.l.b16 %v1867
  %v1966 = vunpack.c.l.b16 %v1868
  %v1967 = vunpack.c.l.b16 %v1869
  %v1968 = vunpack.c.l.b16 %v1870
  %v1969 = vunpack.c.l.b16 %v1871
  %v1970 = vunpack.c.l.b16 %v1872
  %v1971 = vunpack.c.l.b16 %v1873
  %v1972 = vunpack.c.l.b16 %v1874
  %v1973 = vunpack.c.l.b16 %v1875
  %v1974 = vunpack.c.l.b16 %v1876
  %v1975 = vunpack.c.l.b16 %v1877
  %v1976 = vunpack.c.l.b16 %v1878
  %v1977 = vunpack.c.l.b16 %v1879
  %v1978 = vunpack.c.l.b16 %v1880
  %v1979 = vunpack.c.l.b16 %v1881
  %v1980 = vunpack.c.l.b16 %v1882
  %v1981 = vunpack.c.l.b16 %v1883
  %v1982 = vunpack.c.l.b16 %v1884
  %v1983 = vunpack.c.l.b16 %v1885
  %v1984 = vunpack.c.l.b16 %v1886
  %v1985 = vpack.c.b16 %v1937, %v1936
  %v1986 = vpack.c.b16 %v1939, %v1938
  %v1987 = vpack.c.b16 %v1941, %v1940
  %v1988 = vpack.c.b16 %v1943, %v1942
  %v1989 = vpack.c.b16 %v1945, %v1944
  %v1990 = vpack.c.b16 %v1947, %v1946
  %v1991 = vpack.c.b16 %v1949, %v1948
  %v1992 = vpack.c.b16 %v1951, %v1950
  %v1993 = vpack.c.b16 %v1953, %v1952
  %v1994 = vpack.c.b16 %v1955, %v1954
  %v1995 = vpack.c.b16 %v1957, %v1956
  %v1996 = vpack.c.b16 %v1959, %v1958
  %v1997 = vpack.c.b16 %v1961, %v1960
  %v1998 = vpack.c.b16 %v1963, %v1962
  %v1999 = vpack.c.b16 %v1965, %v1964
  %v2000 = vpack.c.b16 %v1967, %v1966
  %v2001 = vpack.c.b16 %v1969, %v1968
  %v2002 = vpack.c.b16 %v1971, %v1970
  %v2003 = vpack.c.b16 %v1973, %v1972
  %v2004 = vpack.c.b16 %v1975, %v1974
  %v2005 = vpack.c.b16 %v1977, %v1976
  %v2006 = vpack.c.b16 %v1979, %v1978
  %v2007 = vpack.c.b16 %v1981, %v1980
  %v2008 = vpack.c.b16 %v1983, %v1982
  %v2009 = vpack.c.b16 %v1984, %v1984
  %v2011 = vsel %vm207, %v1985, 0
  %v2014 = vsel %vm207, %v1986, 0
  %v2017 = vsel %vm207, %v1987, 0
  %v2020 = vsel %vm207, %v1988, 0
  %v2023 = vsel %vm207, %v1989, 0
  %v2026 = vsel %vm207, %v1990, 0
  %v2029 = vsel %vm207, %v1991, 0
  %v2032 = vsel %vm207, %v1992, 0
  %v2035 = vsel %vm207, %v1993, 0
  %v2038 = vsel %vm207, %v1994, 0
  %v2041 = vsel %vm207, %v1995, 0
  %v2044 = vsel %vm207, %v1996, 0
  %v2047 = vsel %vm207, %v1997, 0
  %v2050 = vsel %vm207, %v1998, 0
  %v2053 = vsel %vm207, %v1999, 0
  %v2056 = vsel %vm207, %v2000, 0
  %v2059 = vsel %vm207, %v2001, 0
  %v2062 = vsel %vm207, %v2002, 0
  %v2065 = vsel %vm207, %v2003, 0
  %v2068 = vsel %vm207, %v2004, 0
  %v2071 = vsel %vm207, %v2005, 0
  %v2074 = vsel %vm207, %v2006, 0
  %v2077 = vsel %vm207, %v2007, 0
  %v2080 = vsel %vm207, %v2008, 0
  %v2083 = vsel %vm207, %v2009, 0
  %2085 = vmatprep.subr.bf16.mxu0 0
  %2086 = vmatpush1.bf16.msra.mxu0 %v204
  %2087 = vmatprep.subr.bf16.mxu0 0
  %2088 = vmatpush1.bf16.msra.mxu0 %v288
  %2089 = vmatprep.subr.bf16.mxu0 0
  %2090 = vmatpush1.bf16.msra.mxu0 0
  %2091 = vmatprep.subr.bf16.mxu0 0
  %2092 = vmatpush1.bf16.msra.mxu0 0
  %2093 = vmatprep.subr.bf16.mxu0 0
  %2094 = vmatpush1.bf16.msra.mxu0 0
  %2095 = vmatprep.subr.bf16.mxu0 0
  %2096 = vmatpush1.bf16.msra.mxu0 0
  %2097 = vmatprep.subr.bf16.mxu0 0
  %2098 = vmatpush1.bf16.msra.mxu0 0
  %2099 = vmatprep.subr.bf16.mxu0 0
  %2100 = vmatpush1.bf16.msra.mxu0 0
  %2101 = vmatprep.subr.bf16.mxu0 0
  %2102 = vmatpush1.bf16.msra.mxu0 0
  %2103 = vmatprep.subr.bf16.mxu0 0
  %2104 = vmatpush1.bf16.msra.mxu0 0
  %2105 = vmatprep.subr.bf16.mxu0 0
  %2106 = vmatpush1.bf16.msra.mxu0 0
  %2107 = vmatprep.subr.bf16.mxu0 0
  %2108 = vmatpush1.bf16.msra.mxu0 0
  %2109 = vmatprep.subr.bf16.mxu0 0
  %2110 = vmatpush1.bf16.msra.mxu0 0
  %2111 = vmatprep.subr.bf16.mxu0 0
  %2112 = vmatpush1.bf16.msra.mxu0 0
  %2113 = vmatprep.subr.bf16.mxu0 0
  %2114 = vmatpush1.bf16.msra.mxu0 0
  %2115 = vmatprep.subr.bf16.mxu0 0
  %2116 = vmatpush1.bf16.msra.mxu0 0
  %2117 = vmatprep.mubr.bf16.mxu0 0
  %2118 = vmatmul.mubr.bf16.gmra.mrb[0].mxu0 %v2011
  %v2119 = vpop.f32.mrb[0].mxu0
  %v2120 = vadd.f32 0.0, %v2119
  %v2121 = vpop.f32.mrb[0].mxu0
  %v2122 = vpop.f32.mrb[0].mxu0
  %v2123 = vadd.f32 0.0, %v2122
  %v2124 = vpop.f32.mrb[0].mxu0
  %2125 = vmatprep.mubr.bf16.mxu0 0
  %2126 = vmatmul.mubr.bf16.gmra.mrb[0].mxu0 %v2014
  %v2127 = vpop.f32.mrb[0].mxu0
  %v2128 = vadd.f32 0.0, %v2127
  %v2129 = vpop.f32.mrb[0].mxu0
  %v2130 = vpop.f32.mrb[0].mxu0
  %v2131 = vadd.f32 0.0, %v2130
  %v2132 = vpop.f32.mrb[0].mxu0
  %2133 = vmatprep.mubr.bf16.mxu0 0
  %2134 = vmatmul.mubr.bf16.gmra.mrb[0].mxu0 %v2017
  %v2135 = vpop.f32.mrb[0].mxu0
  %v2136 = vadd.f32 0.0, %v2135
  %v2137 = vpop.f32.mrb[0].mxu0
  %v2138 = vpop.f32.mrb[0].mxu0
  %v2139 = vadd.f32 0.0, %v2138
  %v2140 = vpop.f32.mrb[0].mxu0
  %2141 = vmatprep.mubr.bf16.mxu0 0
  %2142 = vmatmul.mubr.bf16.gmra.mrb[0].mxu0 %v2020
  %v2143 = vpop.f32.mrb[0].mxu0
  %v2144 = vadd.f32 0.0, %v2143
  %v2145 = vpop.f32.mrb[0].mxu0
  %v2146 = vpop.f32.mrb[0].mxu0
  %v2147 = vadd.f32 0.0, %v2146
  %v2148 = vpop.f32.mrb[0].mxu0
  %2149 = vmatprep.mubr.bf16.mxu0 0
  %2150 = vmatmul.mubr.bf16.gmra.mrb[0].mxu0 %v2023
  %v2151 = vpop.f32.mrb[0].mxu0
  %v2152 = vadd.f32 0.0, %v2151
  %v2153 = vpop.f32.mrb[0].mxu0
  %v2154 = vpop.f32.mrb[0].mxu0
  %v2155 = vadd.f32 0.0, %v2154
  %v2156 = vpop.f32.mrb[0].mxu0
  %2157 = vmatprep.mubr.bf16.mxu0 0
  %2158 = vmatmul.mubr.bf16.gmra.mrb[0].mxu0 %v2026
  %v2159 = vpop.f32.mrb[0].mxu0
  %v2160 = vadd.f32 0.0, %v2159
  %v2161 = vpop.f32.mrb[0].mxu0
  %v2162 = vpop.f32.mrb[0].mxu0
  %v2163 = vadd.f32 0.0, %v2162
  %v2164 = vpop.f32.mrb[0].mxu0
  %2165 = vmatprep.mubr.bf16.mxu0 0
  %2166 = vmatmul.mubr.bf16.gmra.mrb[0].mxu0 %v2029
  %v2167 = vpop.f32.mrb[0].mxu0
  %v2168 = vadd.f32 0.0, %v2167
  %v2169 = vpop.f32.mrb[0].mxu0
  %v2170 = vpop.f32.mrb[0].mxu0
  %v2171 = vadd.f32 0.0, %v2170
  %v2172 = vpop.f32.mrb[0].mxu0
  %2173 = vmatprep.mubr.bf16.mxu0 0
  %2174 = vmatmul.mubr.bf16.gmra.mrb[0].mxu0 %v2032
  %v2175 = vpop.f32.mrb[0].mxu0
  %v2176 = vadd.f32 0.0, %v2175
  %v2177 = vpop.f32.mrb[0].mxu0
  %v2178 = vpop.f32.mrb[0].mxu0
  %v2179 = vadd.f32 0.0, %v2178
  %v2180 = vpop.f32.mrb[0].mxu0
  %2181 = vmatprep.mubr.bf16.mxu0 0
  %2182 = vmatmul.mubr.bf16.gmra.mrb[0].mxu0 %v2035
  %v2183 = vpop.f32.mrb[0].mxu0
  %v2184 = vadd.f32 0.0, %v2183
  %v2185 = vpop.f32.mrb[0].mxu0
  %v2186 = vpop.f32.mrb[0].mxu0
  %v2187 = vadd.f32 0.0, %v2186
  %v2188 = vpop.f32.mrb[0].mxu0
  %2189 = vmatprep.mubr.bf16.mxu0 0
  %2190 = vmatmul.mubr.bf16.gmra.mrb[0].mxu0 %v2038
  %v2191 = vpop.f32.mrb[0].mxu0
  %v2192 = vadd.f32 0.0, %v2191
  %v2193 = vpop.f32.mrb[0].mxu0
  %v2194 = vpop.f32.mrb[0].mxu0
  %v2195 = vadd.f32 0.0, %v2194
  %v2196 = vpop.f32.mrb[0].mxu0
  %2197 = vmatprep.mubr.bf16.mxu0 0
  %2198 = vmatmul.mubr.bf16.gmra.mrb[0].mxu0 %v2041
  %v2199 = vpop.f32.mrb[0].mxu0
  %v2200 = vadd.f32 0.0, %v2199
  %v2201 = vpop.f32.mrb[0].mxu0
  %v2202 = vpop.f32.mrb[0].mxu0
  %v2203 = vadd.f32 0.0, %v2202
  %v2204 = vpop.f32.mrb[0].mxu0
  %2205 = vmatprep.mubr.bf16.mxu0 0
  %2206 = vmatmul.mubr.bf16.gmra.mrb[0].mxu0 %v2044
  %v2207 = vpop.f32.mrb[0].mxu0
  %v2208 = vadd.f32 0.0, %v2207
  %v2209 = vpop.f32.mrb[0].mxu0
  %v2210 = vpop.f32.mrb[0].mxu0
  %v2211 = vadd.f32 0.0, %v2210
  %v2212 = vpop.f32.mrb[0].mxu0
  %2213 = vmatprep.mubr.bf16.mxu0 0
  %2214 = vmatmul.mubr.bf16.gmra.mrb[0].mxu0 %v2047
  %v2215 = vpop.f32.mrb[0].mxu0
  %v2216 = vadd.f32 0.0, %v2215
  %v2217 = vpop.f32.mrb[0].mxu0
  %v2218 = vpop.f32.mrb[0].mxu0
  %v2219 = vadd.f32 0.0, %v2218
  %v2220 = vpop.f32.mrb[0].mxu0
  %2221 = vmatprep.mubr.bf16.mxu0 0
  %2222 = vmatmul.mubr.bf16.gmra.mrb[0].mxu0 %v2050
  %v2223 = vpop.f32.mrb[0].mxu0
  %v2224 = vadd.f32 0.0, %v2223
  %v2225 = vpop.f32.mrb[0].mxu0
  %v2226 = vpop.f32.mrb[0].mxu0
  %v2227 = vadd.f32 0.0, %v2226
  %v2228 = vpop.f32.mrb[0].mxu0
  %2229 = vmatprep.mubr.bf16.mxu0 0
  %2230 = vmatmul.mubr.bf16.gmra.mrb[0].mxu0 %v2053
  %v2231 = vpop.f32.mrb[0].mxu0
  %v2232 = vadd.f32 0.0, %v2231
  %v2233 = vpop.f32.mrb[0].mxu0
  %v2234 = vpop.f32.mrb[0].mxu0
  %v2235 = vadd.f32 0.0, %v2234
  %v2236 = vpop.f32.mrb[0].mxu0
  %2237 = vmatprep.mubr.bf16.mxu0 0
  %2238 = vmatmul.mubr.bf16.gmra.mrb[0].mxu0 %v2056
  %v2239 = vpop.f32.mrb[0].mxu0
  %v2240 = vadd.f32 0.0, %v2239
  %v2241 = vpop.f32.mrb[0].mxu0
  %v2242 = vpop.f32.mrb[0].mxu0
  %v2243 = vadd.f32 0.0, %v2242
  %v2244 = vpop.f32.mrb[0].mxu0
  %2245 = vmatprep.mubr.bf16.mxu0 0
  %2246 = vmatmul.mubr.bf16.gmra.mrb[0].mxu0 %v2059
  %v2247 = vpop.f32.mrb[0].mxu0
  %v2248 = vadd.f32 0.0, %v2247
  %v2249 = vpop.f32.mrb[0].mxu0
  %v2250 = vpop.f32.mrb[0].mxu0
  %v2251 = vadd.f32 0.0, %v2250
  %v2252 = vpop.f32.mrb[0].mxu0
  %2253 = vmatprep.mubr.bf16.mxu0 0
  %2254 = vmatmul.mubr.bf16.gmra.mrb[0].mxu0 %v2062
  %v2255 = vpop.f32.mrb[0].mxu0
  %v2256 = vadd.f32 0.0, %v2255
  %v2257 = vpop.f32.mrb[0].mxu0
  %v2258 = vpop.f32.mrb[0].mxu0
  %v2259 = vadd.f32 0.0, %v2258
  %v2260 = vpop.f32.mrb[0].mxu0
  %2261 = vmatprep.mubr.bf16.mxu0 0
  %2262 = vmatmul.mubr.bf16.gmra.mrb[0].mxu0 %v2065
  %v2263 = vpop.f32.mrb[0].mxu0
  %v2264 = vadd.f32 0.0, %v2263
  %v2265 = vpop.f32.mrb[0].mxu0
  %v2266 = vpop.f32.mrb[0].mxu0
  %v2267 = vadd.f32 0.0, %v2266
  %v2268 = vpop.f32.mrb[0].mxu0
  %2269 = vmatprep.mubr.bf16.mxu0 0
  %2270 = vmatmul.mubr.bf16.gmra.mrb[0].mxu0 %v2068
  %v2271 = vpop.f32.mrb[0].mxu0
  %v2272 = vadd.f32 0.0, %v2271
  %v2273 = vpop.f32.mrb[0].mxu0
  %v2274 = vpop.f32.mrb[0].mxu0
  %v2275 = vadd.f32 0.0, %v2274
  %v2276 = vpop.f32.mrb[0].mxu0
  %2277 = vmatprep.mubr.bf16.mxu0 0
  %2278 = vmatmul.mubr.bf16.gmra.mrb[0].mxu0 %v2071
  %v2279 = vpop.f32.mrb[0].mxu0
  %v2280 = vadd.f32 0.0, %v2279
  %v2281 = vpop.f32.mrb[0].mxu0
  %v2282 = vpop.f32.mrb[0].mxu0
  %v2283 = vadd.f32 0.0, %v2282
  %v2284 = vpop.f32.mrb[0].mxu0
  %2285 = vmatprep.mubr.bf16.mxu0 0
  %2286 = vmatmul.mubr.bf16.gmra.mrb[0].mxu0 %v2074
  %v2287 = vpop.f32.mrb[0].mxu0
  %v2288 = vadd.f32 0.0, %v2287
  %v2289 = vpop.f32.mrb[0].mxu0
  %v2290 = vpop.f32.mrb[0].mxu0
  %v2291 = vadd.f32 0.0, %v2290
  %v2292 = vpop.f32.mrb[0].mxu0
  %2293 = vmatprep.mubr.bf16.mxu0 0
  %2294 = vmatmul.mubr.bf16.gmra.mrb[0].mxu0 %v2077
  %v2295 = vpop.f32.mrb[0].mxu0
  %v2296 = vadd.f32 0.0, %v2295
  %v2297 = vpop.f32.mrb[0].mxu0
  %v2298 = vpop.f32.mrb[0].mxu0
  %v2299 = vadd.f32 0.0, %v2298
  %v2300 = vpop.f32.mrb[0].mxu0
  %2301 = vmatprep.mubr.bf16.mxu0 0
  %2302 = vmatmul.mubr.bf16.gmra.mrb[0].mxu0 %v2080
  %v2303 = vpop.f32.mrb[0].mxu0
  %v2304 = vadd.f32 0.0, %v2303
  %v2305 = vpop.f32.mrb[0].mxu0
  %v2306 = vpop.f32.mrb[0].mxu0
  %v2307 = vadd.f32 0.0, %v2306
  %v2308 = vpop.f32.mrb[0].mxu0
  %2309 = vmatprep.mubr.bf16.mxu0 0
  %2310 = vmatmul.mubr.bf16.gmra.mrb[0].mxu0 %v2083
  %v2311 = vpop.f32.mrb[0].mxu0
  %v2312 = vadd.f32 0.0, %v2311
  %v2313 = vpop.f32.mrb[0].mxu0
  %v2314 = vpop.f32.mrb[0].mxu0
  %v2315 = vpop.f32.mrb[0].mxu0
  %2316 = vdwg.mxu0
  %v2317 = vmul.f32 %v2120, %v526
  %v2318 = vmul.f32 %v2123, %v526
  %v2319 = vmul.f32 %v2128, %v526
  %v2320 = vmul.f32 %v2131, %v526
  %v2321 = vmul.f32 %v2136, %v526
  %v2322 = vmul.f32 %v2139, %v526
  %v2323 = vmul.f32 %v2144, %v526
  %v2324 = vmul.f32 %v2147, %v526
  %v2325 = vmul.f32 %v2152, %v526
  %v2326 = vmul.f32 %v2155, %v526
  %v2327 = vmul.f32 %v2160, %v526
  %v2328 = vmul.f32 %v2163, %v526
  %v2329 = vmul.f32 %v2168, %v526
  %v2330 = vmul.f32 %v2171, %v526
  %v2331 = vmul.f32 %v2176, %v526
  %v2332 = vmul.f32 %v2179, %v526
  %v2333 = vmul.f32 %v2184, %v526
  %v2334 = vmul.f32 %v2187, %v526
  %v2335 = vmul.f32 %v2192, %v526
  %v2336 = vmul.f32 %v2195, %v526
  %v2337 = vmul.f32 %v2200, %v526
  %v2338 = vmul.f32 %v2203, %v526
  %v2339 = vmul.f32 %v2208, %v526
  %v2340 = vmul.f32 %v2211, %v526
  %v2341 = vmul.f32 %v2216, %v526
  %v2342 = vmul.f32 %v2219, %v526
  %v2343 = vmul.f32 %v2224, %v526
  %v2344 = vmul.f32 %v2227, %v526
  %v2345 = vmul.f32 %v2232, %v526
  %v2346 = vmul.f32 %v2235, %v526
  %v2347 = vmul.f32 %v2240, %v526
  %v2348 = vmul.f32 %v2243, %v526
  %v2349 = vmul.f32 %v2248, %v526
  %v2350 = vmul.f32 %v2251, %v526
  %v2351 = vmul.f32 %v2256, %v526
  %v2352 = vmul.f32 %v2259, %v526
  %v2353 = vmul.f32 %v2264, %v526
  %v2354 = vmul.f32 %v2267, %v526
  %v2355 = vmul.f32 %v2272, %v526
  %v2356 = vmul.f32 %v2275, %v526
  %v2357 = vmul.f32 %v2280, %v526
  %v2358 = vmul.f32 %v2283, %v526
  %v2359 = vmul.f32 %v2288, %v526
  %v2360 = vmul.f32 %v2291, %v526
  %v2361 = vmul.f32 %v2296, %v526
  %v2362 = vmul.f32 %v2299, %v526
  %v2363 = vmul.f32 %v2304, %v526
  %v2364 = vmul.f32 %v2307, %v526
  %v2365 = vmul.f32 %v2312, %v526
  %v2366 = vadd.f32 %v2317, %v581
  %v2367 = vadd.f32 %v2318, %v581
  %v2368 = vadd.f32 %v2319, %v581
  %v2369 = vadd.f32 %v2320, %v581
  %v2370 = vadd.f32 %v2321, %v581
  %v2371 = vadd.f32 %v2322, %v581
  %v2372 = vadd.f32 %v2323, %v581
  %v2373 = vadd.f32 %v2324, %v581
  %v2374 = vadd.f32 %v2325, %v581
  %v2375 = vadd.f32 %v2326, %v581
  %v2376 = vadd.f32 %v2327, %v581
  %v2377 = vadd.f32 %v2328, %v581
  %v2378 = vadd.f32 %v2329, %v581
  %v2379 = vadd.f32 %v2330, %v581
  %v2380 = vadd.f32 %v2331, %v581
  %v2381 = vadd.f32 %v2332, %v581
  %v2382 = vadd.f32 %v2333, %v581
  %v2383 = vadd.f32 %v2334, %v581
  %v2384 = vadd.f32 %v2335, %v581
  %v2385 = vadd.f32 %v2336, %v581
  %v2386 = vadd.f32 %v2337, %v581
  %v2387 = vadd.f32 %v2338, %v581
  %v2388 = vadd.f32 %v2339, %v581
  %v2389 = vadd.f32 %v2340, %v581
  %v2390 = vadd.f32 %v2341, %v581
  %v2391 = vadd.f32 %v2342, %v581
  %v2392 = vadd.f32 %v2343, %v581
  %v2393 = vadd.f32 %v2344, %v581
  %v2394 = vadd.f32 %v2345, %v581
  %v2395 = vadd.f32 %v2346, %v581
  %v2396 = vadd.f32 %v2347, %v581
  %v2397 = vadd.f32 %v2348, %v581
  %v2398 = vadd.f32 %v2349, %v581
  %v2399 = vadd.f32 %v2350, %v581
  %v2400 = vadd.f32 %v2351, %v581
  %v2401 = vadd.f32 %v2352, %v581
  %v2402 = vadd.f32 %v2353, %v581
  %v2403 = vadd.f32 %v2354, %v581
  %v2404 = vadd.f32 %v2355, %v581
  %v2405 = vadd.f32 %v2356, %v581
  %v2406 = vadd.f32 %v2357, %v581
  %v2407 = vadd.f32 %v2358, %v581
  %v2408 = vadd.f32 %v2359, %v581
  %v2409 = vadd.f32 %v2360, %v581
  %v2410 = vadd.f32 %v2361, %v581
  %v2411 = vadd.f32 %v2362, %v581
  %v2412 = vadd.f32 %v2363, %v581
  %v2413 = vadd.f32 %v2364, %v581
  %v2414 = vadd.f32 %v2365, %v581
  %v2415 = vmax.f32 %v1788, %v2366
  %v2416 = vmax.f32 %v1789, %v2367
  %v2417 = vmax.f32 %v1790, %v2368
  %v2418 = vmax.f32 %v1791, %v2369
  %v2419 = vmax.f32 %v1792, %v2370
  %v2420 = vmax.f32 %v1793, %v2371
  %v2421 = vmax.f32 %v1794, %v2372
  %v2422 = vmax.f32 %v1795, %v2373
  %v2423 = vmax.f32 %v1796, %v2374
  %v2424 = vmax.f32 %v1797, %v2375
  %v2425 = vmax.f32 %v1798, %v2376
  %v2426 = vmax.f32 %v1799, %v2377
  %v2427 = vmax.f32 %v1800, %v2378
  %v2428 = vmax.f32 %v1801, %v2379
  %v2429 = vmax.f32 %v1802, %v2380
  %v2430 = vmax.f32 %v1803, %v2381
  %v2431 = vmax.f32 %v1804, %v2382
  %v2432 = vmax.f32 %v1805, %v2383
  %v2433 = vmax.f32 %v1806, %v2384
  %v2434 = vmax.f32 %v1807, %v2385
  %v2435 = vmax.f32 %v1808, %v2386
  %v2436 = vmax.f32 %v1809, %v2387
  %v2437 = vmax.f32 %v1810, %v2388
  %v2438 = vmax.f32 %v1811, %v2389
  %v2439 = vmax.f32 %v1812, %v2390
  %v2440 = vmax.f32 %v1813, %v2391
  %v2441 = vmax.f32 %v1814, %v2392
  %v2442 = vmax.f32 %v1815, %v2393
  %v2443 = vmax.f32 %v1816, %v2394
  %v2444 = vmax.f32 %v1817, %v2395
  %v2445 = vmax.f32 %v1818, %v2396
  %v2446 = vmax.f32 %v1819, %v2397
  %v2447 = vmax.f32 %v1820, %v2398
  %v2448 = vmax.f32 %v1821, %v2399
  %v2449 = vmax.f32 %v1822, %v2400
  %v2450 = vmax.f32 %v1823, %v2401
  %v2451 = vmax.f32 %v1824, %v2402
  %v2452 = vmax.f32 %v1825, %v2403
  %v2453 = vmax.f32 %v1826, %v2404
  %v2454 = vmax.f32 %v1827, %v2405
  %v2455 = vmax.f32 %v1828, %v2406
  %v2456 = vmax.f32 %v1829, %v2407
  %v2457 = vmax.f32 %v1830, %v2408
  %v2458 = vmax.f32 %v1831, %v2409
  %v2459 = vmax.f32 %v1832, %v2410
  %v2460 = vmax.f32 %v1833, %v2411
  %v2461 = vmax.f32 %v1834, %v2412
  %v2462 = vmax.f32 %v1835, %v2413
  %v2463 = vmax.f32 %v1836, %v2414
  %v2464 = vmax.f32 %v1210, %v2415
  %v2465 = vmax.f32 %v1211, %v2416
  %v2466 = vmax.f32 %v1212, %v2417
  %v2467 = vmax.f32 %v1213, %v2418
  %v2468 = vmax.f32 %v1214, %v2419
  %v2469 = vmax.f32 %v1215, %v2420
  %v2470 = vmax.f32 %v1216, %v2421
  %v2471 = vmax.f32 %v1217, %v2422
  %v2472 = vmax.f32 %v1218, %v2423
  %v2473 = vmax.f32 %v1219, %v2424
  %v2474 = vmax.f32 %v1220, %v2425
  %v2475 = vmax.f32 %v1221, %v2426
  %v2476 = vmax.f32 %v1222, %v2427
  %v2477 = vmax.f32 %v1223, %v2428
  %v2478 = vmax.f32 %v1224, %v2429
  %v2479 = vmax.f32 %v1225, %v2430
  %v2480 = vmax.f32 %v1226, %v2431
  %v2481 = vmax.f32 %v1227, %v2432
  %v2482 = vmax.f32 %v1228, %v2433
  %v2483 = vmax.f32 %v1229, %v2434
  %v2484 = vmax.f32 %v1230, %v2435
  %v2485 = vmax.f32 %v1231, %v2436
  %v2486 = vmax.f32 %v1232, %v2437
  %v2487 = vmax.f32 %v1233, %v2438
  %v2488 = vmax.f32 %v1234, %v2439
  %v2489 = vmax.f32 %v1235, %v2440
  %v2490 = vmax.f32 %v1236, %v2441
  %v2491 = vmax.f32 %v1237, %v2442
  %v2492 = vmax.f32 %v1238, %v2443
  %v2493 = vmax.f32 %v1239, %v2444
  %v2494 = vmax.f32 %v1240, %v2445
  %v2495 = vmax.f32 %v1241, %v2446
  %v2496 = vmax.f32 %v1242, %v2447
  %v2497 = vmax.f32 %v1243, %v2448
  %v2498 = vmax.f32 %v1244, %v2449
  %v2499 = vmax.f32 %v1245, %v2450
  %v2500 = vmax.f32 %v1246, %v2451
  %v2501 = vmax.f32 %v1247, %v2452
  %v2502 = vmax.f32 %v1248, %v2453
  %v2503 = vmax.f32 %v1249, %v2454
  %v2504 = vmax.f32 %v1250, %v2455
  %v2505 = vmax.f32 %v1251, %v2456
  %v2506 = vmax.f32 %v1252, %v2457
  %v2507 = vmax.f32 %v1253, %v2458
  %v2508 = vmax.f32 %v1254, %v2459
  %v2509 = vmax.f32 %v1255, %v2460
  %v2510 = vmax.f32 %v1256, %v2461
  %v2511 = vmax.f32 %v1257, %v2462
  %v2512 = vmax.f32 %v1258, %v2463
  %v2513 = vmax.f32 %v2464, 0.0
  %v2514 = vmax.f32 %v2465, 0.0
  %v2515 = vmax.f32 %v2466, 0.0
  %v2516 = vmax.f32 %v2467, 0.0
  %v2517 = vmax.f32 %v2468, 0.0
  %v2518 = vmax.f32 %v2469, 0.0
  %v2519 = vmax.f32 %v2470, 0.0
  %v2520 = vmax.f32 %v2471, 0.0
  %v2521 = vmax.f32 %v2472, 0.0
  %v2522 = vmax.f32 %v2473, 0.0
  %v2523 = vmax.f32 %v2474, 0.0
  %v2524 = vmax.f32 %v2475, 0.0
  %v2525 = vmax.f32 %v2476, 0.0
  %v2526 = vmax.f32 %v2477, 0.0
  %v2527 = vmax.f32 %v2478, 0.0
  %v2528 = vmax.f32 %v2479, 0.0
  %v2529 = vmax.f32 %v2480, 0.0
  %v2530 = vmax.f32 %v2481, 0.0
  %v2531 = vmax.f32 %v2482, 0.0
  %v2532 = vmax.f32 %v2483, 0.0
  %v2533 = vmax.f32 %v2484, 0.0
  %v2534 = vmax.f32 %v2485, 0.0
  %v2535 = vmax.f32 %v2486, 0.0
  %v2536 = vmax.f32 %v2487, 0.0
  %v2537 = vmax.f32 %v2488, 0.0
  %v2538 = vmax.f32 %v2489, 0.0
  %v2539 = vmax.f32 %v2490, 0.0
  %v2540 = vmax.f32 %v2491, 0.0
  %v2541 = vmax.f32 %v2492, 0.0
  %v2542 = vmax.f32 %v2493, 0.0
  %v2543 = vmax.f32 %v2494, 0.0
  %v2544 = vmax.f32 %v2495, 0.0
  %v2545 = vmax.f32 %v2496, 0.0
  %v2546 = vmax.f32 %v2497, 0.0
  %v2547 = vmax.f32 %v2498, 0.0
  %v2548 = vmax.f32 %v2499, 0.0
  %v2549 = vmax.f32 %v2500, 0.0
  %v2550 = vmax.f32 %v2501, 0.0
  %v2551 = vmax.f32 %v2502, 0.0
  %v2552 = vmax.f32 %v2503, 0.0
  %v2553 = vmax.f32 %v2504, 0.0
  %v2554 = vmax.f32 %v2505, 0.0
  %v2555 = vmax.f32 %v2506, 0.0
  %v2556 = vmax.f32 %v2507, 0.0
  %v2557 = vmax.f32 %v2508, 0.0
  %v2558 = vmax.f32 %v2509, 0.0
  %v2559 = vmax.f32 %v2510, 0.0
  %v2560 = vmax.f32 %v2511, 0.0
  %v2561 = vmax.f32 %v2512, 0.0
  %vm2562 = vcmask 130048
  %2563 = vst.msk [vmem:[%s4] sm:$0xff] %vm2562, %v2513
  %2564 = vst.msk [vmem:[%s4 + $0x8] sm:$0xff] %vm2562, %v2514
  %2565 = vst.msk [vmem:[%s4 + $0x10] sm:$0xff] %vm2562, %v2515
  %2566 = vst.msk [vmem:[%s4 + $0x18] sm:$0xff] %vm2562, %v2516
  %2567 = vst.msk [vmem:[%s4 + $0x20] sm:$0xff] %vm2562, %v2517
  %2568 = vst.msk [vmem:[%s4 + $0x28] sm:$0xff] %vm2562, %v2518
  %2569 = vst.msk [vmem:[%s4 + $0x30] sm:$0xff] %vm2562, %v2519
  %2570 = vst.msk [vmem:[%s4 + $0x38] sm:$0xff] %vm2562, %v2520
  %2571 = vst.msk [vmem:[%s4 + $0x40] sm:$0xff] %vm2562, %v2521
  %2572 = vst.msk [vmem:[%s4 + $0x48] sm:$0xff] %vm2562, %v2522
  %2573 = vst.msk [vmem:[%s4 + $0x50] sm:$0xff] %vm2562, %v2523
  %2574 = vst.msk [vmem:[%s4 + $0x58] sm:$0xff] %vm2562, %v2524
  %2575 = vst.msk [vmem:[%s4 + $0x60] sm:$0xff] %vm2562, %v2525
  %2576 = vst.msk [vmem:[%s4 + $0x68] sm:$0xff] %vm2562, %v2526
  %2577 = vst.msk [vmem:[%s4 + $0x70] sm:$0xff] %vm2562, %v2527
  %2578 = vst.msk [vmem:[%s4 + $0x78] sm:$0xff] %vm2562, %v2528
  %2579 = vst.msk [vmem:[%s4 + $0x80] sm:$0xff] %vm2562, %v2529
  %2580 = vst.msk [vmem:[%s4 + $0x88] sm:$0xff] %vm2562, %v2530
  %2581 = vst.msk [vmem:[%s4 + $0x90] sm:$0xff] %vm2562, %v2531
  %2582 = vst.msk [vmem:[%s4 + $0x98] sm:$0xff] %vm2562, %v2532
  %2583 = vst.msk [vmem:[%s4 + $0xa0] sm:$0xff] %vm2562, %v2533
  %2584 = vst.msk [vmem:[%s4 + $0xa8] sm:$0xff] %vm2562, %v2534
  %2585 = vst.msk [vmem:[%s4 + $0xb0] sm:$0xff] %vm2562, %v2535
  %2586 = vst.msk [vmem:[%s4 + $0xb8] sm:$0xff] %vm2562, %v2536
  %2587 = vst.msk [vmem:[%s4 + $0xc0] sm:$0xff] %vm2562, %v2537
  %2588 = vst.msk [vmem:[%s4 + $0xc8] sm:$0xff] %vm2562, %v2538
  %2589 = vst.msk [vmem:[%s4 + $0xd0] sm:$0xff] %vm2562, %v2539
  %2590 = vst.msk [vmem:[%s4 + $0xd8] sm:$0xff] %vm2562, %v2540
  %2591 = vst.msk [vmem:[%s4 + $0xe0] sm:$0xff] %vm2562, %v2541
  %2592 = vst.msk [vmem:[%s4 + $0xe8] sm:$0xff] %vm2562, %v2542
  %2593 = vst.msk [vmem:[%s4 + $0xf0] sm:$0xff] %vm2562, %v2543
  %2594 = vst.msk [vmem:[%s4 + $0xf8] sm:$0xff] %vm2562, %v2544
  %2595 = vst.msk [vmem:[%s4 + $0x100] sm:$0xff] %vm2562, %v2545
  %2596 = vst.msk [vmem:[%s4 + $0x108] sm:$0xff] %vm2562, %v2546
  %2597 = vst.msk [vmem:[%s4 + $0x110] sm:$0xff] %vm2562, %v2547
  %2598 = vst.msk [vmem:[%s4 + $0x118] sm:$0xff] %vm2562, %v2548
  %2599 = vst.msk [vmem:[%s4 + $0x120] sm:$0xff] %vm2562, %v2549
  %2600 = vst.msk [vmem:[%s4 + $0x128] sm:$0xff] %vm2562, %v2550
  %2601 = vst.msk [vmem:[%s4 + $0x130] sm:$0xff] %vm2562, %v2551
  %2602 = vst.msk [vmem:[%s4 + $0x138] sm:$0xff] %vm2562, %v2552
  %2603 = vst.msk [vmem:[%s4 + $0x140] sm:$0xff] %vm2562, %v2553
  %2604 = vst.msk [vmem:[%s4 + $0x148] sm:$0xff] %vm2562, %v2554
  %2605 = vst.msk [vmem:[%s4 + $0x150] sm:$0xff] %vm2562, %v2555
  %2606 = vst.msk [vmem:[%s4 + $0x158] sm:$0xff] %vm2562, %v2556
  %2607 = vst.msk [vmem:[%s4 + $0x160] sm:$0xff] %vm2562, %v2557
  %2608 = vst.msk [vmem:[%s4 + $0x168] sm:$0xff] %vm2562, %v2558
  %2609 = vst.msk [vmem:[%s4 + $0x170] sm:$0xff] %vm2562, %v2559
  %2610 = vst.msk [vmem:[%s4 + $0x178] sm:$0xff] %vm2562, %v2560
  %2611 = vst.msk [vmem:[%s4 + $0x180] sm:$0xff] %vm2562, %v2561
  // Predicated region
  $region18: #{cnn_forward.3} parent=0 // pred_check
    _
  $region19: #{cnn_forward.3} parent=0 // pred_check_branch
    %2613 = sbr.rel (0) target = $region21
  $region20: #{cnn_forward.3} parent=0 // pred_region
    _
  $region21: #{cnn_forward.3} parent=0 // pred_fallthru
    _
  // Predicated region
  $region22: #{cnn_forward.3} parent=0 // pred_check
    _
  $region23: #{cnn_forward.3} parent=0 // pred_check_branch
    %2615 = sbr.rel (0) target = $region25
  $region24: #{cnn_forward.3} parent=0 // pred_region
    _
  $region25: #{cnn_forward.3} parent=0 // pred_fallthru
    _

// kernel: cnn_forward.4
$region0: #{cnn_forward.4}
  #allocation0 [shape = 'u32[]', space=smem, size = 0x4, offset = 0x4, fixed_abs, tag = 'smem constant byte address 0x4 - core index']
  #allocation1 [shape = 'u32[144,128]{1,0:T(1,128)}', space=vmem, size = 0x12000, scoped, tag = 'internal scratch']
  %s0 = inlined_call_operand.vmem [shape: bf16[4,98,400], index: 0, kind: input, shape index: {}]
  %s1 = inlined_call_operand.vmem [shape: bf16[400,32], index: 1, kind: input, shape index: {}]
  %s2 = inlined_call_operand.vmem [shape: f32[1,32], index: 2, kind: input, shape index: {}]
  %s3 = inlined_call_operand.vmem [shape: f32[1,32], index: 3, kind: input, shape index: {}]
  %s4 = inlined_call_operand.vmem [shape: f32[98,32], index: 4, kind: output, shape index: {}]
  %s5 = sld [smem:[#allocation0]]
  $region26: #{cnn_forward.4} parent=0
    _
  %s7 = ssub.s32 1, %s5
  %s8 = scalar_select 0, %s7, %s5
  // Predicated region
  $region2: #{cnn_forward.4} parent=0 // pred_check
    _
  $region3: #{cnn_forward.4} parent=0 // pred_check_branch
    %10 = sbr.rel (0) target = $region5
  $region4: #{cnn_forward.4} parent=0 // pred_region
    _
  $region5: #{cnn_forward.4} parent=0 // pred_fallthru
    _
  // Predicated region
  $region6: #{cnn_forward.4} parent=0 // pred_check
    _
  $region7: #{cnn_forward.4} parent=0 // pred_check_branch
    %12 = sbr.rel (0) target = $region9
  $region8: #{cnn_forward.4} parent=0 // pred_region
    _
  $region9: #{cnn_forward.4} parent=0 // pred_fallthru
    _
  // Predicated region
  $region10: #{cnn_forward.4} parent=0 // pred_check
    _
  $region11: #{cnn_forward.4} parent=0 // pred_check_branch
    %14 = sbr.rel (0) target = $region13
  $region12: #{cnn_forward.4} parent=0 // pred_region
    _
  $region13: #{cnn_forward.4} parent=0 // pred_fallthru
    _
  // Predicated region
  $region14: #{cnn_forward.4} parent=0 // pred_check
    _
  $region15: #{cnn_forward.4} parent=0 // pred_check_branch
    %16 = sbr.rel (0) target = $region17
  $region16: #{cnn_forward.4} parent=0 // pred_region
    _
  $region17: #{cnn_forward.4} parent=0 // pred_fallthru
    _
  %v18 = vld [vmem:[%s1] sm:$0xf]
  %v19 = vld [vmem:[%s1 + $0x4] sm:$0xf]
  %v20 = vld [vmem:[%s1 + $0x8] sm:$0xf]
  %v21 = vld [vmem:[%s1 + $0xc] sm:$0xf]
  %v22 = vld [vmem:[%s1 + $0x10] sm:$0xf]
  %v23 = vld [vmem:[%s1 + $0x14] sm:$0xf]
  %v24 = vld [vmem:[%s1 + $0x18] sm:$0xf]
  %v25 = vld [vmem:[%s1 + $0x1c] sm:$0xf]
  %v26 = vld [vmem:[%s1 + $0x20] sm:$0xf]
  %v27 = vld [vmem:[%s1 + $0x24] sm:$0xf]
  %v28 = vld [vmem:[%s1 + $0x28] sm:$0xf]
  %v29 = vld [vmem:[%s1 + $0x2c] sm:$0xf]
  %v30 = vld [vmem:[%s1 + $0x30] sm:$0xf]
  %v31 = vld [vmem:[%s1 + $0x34] sm:$0xf]
  %v32 = vld [vmem:[%s1 + $0x38] sm:$0xf]
  %v33 = vld [vmem:[%s1 + $0x3c] sm:$0xf]
  %v34 = vld [vmem:[%s1 + $0x40] sm:$0xf]
  %v35 = vld [vmem:[%s1 + $0x44] sm:$0xf]
  %v36 = vld [vmem:[%s1 + $0x48] sm:$0xf]
  %v37 = vld [vmem:[%s1 + $0x4c] sm:$0xf]
  %v38 = vld [vmem:[%s1 + $0x50] sm:$0xf]
  %v39 = vld [vmem:[%s1 + $0x54] sm:$0xf]
  %v40 = vld [vmem:[%s1 + $0x58] sm:$0xf]
  %v41 = vld [vmem:[%s1 + $0x5c] sm:$0xf]
  %v42 = vld [vmem:[%s1 + $0x60] sm:$0xf]
  %v43 = vld [vmem:[%s1 + $0x64] sm:$0xf]
  %v44 = vld [vmem:[%s1 + $0x68] sm:$0xf]
  %v45 = vld [vmem:[%s1 + $0x6c] sm:$0xf]
  %v46 = vld [vmem:[%s1 + $0x70] sm:$0xf]
  %v47 = vld [vmem:[%s1 + $0x74] sm:$0xf]
  %v48 = vld [vmem:[%s1 + $0x78] sm:$0xf]
  %v49 = vld [vmem:[%s1 + $0x7c] sm:$0xf]
  %v50 = vld [vmem:[%s1 + $0x80] sm:$0xf]
  %v51 = vld [vmem:[%s1 + $0x84] sm:$0xf]
  %v52 = vld [vmem:[%s1 + $0x88] sm:$0xf]
  %v53 = vld [vmem:[%s1 + $0x8c] sm:$0xf]
  %v54 = vld [vmem:[%s1 + $0x90] sm:$0xf]
  %v55 = vld [vmem:[%s1 + $0x94] sm:$0xf]
  %v56 = vld [vmem:[%s1 + $0x98] sm:$0xf]
  %v57 = vld [vmem:[%s1 + $0x9c] sm:$0xf]
  %v58 = vld [vmem:[%s1 + $0xa0] sm:$0xf]
  %v59 = vld [vmem:[%s1 + $0xa4] sm:$0xf]
  %v60 = vld [vmem:[%s1 + $0xa8] sm:$0xf]
  %v61 = vld [vmem:[%s1 + $0xac] sm:$0xf]
  %v62 = vld [vmem:[%s1 + $0xb0] sm:$0xf]
  %v63 = vld [vmem:[%s1 + $0xb4] sm:$0xf]
  %v64 = vld [vmem:[%s1 + $0xb8] sm:$0xf]
  %v65 = vld [vmem:[%s1 + $0xbc] sm:$0xf]
  %v66 = vld [vmem:[%s1 + $0xc0] sm:$0xf]
  %v67 = vld [vmem:[%s1 + $0xc4] sm:$0xf]
  %v68 = vld [vmem:[%s2] sm:$0x1]
  %v69 = vld [vmem:[%s3] sm:$0x1]
  %v70 = vld [vmem:[%s0] sm:$0xff]
  %v71 = vld [vmem:[%s0 + $0x8] sm:$0xff]
  %v72 = vld [vmem:[%s0 + $0x10] sm:$0xff]
  %v73 = vld [vmem:[%s0 + $0x18] sm:$0xff]
  %v74 = vld [vmem:[%s0 + $0x20] sm:$0xff]
  %v75 = vld [vmem:[%s0 + $0x28] sm:$0xff]
  %v76 = vld [vmem:[%s0 + $0x30] sm:$0xff]
  %v77 = vld [vmem:[%s0 + $0x38] sm:$0xff]
  %v78 = vld [vmem:[%s0 + $0x40] sm:$0xff]
  %v79 = vld [vmem:[%s0 + $0x48] sm:$0xff]
  %v80 = vld [vmem:[%s0 + $0x50] sm:$0xff]
  %v81 = vld [vmem:[%s0 + $0x58] sm:$0xff]
  %v82 = vld [vmem:[%s0 + $0x60] sm:$0xff]
  %v83 = vld [vmem:[%s0 + $0x68] sm:$0xff]
  %v84 = vld [vmem:[%s0 + $0x70] sm:$0xff]
  %v85 = vld [vmem:[%s0 + $0x78] sm:$0xff]
  %v86 = vld [vmem:[%s0 + $0x80] sm:$0xff]
  %v87 = vld [vmem:[%s0 + $0x88] sm:$0xff]
  %v88 = vld [vmem:[%s0 + $0x90] sm:$0xff]
  %v89 = vld [vmem:[%s0 + $0x98] sm:$0xff]
  %v90 = vld [vmem:[%s0 + $0xa0] sm:$0xff]
  %v91 = vld [vmem:[%s0 + $0xa8] sm:$0xff]
  %v92 = vld [vmem:[%s0 + $0xb0] sm:$0xff]
  %v93 = vld [vmem:[%s0 + $0xb8] sm:$0xff]
  %v94 = vld [vmem:[%s0 + $0xc0] sm:$0x11]
  %v95 = vld [vmem:[%s0 + $0xc8] sm:$0x11]
  %v122 = vunpack.c.l.b16 %v70
  %v123 = vunpack.c.h.b16 %v70
  %v124 = vunpack.c.l.b16 %v71
  %v125 = vunpack.c.h.b16 %v71
  %v126 = vunpack.c.l.b16 %v72
  %v127 = vunpack.c.h.b16 %v72
  %v128 = vunpack.c.l.b16 %v73
  %v129 = vunpack.c.h.b16 %v73
  %v130 = vunpack.c.l.b16 %v74
  %v131 = vunpack.c.h.b16 %v74
  %v132 = vunpack.c.l.b16 %v75
  %v133 = vunpack.c.h.b16 %v75
  %v134 = vunpack.c.l.b16 %v76
  %v135 = vunpack.c.h.b16 %v76
  %v136 = vunpack.c.l.b16 %v77
  %v137 = vunpack.c.h.b16 %v77
  %v138 = vunpack.c.l.b16 %v78
  %v139 = vunpack.c.h.b16 %v78
  %v140 = vunpack.c.l.b16 %v79
  %v141 = vunpack.c.h.b16 %v79
  %v142 = vunpack.c.l.b16 %v80
  %v143 = vunpack.c.h.b16 %v80
  %v144 = vunpack.c.l.b16 %v81
  %v145 = vunpack.c.h.b16 %v81
  %v146 = vunpack.c.l.b16 %v82
  %v147 = vunpack.c.h.b16 %v82
  %v148 = vunpack.c.l.b16 %v83
  %v149 = vunpack.c.h.b16 %v83
  %v150 = vunpack.c.l.b16 %v84
  %v151 = vunpack.c.h.b16 %v84
  %v152 = vunpack.c.l.b16 %v85
  %v153 = vunpack.c.h.b16 %v85
  %v154 = vunpack.c.l.b16 %v86
  %v155 = vunpack.c.h.b16 %v86
  %v156 = vunpack.c.l.b16 %v87
  %v157 = vunpack.c.h.b16 %v87
  %v158 = vunpack.c.l.b16 %v88
  %v159 = vunpack.c.h.b16 %v88
  %v160 = vunpack.c.l.b16 %v89
  %v161 = vunpack.c.h.b16 %v89
  %v162 = vunpack.c.l.b16 %v90
  %v163 = vunpack.c.h.b16 %v90
  %v164 = vunpack.c.l.b16 %v91
  %v165 = vunpack.c.h.b16 %v91
  %v166 = vunpack.c.l.b16 %v92
  %v167 = vunpack.c.h.b16 %v92
  %v168 = vunpack.c.l.b16 %v93
  %v169 = vunpack.c.h.b16 %v93
  %v170 = vunpack.c.l.b16 %v94
  %v171 = vunpack.c.h.b16 %v94
  %v172 = vunpack.c.l.b16 %v95
  %v173 = vunpack.c.h.b16 %v95
  %v174 = vpack.c.b16 %v126, %v122
  %v175 = vpack.c.b16 %v127, %v123
  %v176 = vpack.c.b16 %v128, %v124
  %v177 = vpack.c.b16 %v129, %v125
  %v178 = vpack.c.b16 %v134, %v130
  %v179 = vpack.c.b16 %v135, %v131
  %v180 = vpack.c.b16 %v136, %v132
  %v181 = vpack.c.b16 %v137, %v133
  %v182 = vpack.c.b16 %v142, %v138
  %v183 = vpack.c.b16 %v143, %v139
  %v184 = vpack.c.b16 %v144, %v140
  %v185 = vpack.c.b16 %v145, %v141
  %v186 = vpack.c.b16 %v150, %v146
  %v187 = vpack.c.b16 %v151, %v147
  %v188 = vpack.c.b16 %v152, %v148
  %v189 = vpack.c.b16 %v153, %v149
  %v190 = vpack.c.b16 %v158, %v154
  %v191 = vpack.c.b16 %v159, %v155
  %v192 = vpack.c.b16 %v160, %v156
  %v193 = vpack.c.b16 %v161, %v157
  %v194 = vpack.c.b16 %v166, %v162
  %v195 = vpack.c.b16 %v167, %v163
  %v196 = vpack.c.b16 %v168, %v164
  %v197 = vpack.c.b16 %v169, %v165
  %v198 = vpack.c.b16 %v170, %v170
  %v199 = vpack.c.b16 %v171, %v171
  %v200 = vpack.c.b16 %v172, %v172
  %v201 = vpack.c.b16 %v173, %v173
  %v273 = vunpack.c.l.b16 %v18
  %v274 = vunpack.c.l.b16 %v19
  %v275 = vunpack.c.l.b16 %v20
  %v276 = vunpack.c.l.b16 %v21
  %v277 = vunpack.c.l.b16 %v22
  %v278 = vunpack.c.l.b16 %v23
  %v279 = vunpack.c.l.b16 %v24
  %v280 = vunpack.c.l.b16 %v25
  %v281 = vunpack.c.l.b16 %v26
  %v282 = vunpack.c.l.b16 %v27
  %v283 = vunpack.c.l.b16 %v28
  %v284 = vunpack.c.l.b16 %v29
  %v285 = vunpack.c.l.b16 %v30
  %v286 = vunpack.c.l.b16 %v31
  %v287 = vunpack.c.l.b16 %v32
  %v288 = vunpack.c.l.b16 %v33
  %v289 = vunpack.c.l.b16 %v34
  %v290 = vunpack.c.l.b16 %v35
  %v291 = vunpack.c.l.b16 %v36
  %v292 = vunpack.c.l.b16 %v37
  %v293 = vunpack.c.l.b16 %v38
  %v294 = vunpack.c.l.b16 %v39
  %v295 = vunpack.c.l.b16 %v40
  %v296 = vunpack.c.l.b16 %v41
  %v297 = vunpack.c.l.b16 %v42
  %v298 = vunpack.c.l.b16 %v43
  %v299 = vunpack.c.l.b16 %v44
  %v300 = vunpack.c.l.b16 %v45
  %v301 = vunpack.c.l.b16 %v46
  %v302 = vunpack.c.l.b16 %v47
  %v303 = vunpack.c.l.b16 %v48
  %v304 = vunpack.c.l.b16 %v49
  %v305 = vunpack.c.l.b16 %v50
  %v306 = vunpack.c.l.b16 %v51
  %v307 = vunpack.c.l.b16 %v52
  %v308 = vunpack.c.l.b16 %v53
  %v309 = vunpack.c.l.b16 %v54
  %v310 = vunpack.c.l.b16 %v55
  %v311 = vunpack.c.l.b16 %v56
  %v312 = vunpack.c.l.b16 %v57
  %v313 = vunpack.c.l.b16 %v58
  %v314 = vunpack.c.l.b16 %v59
  %v315 = vunpack.c.l.b16 %v60
  %v316 = vunpack.c.l.b16 %v61
  %v317 = vunpack.c.l.b16 %v62
  %v318 = vunpack.c.l.b16 %v63
  %v319 = vunpack.c.l.b16 %v64
  %v320 = vunpack.c.l.b16 %v65
  %v321 = vunpack.c.l.b16 %v66
  %v322 = vunpack.c.l.b16 %v67
  %v323 = vpack.c.b16 %v274, %v273
  %v324 = vpack.c.b16 %v276, %v275
  %v325 = vpack.c.b16 %v278, %v277
  %v326 = vpack.c.b16 %v280, %v279
  %v327 = vpack.c.b16 %v282, %v281
  %v328 = vpack.c.b16 %v284, %v283
  %v329 = vpack.c.b16 %v286, %v285
  %v330 = vpack.c.b16 %v288, %v287
  %v331 = vpack.c.b16 %v290, %v289
  %v332 = vpack.c.b16 %v292, %v291
  %v333 = vpack.c.b16 %v294, %v293
  %v334 = vpack.c.b16 %v296, %v295
  %v335 = vpack.c.b16 %v298, %v297
  %v336 = vpack.c.b16 %v300, %v299
  %v337 = vpack.c.b16 %v302, %v301
  %v338 = vpack.c.b16 %v304, %v303
  %v339 = vpack.c.b16 %v306, %v305
  %v340 = vpack.c.b16 %v308, %v307
  %v341 = vpack.c.b16 %v310, %v309
  %v342 = vpack.c.b16 %v312, %v311
  %v343 = vpack.c.b16 %v314, %v313
  %v344 = vpack.c.b16 %v316, %v315
  %v345 = vpack.c.b16 %v318, %v317
  %v346 = vpack.c.b16 %v320, %v319
  %v347 = vpack.c.b16 %v322, %v321
  %vm373 = vcmask 130048
  %v375 = vsel %vm373, %v177, 0
  %v378 = vsel %vm373, %v181, 0
  %v381 = vsel %vm373, %v185, 0
  %v384 = vsel %vm373, %v189, 0
  %v387 = vsel %vm373, %v193, 0
  %v390 = vsel %vm373, %v197, 0
  %v393 = vsel %vm373, %v201, 0
  %395 = vmatprep.subr.bf16.mxu0 0
  %396 = vmatpush1.bf16.msra.mxu0 %v323
  %397 = vmatprep.subr.bf16.mxu0 0
  %398 = vmatpush1.bf16.msra.mxu0 %v324
  %399 = vmatprep.subr.bf16.mxu0 0
  %400 = vmatpush1.bf16.msra.mxu0 %v325
  %401 = vmatprep.subr.bf16.mxu0 0
  %402 = vmatpush1.bf16.msra.mxu0 %v326
  %403 = vmatprep.subr.bf16.mxu0 0
  %404 = vmatpush1.bf16.msra.mxu0 %v327
  %405 = vmatprep.subr.bf16.mxu0 0
  %406 = vmatpush1.bf16.msra.mxu0 %v328
  %407 = vmatprep.subr.bf16.mxu0 0
  %408 = vmatpush1.bf16.msra.mxu0 %v329
  %409 = vmatprep.subr.bf16.mxu0 0
  %410 = vmatpush1.bf16.msra.mxu0 %v330
  %411 = vmatprep.subr.bf16.mxu0 0
  %412 = vmatpush1.bf16.msra.mxu0 %v331
  %413 = vmatprep.subr.bf16.mxu0 0
  %414 = vmatpush1.bf16.msra.mxu0 %v332
  %415 = vmatprep.subr.bf16.mxu0 0
  %416 = vmatpush1.bf16.msra.mxu0 %v333
  %417 = vmatprep.subr.bf16.mxu0 0
  %418 = vmatpush1.bf16.msra.mxu0 %v334
  %419 = vmatprep.subr.bf16.mxu0 0
  %420 = vmatpush1.bf16.msra.mxu0 %v335
  %421 = vmatprep.subr.bf16.mxu0 0
  %422 = vmatpush1.bf16.msra.mxu0 %v336
  %423 = vmatprep.subr.bf16.mxu0 0
  %424 = vmatpush1.bf16.msra.mxu0 %v337
  %425 = vmatprep.subr.bf16.mxu0 0
  %426 = vmatpush1.bf16.msra.mxu0 %v338
  %427 = vmatprep.mubr.bf16.mxu0 %v175
  %428 = vmatmul.mubr.bf16.gmra.mrb[0].mxu0 %v174
  %v429 = vpop.f32.mrb[0].mxu0
  %v430 = vadd.f32 0.0, %v429
  %v431 = vpop.f32.mrb[0].mxu0
  %v432 = vpop.f32.mrb[0].mxu0
  %v433 = vadd.f32 0.0, %v432
  %v434 = vpop.f32.mrb[0].mxu0
  %435 = vmatprep.mubr.bf16.mxu0 %v179
  %436 = vmatmul.mubr.bf16.gmra.mrb[0].mxu0 %v178
  %v437 = vpop.f32.mrb[0].mxu0
  %v438 = vadd.f32 0.0, %v437
  %v439 = vpop.f32.mrb[0].mxu0
  %v440 = vpop.f32.mrb[0].mxu0
  %v441 = vadd.f32 0.0, %v440
  %v442 = vpop.f32.mrb[0].mxu0
  %443 = vmatprep.mubr.bf16.mxu0 %v183
  %444 = vmatmul.mubr.bf16.gmra.mrb[0].mxu0 %v182
  %v445 = vpop.f32.mrb[0].mxu0
  %v446 = vadd.f32 0.0, %v445
  %v447 = vpop.f32.mrb[0].mxu0
  %v448 = vpop.f32.mrb[0].mxu0
  %v449 = vadd.f32 0.0, %v448
  %v450 = vpop.f32.mrb[0].mxu0
  %451 = vmatprep.mubr.bf16.mxu0 %v187
  %452 = vmatmul.mubr.bf16.gmra.mrb[0].mxu0 %v186
  %v453 = vpop.f32.mrb[0].mxu0
  %v454 = vadd.f32 0.0, %v453
  %v455 = vpop.f32.mrb[0].mxu0
  %v456 = vpop.f32.mrb[0].mxu0
  %v457 = vadd.f32 0.0, %v456
  %v458 = vpop.f32.mrb[0].mxu0
  %459 = vmatprep.mubr.bf16.mxu0 %v191
  %460 = vmatmul.mubr.bf16.gmra.mrb[0].mxu0 %v190
  %v461 = vpop.f32.mrb[0].mxu0
  %v462 = vadd.f32 0.0, %v461
  %v463 = vpop.f32.mrb[0].mxu0
  %v464 = vpop.f32.mrb[0].mxu0
  %v465 = vadd.f32 0.0, %v464
  %v466 = vpop.f32.mrb[0].mxu0
  %467 = vmatprep.mubr.bf16.mxu0 %v195
  %468 = vmatmul.mubr.bf16.gmra.mrb[0].mxu0 %v194
  %v469 = vpop.f32.mrb[0].mxu0
  %v470 = vadd.f32 0.0, %v469
  %v471 = vpop.f32.mrb[0].mxu0
  %v472 = vpop.f32.mrb[0].mxu0
  %v473 = vadd.f32 0.0, %v472
  %v474 = vpop.f32.mrb[0].mxu0
  %475 = vmatprep.mubr.bf16.mxu0 %v199
  %476 = vmatmul.mubr.bf16.gmra.mrb[0].mxu0 %v198
  %v477 = vpop.f32.mrb[0].mxu0
  %v478 = vadd.f32 0.0, %v477
  %v479 = vpop.f32.mrb[0].mxu0
  %v480 = vpop.f32.mrb[0].mxu0
  %v481 = vpop.f32.mrb[0].mxu0
  %482 = vdwg.mxu0
  %483 = vmatprep.subr.bf16.mxu0 0
  %484 = vmatpush1.bf16.msra.mxu0 %v339
  %485 = vmatprep.subr.bf16.mxu0 0
  %486 = vmatpush1.bf16.msra.mxu0 %v340
  %487 = vmatprep.subr.bf16.mxu0 0
  %488 = vmatpush1.bf16.msra.mxu0 %v341
  %489 = vmatprep.subr.bf16.mxu0 0
  %490 = vmatpush1.bf16.msra.mxu0 %v342
  %491 = vmatprep.subr.bf16.mxu0 0
  %492 = vmatpush1.bf16.msra.mxu0 %v343
  %493 = vmatprep.subr.bf16.mxu0 0
  %494 = vmatpush1.bf16.msra.mxu0 %v344
  %495 = vmatprep.subr.bf16.mxu0 0
  %496 = vmatpush1.bf16.msra.mxu0 %v345
  %497 = vmatprep.subr.bf16.mxu0 0
  %498 = vmatpush1.bf16.msra.mxu0 %v346
  %499 = vmatprep.subr.bf16.mxu0 0
  %500 = vmatpush1.bf16.msra.mxu0 %v347
  %501 = vmatprep.subr.bf16.mxu0 0
  %502 = vmatpush1.bf16.msra.mxu0 0
  %503 = vmatprep.subr.bf16.mxu0 0
  %504 = vmatpush1.bf16.msra.mxu0 0
  %505 = vmatprep.subr.bf16.mxu0 0
  %506 = vmatpush1.bf16.msra.mxu0 0
  %507 = vmatprep.subr.bf16.mxu0 0
  %508 = vmatpush1.bf16.msra.mxu0 0
  %509 = vmatprep.subr.bf16.mxu0 0
  %510 = vmatpush1.bf16.msra.mxu0 0
  %511 = vmatprep.subr.bf16.mxu0 0
  %512 = vmatpush1.bf16.msra.mxu0 0
  %513 = vmatprep.subr.bf16.mxu0 0
  %514 = vmatpush1.bf16.msra.mxu0 0
  %515 = vmatprep.mubr.bf16.mxu0 %v375
  %516 = vmatmul.mubr.bf16.gmra.mrb[0].mxu0 %v176
  %v517 = vpop.f32.mrb[0].mxu0
  %v518 = vadd.f32 %v430, %v517
  %v519 = vpop.f32.mrb[0].mxu0
  %v520 = vpop.f32.mrb[0].mxu0
  %v521 = vadd.f32 %v433, %v520
  %v522 = vpop.f32.mrb[0].mxu0
  %523 = vmatprep.mubr.bf16.mxu0 %v378
  %524 = vmatmul.mubr.bf16.gmra.mrb[0].mxu0 %v180
  %v525 = vpop.f32.mrb[0].mxu0
  %v526 = vadd.f32 %v438, %v525
  %v527 = vpop.f32.mrb[0].mxu0
  %v528 = vpop.f32.mrb[0].mxu0
  %v529 = vadd.f32 %v441, %v528
  %v530 = vpop.f32.mrb[0].mxu0
  %531 = vmatprep.mubr.bf16.mxu0 %v381
  %532 = vmatmul.mubr.bf16.gmra.mrb[0].mxu0 %v184
  %v533 = vpop.f32.mrb[0].mxu0
  %v534 = vadd.f32 %v446, %v533
  %v535 = vpop.f32.mrb[0].mxu0
  %v536 = vpop.f32.mrb[0].mxu0
  %v537 = vadd.f32 %v449, %v536
  %v538 = vpop.f32.mrb[0].mxu0
  %539 = vmatprep.mubr.bf16.mxu0 %v384
  %540 = vmatmul.mubr.bf16.gmra.mrb[0].mxu0 %v188
  %v541 = vpop.f32.mrb[0].mxu0
  %v542 = vadd.f32 %v454, %v541
  %v543 = vpop.f32.mrb[0].mxu0
  %v544 = vpop.f32.mrb[0].mxu0
  %v545 = vadd.f32 %v457, %v544
  %v546 = vpop.f32.mrb[0].mxu0
  %547 = vmatprep.mubr.bf16.mxu0 %v387
  %548 = vmatmul.mubr.bf16.gmra.mrb[0].mxu0 %v192
  %v549 = vpop.f32.mrb[0].mxu0
  %v550 = vadd.f32 %v462, %v549
  %v551 = vpop.f32.mrb[0].mxu0
  %v552 = vpop.f32.mrb[0].mxu0
  %v553 = vadd.f32 %v465, %v552
  %v554 = vpop.f32.mrb[0].mxu0
  %555 = vmatprep.mubr.bf16.mxu0 %v390
  %556 = vmatmul.mubr.bf16.gmra.mrb[0].mxu0 %v196
  %v557 = vpop.f32.mrb[0].mxu0
  %v558 = vadd.f32 %v470, %v557
  %v559 = vpop.f32.mrb[0].mxu0
  %v560 = vpop.f32.mrb[0].mxu0
  %v561 = vadd.f32 %v473, %v560
  %v562 = vpop.f32.mrb[0].mxu0
  %563 = vmatprep.mubr.bf16.mxu0 %v393
  %564 = vmatmul.mubr.bf16.gmra.mrb[0].mxu0 %v200
  %v565 = vpop.f32.mrb[0].mxu0
  %v566 = vadd.f32 %v478, %v565
  %v567 = vpop.f32.mrb[0].mxu0
  %v568 = vpop.f32.mrb[0].mxu0
  %v569 = vpop.f32.mrb[0].mxu0
  %570 = vdwg.mxu0
  %v572 = vlaneseq
  %v573 = vshrl.u32 %v572, 7
  %v574 = vsub.s32 0, %v573
  %v575 = vrot.slane %v68, %v574
  %v577 = vmul.f32 %v518, %v575
  %v578 = vmul.f32 %v521, %v575
  %v579 = vmul.f32 %v526, %v575
  %v580 = vmul.f32 %v529, %v575
  %v581 = vmul.f32 %v534, %v575
  %v582 = vmul.f32 %v537, %v575
  %v583 = vmul.f32 %v542, %v575
  %v584 = vmul.f32 %v545, %v575
  %v585 = vmul.f32 %v550, %v575
  %v586 = vmul.f32 %v553, %v575
  %v587 = vmul.f32 %v558, %v575
  %v588 = vmul.f32 %v561, %v575
  %v589 = vmul.f32 %v566, %v575
  %v591 = vlaneseq
  %v592 = vshrl.u32 %v591, 7
  %v593 = vsub.s32 0, %v592
  %v594 = vrot.slane %v69, %v593
  %v596 = vadd.f32 %v577, %v594
  %v597 = vadd.f32 %v578, %v594
  %v598 = vadd.f32 %v579, %v594
  %v599 = vadd.f32 %v580, %v594
  %v600 = vadd.f32 %v581, %v594
  %v601 = vadd.f32 %v582, %v594
  %v602 = vadd.f32 %v583, %v594
  %v603 = vadd.f32 %v584, %v594
  %v604 = vadd.f32 %v585, %v594
  %v605 = vadd.f32 %v586, %v594
  %v606 = vadd.f32 %v587, %v594
  %v607 = vadd.f32 %v588, %v594
  %v608 = vadd.f32 %v589, %v594
  %s609 = scalar_lea.vmem %s0, 208
  %v610 = vld [vmem:[%s609] sm:$0xff]
  %v611 = vld [vmem:[%s609 + $0x8] sm:$0xff]
  %v612 = vld [vmem:[%s609 + $0x10] sm:$0xff]
  %v613 = vld [vmem:[%s609 + $0x18] sm:$0xff]
  %v614 = vld [vmem:[%s609 + $0x20] sm:$0xff]
  %v615 = vld [vmem:[%s609 + $0x28] sm:$0xff]
  %v616 = vld [vmem:[%s609 + $0x30] sm:$0xff]
  %v617 = vld [vmem:[%s609 + $0x38] sm:$0xff]
  %v618 = vld [vmem:[%s609 + $0x40] sm:$0xff]
  %v619 = vld [vmem:[%s609 + $0x48] sm:$0xff]
  %v620 = vld [vmem:[%s609 + $0x50] sm:$0xff]
  %v621 = vld [vmem:[%s609 + $0x58] sm:$0xff]
  %v622 = vld [vmem:[%s609 + $0x60] sm:$0xff]
  %v623 = vld [vmem:[%s609 + $0x68] sm:$0xff]
  %v624 = vld [vmem:[%s609 + $0x70] sm:$0xff]
  %v625 = vld [vmem:[%s609 + $0x78] sm:$0xff]
  %v626 = vld [vmem:[%s609 + $0x80] sm:$0xff]
  %v627 = vld [vmem:[%s609 + $0x88] sm:$0xff]
  %v628 = vld [vmem:[%s609 + $0x90] sm:$0xff]
  %v629 = vld [vmem:[%s609 + $0x98] sm:$0xff]
  %v630 = vld [vmem:[%s609 + $0xa0] sm:$0xff]
  %v631 = vld [vmem:[%s609 + $0xa8] sm:$0xff]
  %v632 = vld [vmem:[%s609 + $0xb0] sm:$0xff]
  %v633 = vld [vmem:[%s609 + $0xb8] sm:$0xff]
  %v634 = vld [vmem:[%s609 + $0xc0] sm:$0x11]
  %v635 = vld [vmem:[%s609 + $0xc8] sm:$0x11]
  %v662 = vunpack.c.l.b16 %v610
  %v663 = vunpack.c.h.b16 %v610
  %v664 = vunpack.c.l.b16 %v611
  %v665 = vunpack.c.h.b16 %v611
  %v666 = vunpack.c.l.b16 %v612
  %v667 = vunpack.c.h.b16 %v612
  %v668 = vunpack.c.l.b16 %v613
  %v669 = vunpack.c.h.b16 %v613
  %v670 = vunpack.c.l.b16 %v614
  %v671 = vunpack.c.h.b16 %v614
  %v672 = vunpack.c.l.b16 %v615
  %v673 = vunpack.c.h.b16 %v615
  %v674 = vunpack.c.l.b16 %v616
  %v675 = vunpack.c.h.b16 %v616
  %v676 = vunpack.c.l.b16 %v617
  %v677 = vunpack.c.h.b16 %v617
  %v678 = vunpack.c.l.b16 %v618
  %v679 = vunpack.c.h.b16 %v618
  %v680 = vunpack.c.l.b16 %v619
  %v681 = vunpack.c.h.b16 %v619
  %v682 = vunpack.c.l.b16 %v620
  %v683 = vunpack.c.h.b16 %v620
  %v684 = vunpack.c.l.b16 %v621
  %v685 = vunpack.c.h.b16 %v621
  %v686 = vunpack.c.l.b16 %v622
  %v687 = vunpack.c.h.b16 %v622
  %v688 = vunpack.c.l.b16 %v623
  %v689 = vunpack.c.h.b16 %v623
  %v690 = vunpack.c.l.b16 %v624
  %v691 = vunpack.c.h.b16 %v624
  %v692 = vunpack.c.l.b16 %v625
  %v693 = vunpack.c.h.b16 %v625
  %v694 = vunpack.c.l.b16 %v626
  %v695 = vunpack.c.h.b16 %v626
  %v696 = vunpack.c.l.b16 %v627
  %v697 = vunpack.c.h.b16 %v627
  %v698 = vunpack.c.l.b16 %v628
  %v699 = vunpack.c.h.b16 %v628
  %v700 = vunpack.c.l.b16 %v629
  %v701 = vunpack.c.h.b16 %v629
  %v702 = vunpack.c.l.b16 %v630
  %v703 = vunpack.c.h.b16 %v630
  %v704 = vunpack.c.l.b16 %v631
  %v705 = vunpack.c.h.b16 %v631
  %v706 = vunpack.c.l.b16 %v632
  %v707 = vunpack.c.h.b16 %v632
  %v708 = vunpack.c.l.b16 %v633
  %v709 = vunpack.c.h.b16 %v633
  %v710 = vunpack.c.l.b16 %v634
  %v711 = vunpack.c.h.b16 %v634
  %v712 = vunpack.c.l.b16 %v635
  %v713 = vunpack.c.h.b16 %v635
  %v714 = vpack.c.b16 %v666, %v662
  %v715 = vpack.c.b16 %v667, %v663
  %v716 = vpack.c.b16 %v668, %v664
  %v717 = vpack.c.b16 %v669, %v665
  %v718 = vpack.c.b16 %v674, %v670
  %v719 = vpack.c.b16 %v675, %v671
  %v720 = vpack.c.b16 %v676, %v672
  %v721 = vpack.c.b16 %v677, %v673
  %v722 = vpack.c.b16 %v682, %v678
  %v723 = vpack.c.b16 %v683, %v679
  %v724 = vpack.c.b16 %v684, %v680
  %v725 = vpack.c.b16 %v685, %v681
  %v726 = vpack.c.b16 %v690, %v686
  %v727 = vpack.c.b16 %v691, %v687
  %v728 = vpack.c.b16 %v692, %v688
  %v729 = vpack.c.b16 %v693, %v689
  %v730 = vpack.c.b16 %v698, %v694
  %v731 = vpack.c.b16 %v699, %v695
  %v732 = vpack.c.b16 %v700, %v696
  %v733 = vpack.c.b16 %v701, %v697
  %v734 = vpack.c.b16 %v706, %v702
  %v735 = vpack.c.b16 %v707, %v703
  %v736 = vpack.c.b16 %v708, %v704
  %v737 = vpack.c.b16 %v709, %v705
  %v738 = vpack.c.b16 %v710, %v710
  %v739 = vpack.c.b16 %v711, %v711
  %v740 = vpack.c.b16 %v712, %v712
  %v741 = vpack.c.b16 %v713, %v713
  %v764 = vsel %vm373, %v717, 0
  %v767 = vsel %vm373, %v721, 0
  %v770 = vsel %vm373, %v725, 0
  %v773 = vsel %vm373, %v729, 0
  %v776 = vsel %vm373, %v733, 0
  %v779 = vsel %vm373, %v737, 0
  %v782 = vsel %vm373, %v741, 0
  %784 = vmatprep.subr.bf16.mxu0 0
  %785 = vmatpush1.bf16.msra.mxu0 %v323
  %786 = vmatprep.subr.bf16.mxu0 0
  %787 = vmatpush1.bf16.msra.mxu0 %v324
  %788 = vmatprep.subr.bf16.mxu0 0
  %789 = vmatpush1.bf16.msra.mxu0 %v325
  %790 = vmatprep.subr.bf16.mxu0 0
  %791 = vmatpush1.bf16.msra.mxu0 %v326
  %792 = vmatprep.subr.bf16.mxu0 0
  %793 = vmatpush1.bf16.msra.mxu0 %v327
  %794 = vmatprep.subr.bf16.mxu0 0
  %795 = vmatpush1.bf16.msra.mxu0 %v328
  %796 = vmatprep.subr.bf16.mxu0 0
  %797 = vmatpush1.bf16.msra.mxu0 %v329
  %798 = vmatprep.subr.bf16.mxu0 0
  %799 = vmatpush1.bf16.msra.mxu0 %v330
  %800 = vmatprep.subr.bf16.mxu0 0
  %801 = vmatpush1.bf16.msra.mxu0 %v331
  %802 = vmatprep.subr.bf16.mxu0 0
  %803 = vmatpush1.bf16.msra.mxu0 %v332
  %804 = vmatprep.subr.bf16.mxu0 0
  %805 = vmatpush1.bf16.msra.mxu0 %v333
  %806 = vmatprep.subr.bf16.mxu0 0
  %807 = vmatpush1.bf16.msra.mxu0 %v334
  %808 = vmatprep.subr.bf16.mxu0 0
  %809 = vmatpush1.bf16.msra.mxu0 %v335
  %810 = vmatprep.subr.bf16.mxu0 0
  %811 = vmatpush1.bf16.msra.mxu0 %v336
  %812 = vmatprep.subr.bf16.mxu0 0
  %813 = vmatpush1.bf16.msra.mxu0 %v337
  %814 = vmatprep.subr.bf16.mxu0 0
  %815 = vmatpush1.bf16.msra.mxu0 %v338
  %816 = vmatprep.mubr.bf16.mxu0 %v715
  %817 = vmatmul.mubr.bf16.gmra.mrb[0].mxu0 %v714
  %v818 = vpop.f32.mrb[0].mxu0
  %v819 = vadd.f32 0.0, %v818
  %v820 = vpop.f32.mrb[0].mxu0
  %v821 = vpop.f32.mrb[0].mxu0
  %v822 = vadd.f32 0.0, %v821
  %v823 = vpop.f32.mrb[0].mxu0
  %824 = vmatprep.mubr.bf16.mxu0 %v719
  %825 = vmatmul.mubr.bf16.gmra.mrb[0].mxu0 %v718
  %v826 = vpop.f32.mrb[0].mxu0
  %v827 = vadd.f32 0.0, %v826
  %v828 = vpop.f32.mrb[0].mxu0
  %v829 = vpop.f32.mrb[0].mxu0
  %v830 = vadd.f32 0.0, %v829
  %v831 = vpop.f32.mrb[0].mxu0
  %832 = vmatprep.mubr.bf16.mxu0 %v723
  %833 = vmatmul.mubr.bf16.gmra.mrb[0].mxu0 %v722
  %v834 = vpop.f32.mrb[0].mxu0
  %v835 = vadd.f32 0.0, %v834
  %v836 = vpop.f32.mrb[0].mxu0
  %v837 = vpop.f32.mrb[0].mxu0
  %v838 = vadd.f32 0.0, %v837
  %v839 = vpop.f32.mrb[0].mxu0
  %840 = vmatprep.mubr.bf16.mxu0 %v727
  %841 = vmatmul.mubr.bf16.gmra.mrb[0].mxu0 %v726
  %v842 = vpop.f32.mrb[0].mxu0
  %v843 = vadd.f32 0.0, %v842
  %v844 = vpop.f32.mrb[0].mxu0
  %v845 = vpop.f32.mrb[0].mxu0
  %v846 = vadd.f32 0.0, %v845
  %v847 = vpop.f32.mrb[0].mxu0
  %848 = vmatprep.mubr.bf16.mxu0 %v731
  %849 = vmatmul.mubr.bf16.gmra.mrb[0].mxu0 %v730
  %v850 = vpop.f32.mrb[0].mxu0
  %v851 = vadd.f32 0.0, %v850
  %v852 = vpop.f32.mrb[0].mxu0
  %v853 = vpop.f32.mrb[0].mxu0
  %v854 = vadd.f32 0.0, %v853
  %v855 = vpop.f32.mrb[0].mxu0
  %856 = vmatprep.mubr.bf16.mxu0 %v735
  %857 = vmatmul.mubr.bf16.gmra.mrb[0].mxu0 %v734
  %v858 = vpop.f32.mrb[0].mxu0
  %v859 = vadd.f32 0.0, %v858
  %v860 = vpop.f32.mrb[0].mxu0
  %v861 = vpop.f32.mrb[0].mxu0
  %v862 = vadd.f32 0.0, %v861
  %v863 = vpop.f32.mrb[0].mxu0
  %864 = vmatprep.mubr.bf16.mxu0 %v739
  %865 = vmatmul.mubr.bf16.gmra.mrb[0].mxu0 %v738
  %v866 = vpop.f32.mrb[0].mxu0
  %v867 = vadd.f32 0.0, %v866
  %v868 = vpop.f32.mrb[0].mxu0
  %v869 = vpop.f32.mrb[0].mxu0
  %v870 = vpop.f32.mrb[0].mxu0
  %871 = vdwg.mxu0
  %872 = vmatprep.subr.bf16.mxu0 0
  %873 = vmatpush1.bf16.msra.mxu0 %v339
  %874 = vmatprep.subr.bf16.mxu0 0
  %875 = vmatpush1.bf16.msra.mxu0 %v340
  %876 = vmatprep.subr.bf16.mxu0 0
  %877 = vmatpush1.bf16.msra.mxu0 %v341
  %878 = vmatprep.subr.bf16.mxu0 0
  %879 = vmatpush1.bf16.msra.mxu0 %v342
  %880 = vmatprep.subr.bf16.mxu0 0
  %881 = vmatpush1.bf16.msra.mxu0 %v343
  %882 = vmatprep.subr.bf16.mxu0 0
  %883 = vmatpush1.bf16.msra.mxu0 %v344
  %884 = vmatprep.subr.bf16.mxu0 0
  %885 = vmatpush1.bf16.msra.mxu0 %v345
  %886 = vmatprep.subr.bf16.mxu0 0
  %887 = vmatpush1.bf16.msra.mxu0 %v346
  %888 = vmatprep.subr.bf16.mxu0 0
  %889 = vmatpush1.bf16.msra.mxu0 %v347
  %890 = vmatprep.subr.bf16.mxu0 0
  %891 = vmatpush1.bf16.msra.mxu0 0
  %892 = vmatprep.subr.bf16.mxu0 0
  %893 = vmatpush1.bf16.msra.mxu0 0
  %894 = vmatprep.subr.bf16.mxu0 0
  %895 = vmatpush1.bf16.msra.mxu0 0
  %896 = vmatprep.subr.bf16.mxu0 0
  %897 = vmatpush1.bf16.msra.mxu0 0
  %898 = vmatprep.subr.bf16.mxu0 0
  %899 = vmatpush1.bf16.msra.mxu0 0
  %900 = vmatprep.subr.bf16.mxu0 0
  %901 = vmatpush1.bf16.msra.mxu0 0
  %902 = vmatprep.subr.bf16.mxu0 0
  %903 = vmatpush1.bf16.msra.mxu0 0
  %904 = vmatprep.mubr.bf16.mxu0 %v764
  %905 = vmatmul.mubr.bf16.gmra.mrb[0].mxu0 %v716
  %v906 = vpop.f32.mrb[0].mxu0
  %v907 = vadd.f32 %v819, %v906
  %v908 = vpop.f32.mrb[0].mxu0
  %v909 = vpop.f32.mrb[0].mxu0
  %v910 = vadd.f32 %v822, %v909
  %v911 = vpop.f32.mrb[0].mxu0
  %912 = vmatprep.mubr.bf16.mxu0 %v767
  %913 = vmatmul.mubr.bf16.gmra.mrb[0].mxu0 %v720
  %v914 = vpop.f32.mrb[0].mxu0
  %v915 = vadd.f32 %v827, %v914
  %v916 = vpop.f32.mrb[0].mxu0
  %v917 = vpop.f32.mrb[0].mxu0
  %v918 = vadd.f32 %v830, %v917
  %v919 = vpop.f32.mrb[0].mxu0
  %920 = vmatprep.mubr.bf16.mxu0 %v770
  %921 = vmatmul.mubr.bf16.gmra.mrb[0].mxu0 %v724
  %v922 = vpop.f32.mrb[0].mxu0
  %v923 = vadd.f32 %v835, %v922
  %v924 = vpop.f32.mrb[0].mxu0
  %v925 = vpop.f32.mrb[0].mxu0
  %v926 = vadd.f32 %v838, %v925
  %v927 = vpop.f32.mrb[0].mxu0
  %928 = vmatprep.mubr.bf16.mxu0 %v773
  %929 = vmatmul.mubr.bf16.gmra.mrb[0].mxu0 %v728
  %v930 = vpop.f32.mrb[0].mxu0
  %v931 = vadd.f32 %v843, %v930
  %v932 = vpop.f32.mrb[0].mxu0
  %v933 = vpop.f32.mrb[0].mxu0
  %v934 = vadd.f32 %v846, %v933
  %v935 = vpop.f32.mrb[0].mxu0
  %936 = vmatprep.mubr.bf16.mxu0 %v776
  %937 = vmatmul.mubr.bf16.gmra.mrb[0].mxu0 %v732
  %v938 = vpop.f32.mrb[0].mxu0
  %v939 = vadd.f32 %v851, %v938
  %v940 = vpop.f32.mrb[0].mxu0
  %v941 = vpop.f32.mrb[0].mxu0
  %v942 = vadd.f32 %v854, %v941
  %v943 = vpop.f32.mrb[0].mxu0
  %944 = vmatprep.mubr.bf16.mxu0 %v779
  %945 = vmatmul.mubr.bf16.gmra.mrb[0].mxu0 %v736
  %v946 = vpop.f32.mrb[0].mxu0
  %v947 = vadd.f32 %v859, %v946
  %v948 = vpop.f32.mrb[0].mxu0
  %v949 = vpop.f32.mrb[0].mxu0
  %v950 = vadd.f32 %v862, %v949
  %v951 = vpop.f32.mrb[0].mxu0
  %952 = vmatprep.mubr.bf16.mxu0 %v782
  %953 = vmatmul.mubr.bf16.gmra.mrb[0].mxu0 %v740
  %v954 = vpop.f32.mrb[0].mxu0
  %v955 = vadd.f32 %v867, %v954
  %v956 = vpop.f32.mrb[0].mxu0
  %v957 = vpop.f32.mrb[0].mxu0
  %v958 = vpop.f32.mrb[0].mxu0
  %959 = vdwg.mxu0
  %v960 = vmul.f32 %v907, %v575
  %v961 = vmul.f32 %v910, %v575
  %v962 = vmul.f32 %v915, %v575
  %v963 = vmul.f32 %v918, %v575
  %v964 = vmul.f32 %v923, %v575
  %v965 = vmul.f32 %v926, %v575
  %v966 = vmul.f32 %v931, %v575
  %v967 = vmul.f32 %v934, %v575
  %v968 = vmul.f32 %v939, %v575
  %v969 = vmul.f32 %v942, %v575
  %v970 = vmul.f32 %v947, %v575
  %v971 = vmul.f32 %v950, %v575
  %v972 = vmul.f32 %v955, %v575
  %v973 = vadd.f32 %v960, %v594
  %v974 = vadd.f32 %v961, %v594
  %v975 = vadd.f32 %v962, %v594
  %v976 = vadd.f32 %v963, %v594
  %v977 = vadd.f32 %v964, %v594
  %v978 = vadd.f32 %v965, %v594
  %v979 = vadd.f32 %v966, %v594
  %v980 = vadd.f32 %v967, %v594
  %v981 = vadd.f32 %v968, %v594
  %v982 = vadd.f32 %v969, %v594
  %v983 = vadd.f32 %v970, %v594
  %v984 = vadd.f32 %v971, %v594
  %v985 = vadd.f32 %v972, %v594
  %v986 = vmax.f32 %v596, %v973
  %v987 = vmax.f32 %v597, %v974
  %v988 = vmax.f32 %v598, %v975
  %v989 = vmax.f32 %v599, %v976
  %v990 = vmax.f32 %v600, %v977
  %v991 = vmax.f32 %v601, %v978
  %v992 = vmax.f32 %v602, %v979
  %v993 = vmax.f32 %v603, %v980
  %v994 = vmax.f32 %v604, %v981
  %v995 = vmax.f32 %v605, %v982
  %v996 = vmax.f32 %v606, %v983
  %v997 = vmax.f32 %v607, %v984
  %v998 = vmax.f32 %v608, %v985
  %s999 = scalar_lea.vmem %s0, 416
  %v1000 = vld [vmem:[%s999] sm:$0xff]
  %v1001 = vld [vmem:[%s999 + $0x8] sm:$0xff]
  %v1002 = vld [vmem:[%s999 + $0x10] sm:$0xff]
  %v1003 = vld [vmem:[%s999 + $0x18] sm:$0xff]
  %v1004 = vld [vmem:[%s999 + $0x20] sm:$0xff]
  %v1005 = vld [vmem:[%s999 + $0x28] sm:$0xff]
  %v1006 = vld [vmem:[%s999 + $0x30] sm:$0xff]
  %v1007 = vld [vmem:[%s999 + $0x38] sm:$0xff]
  %v1008 = vld [vmem:[%s999 + $0x40] sm:$0xff]
  %v1009 = vld [vmem:[%s999 + $0x48] sm:$0xff]
  %v1010 = vld [vmem:[%s999 + $0x50] sm:$0xff]
  %v1011 = vld [vmem:[%s999 + $0x58] sm:$0xff]
  %v1012 = vld [vmem:[%s999 + $0x60] sm:$0xff]
  %v1013 = vld [vmem:[%s999 + $0x68] sm:$0xff]
  %v1014 = vld [vmem:[%s999 + $0x70] sm:$0xff]
  %v1015 = vld [vmem:[%s999 + $0x78] sm:$0xff]
  %v1016 = vld [vmem:[%s999 + $0x80] sm:$0xff]
  %v1017 = vld [vmem:[%s999 + $0x88] sm:$0xff]
  %v1018 = vld [vmem:[%s999 + $0x90] sm:$0xff]
  %v1019 = vld [vmem:[%s999 + $0x98] sm:$0xff]
  %v1020 = vld [vmem:[%s999 + $0xa0] sm:$0xff]
  %v1021 = vld [vmem:[%s999 + $0xa8] sm:$0xff]
  %v1022 = vld [vmem:[%s999 + $0xb0] sm:$0xff]
  %v1023 = vld [vmem:[%s999 + $0xb8] sm:$0xff]
  %v1024 = vld [vmem:[%s999 + $0xc0] sm:$0x11]
  %v1025 = vld [vmem:[%s999 + $0xc8] sm:$0x11]
  %v1052 = vunpack.c.l.b16 %v1000
  %v1053 = vunpack.c.h.b16 %v1000
  %v1054 = vunpack.c.l.b16 %v1001
  %v1055 = vunpack.c.h.b16 %v1001
  %v1056 = vunpack.c.l.b16 %v1002
  %v1057 = vunpack.c.h.b16 %v1002
  %v1058 = vunpack.c.l.b16 %v1003
  %v1059 = vunpack.c.h.b16 %v1003
  %v1060 = vunpack.c.l.b16 %v1004
  %v1061 = vunpack.c.h.b16 %v1004
  %v1062 = vunpack.c.l.b16 %v1005
  %v1063 = vunpack.c.h.b16 %v1005
  %v1064 = vunpack.c.l.b16 %v1006
  %v1065 = vunpack.c.h.b16 %v1006
  %v1066 = vunpack.c.l.b16 %v1007
  %v1067 = vunpack.c.h.b16 %v1007
  %v1068 = vunpack.c.l.b16 %v1008
  %v1069 = vunpack.c.h.b16 %v1008
  %v1070 = vunpack.c.l.b16 %v1009
  %v1071 = vunpack.c.h.b16 %v1009
  %v1072 = vunpack.c.l.b16 %v1010
  %v1073 = vunpack.c.h.b16 %v1010
  %v1074 = vunpack.c.l.b16 %v1011
  %v1075 = vunpack.c.h.b16 %v1011
  %v1076 = vunpack.c.l.b16 %v1012
  %v1077 = vunpack.c.h.b16 %v1012
  %v1078 = vunpack.c.l.b16 %v1013
  %v1079 = vunpack.c.h.b16 %v1013
  %v1080 = vunpack.c.l.b16 %v1014
  %v1081 = vunpack.c.h.b16 %v1014
  %v1082 = vunpack.c.l.b16 %v1015
  %v1083 = vunpack.c.h.b16 %v1015
  %v1084 = vunpack.c.l.b16 %v1016
  %v1085 = vunpack.c.h.b16 %v1016
  %v1086 = vunpack.c.l.b16 %v1017
  %v1087 = vunpack.c.h.b16 %v1017
  %v1088 = vunpack.c.l.b16 %v1018
  %v1089 = vunpack.c.h.b16 %v1018
  %v1090 = vunpack.c.l.b16 %v1019
  %v1091 = vunpack.c.h.b16 %v1019
  %v1092 = vunpack.c.l.b16 %v1020
  %v1093 = vunpack.c.h.b16 %v1020
  %v1094 = vunpack.c.l.b16 %v1021
  %v1095 = vunpack.c.h.b16 %v1021
  %v1096 = vunpack.c.l.b16 %v1022
  %v1097 = vunpack.c.h.b16 %v1022
  %v1098 = vunpack.c.l.b16 %v1023
  %v1099 = vunpack.c.h.b16 %v1023
  %v1100 = vunpack.c.l.b16 %v1024
  %v1101 = vunpack.c.h.b16 %v1024
  %v1102 = vunpack.c.l.b16 %v1025
  %v1103 = vunpack.c.h.b16 %v1025
  %v1104 = vpack.c.b16 %v1056, %v1052
  %v1105 = vpack.c.b16 %v1057, %v1053
  %v1106 = vpack.c.b16 %v1058, %v1054
  %v1107 = vpack.c.b16 %v1059, %v1055
  %v1108 = vpack.c.b16 %v1064, %v1060
  %v1109 = vpack.c.b16 %v1065, %v1061
  %v1110 = vpack.c.b16 %v1066, %v1062
  %v1111 = vpack.c.b16 %v1067, %v1063
  %v1112 = vpack.c.b16 %v1072, %v1068
  %v1113 = vpack.c.b16 %v1073, %v1069
  %v1114 = vpack.c.b16 %v1074, %v1070
  %v1115 = vpack.c.b16 %v1075, %v1071
  %v1116 = vpack.c.b16 %v1080, %v1076
  %v1117 = vpack.c.b16 %v1081, %v1077
  %v1118 = vpack.c.b16 %v1082, %v1078
  %v1119 = vpack.c.b16 %v1083, %v1079
  %v1120 = vpack.c.b16 %v1088, %v1084
  %v1121 = vpack.c.b16 %v1089, %v1085
  %v1122 = vpack.c.b16 %v1090, %v1086
  %v1123 = vpack.c.b16 %v1091, %v1087
  %v1124 = vpack.c.b16 %v1096, %v1092
  %v1125 = vpack.c.b16 %v1097, %v1093
  %v1126 = vpack.c.b16 %v1098, %v1094
  %v1127 = vpack.c.b16 %v1099, %v1095
  %v1128 = vpack.c.b16 %v1100, %v1100
  %v1129 = vpack.c.b16 %v1101, %v1101
  %v1130 = vpack.c.b16 %v1102, %v1102
  %v1131 = vpack.c.b16 %v1103, %v1103
  %v1154 = vsel %vm373, %v1107, 0
  %v1157 = vsel %vm373, %v1111, 0
  %v1160 = vsel %vm373, %v1115, 0
  %v1163 = vsel %vm373, %v1119, 0
  %v1166 = vsel %vm373, %v1123, 0
  %v1169 = vsel %vm373, %v1127, 0
  %v1172 = vsel %vm373, %v1131, 0
  %1174 = vmatprep.subr.bf16.mxu0 0
  %1175 = vmatpush1.bf16.msra.mxu0 %v323
  %1176 = vmatprep.subr.bf16.mxu0 0
  %1177 = vmatpush1.bf16.msra.mxu0 %v324
  %1178 = vmatprep.subr.bf16.mxu0 0
  %1179 = vmatpush1.bf16.msra.mxu0 %v325
  %1180 = vmatprep.subr.bf16.mxu0 0
  %1181 = vmatpush1.bf16.msra.mxu0 %v326
  %1182 = vmatprep.subr.bf16.mxu0 0
  %1183 = vmatpush1.bf16.msra.mxu0 %v327
  %1184 = vmatprep.subr.bf16.mxu0 0
  %1185 = vmatpush1.bf16.msra.mxu0 %v328
  %1186 = vmatprep.subr.bf16.mxu0 0
  %1187 = vmatpush1.bf16.msra.mxu0 %v329
  %1188 = vmatprep.subr.bf16.mxu0 0
  %1189 = vmatpush1.bf16.msra.mxu0 %v330
  %1190 = vmatprep.subr.bf16.mxu0 0
  %1191 = vmatpush1.bf16.msra.mxu0 %v331
  %1192 = vmatprep.subr.bf16.mxu0 0
  %1193 = vmatpush1.bf16.msra.mxu0 %v332
  %1194 = vmatprep.subr.bf16.mxu0 0
  %1195 = vmatpush1.bf16.msra.mxu0 %v333
  %1196 = vmatprep.subr.bf16.mxu0 0
  %1197 = vmatpush1.bf16.msra.mxu0 %v334
  %1198 = vmatprep.subr.bf16.mxu0 0
  %1199 = vmatpush1.bf16.msra.mxu0 %v335
  %1200 = vmatprep.subr.bf16.mxu0 0
  %1201 = vmatpush1.bf16.msra.mxu0 %v336
  %1202 = vmatprep.subr.bf16.mxu0 0
  %1203 = vmatpush1.bf16.msra.mxu0 %v337
  %1204 = vmatprep.subr.bf16.mxu0 0
  %1205 = vmatpush1.bf16.msra.mxu0 %v338
  %1206 = vmatprep.mubr.bf16.mxu0 %v1105
  %1207 = vmatmul.mubr.bf16.gmra.mrb[0].mxu0 %v1104
  %v1208 = vpop.f32.mrb[0].mxu0
  %v1209 = vadd.f32 0.0, %v1208
  %v1210 = vpop.f32.mrb[0].mxu0
  %v1211 = vpop.f32.mrb[0].mxu0
  %v1212 = vadd.f32 0.0, %v1211
  %v1213 = vpop.f32.mrb[0].mxu0
  %1214 = vmatprep.mubr.bf16.mxu0 %v1109
  %1215 = vmatmul.mubr.bf16.gmra.mrb[0].mxu0 %v1108
  %v1216 = vpop.f32.mrb[0].mxu0
  %v1217 = vadd.f32 0.0, %v1216
  %v1218 = vpop.f32.mrb[0].mxu0
  %v1219 = vpop.f32.mrb[0].mxu0
  %v1220 = vadd.f32 0.0, %v1219
  %v1221 = vpop.f32.mrb[0].mxu0
  %1222 = vmatprep.mubr.bf16.mxu0 %v1113
  %1223 = vmatmul.mubr.bf16.gmra.mrb[0].mxu0 %v1112
  %v1224 = vpop.f32.mrb[0].mxu0
  %v1225 = vadd.f32 0.0, %v1224
  %v1226 = vpop.f32.mrb[0].mxu0
  %v1227 = vpop.f32.mrb[0].mxu0
  %v1228 = vadd.f32 0.0, %v1227
  %v1229 = vpop.f32.mrb[0].mxu0
  %1230 = vmatprep.mubr.bf16.mxu0 %v1117
  %1231 = vmatmul.mubr.bf16.gmra.mrb[0].mxu0 %v1116
  %v1232 = vpop.f32.mrb[0].mxu0
  %v1233 = vadd.f32 0.0, %v1232
  %v1234 = vpop.f32.mrb[0].mxu0
  %v1235 = vpop.f32.mrb[0].mxu0
  %v1236 = vadd.f32 0.0, %v1235
  %v1237 = vpop.f32.mrb[0].mxu0
  %1238 = vmatprep.mubr.bf16.mxu0 %v1121
  %1239 = vmatmul.mubr.bf16.gmra.mrb[0].mxu0 %v1120
  %v1240 = vpop.f32.mrb[0].mxu0
  %v1241 = vadd.f32 0.0, %v1240
  %v1242 = vpop.f32.mrb[0].mxu0
  %v1243 = vpop.f32.mrb[0].mxu0
  %v1244 = vadd.f32 0.0, %v1243
  %v1245 = vpop.f32.mrb[0].mxu0
  %1246 = vmatprep.mubr.bf16.mxu0 %v1125
  %1247 = vmatmul.mubr.bf16.gmra.mrb[0].mxu0 %v1124
  %v1248 = vpop.f32.mrb[0].mxu0
  %v1249 = vadd.f32 0.0, %v1248
  %v1250 = vpop.f32.mrb[0].mxu0
  %v1251 = vpop.f32.mrb[0].mxu0
  %v1252 = vadd.f32 0.0, %v1251
  %v1253 = vpop.f32.mrb[0].mxu0
  %1254 = vmatprep.mubr.bf16.mxu0 %v1129
  %1255 = vmatmul.mubr.bf16.gmra.mrb[0].mxu0 %v1128
  %v1256 = vpop.f32.mrb[0].mxu0
  %v1257 = vadd.f32 0.0, %v1256
  %v1258 = vpop.f32.mrb[0].mxu0
  %v1259 = vpop.f32.mrb[0].mxu0
  %v1260 = vpop.f32.mrb[0].mxu0
  %1261 = vdwg.mxu0
  %1262 = vmatprep.subr.bf16.mxu0 0
  %1263 = vmatpush1.bf16.msra.mxu0 %v339
  %1264 = vmatprep.subr.bf16.mxu0 0
  %1265 = vmatpush1.bf16.msra.mxu0 %v340
  %1266 = vmatprep.subr.bf16.mxu0 0
  %1267 = vmatpush1.bf16.msra.mxu0 %v341
  %1268 = vmatprep.subr.bf16.mxu0 0
  %1269 = vmatpush1.bf16.msra.mxu0 %v342
  %1270 = vmatprep.subr.bf16.mxu0 0
  %1271 = vmatpush1.bf16.msra.mxu0 %v343
  %1272 = vmatprep.subr.bf16.mxu0 0
  %1273 = vmatpush1.bf16.msra.mxu0 %v344
  %1274 = vmatprep.subr.bf16.mxu0 0
  %1275 = vmatpush1.bf16.msra.mxu0 %v345
  %1276 = vmatprep.subr.bf16.mxu0 0
  %1277 = vmatpush1.bf16.msra.mxu0 %v346
  %1278 = vmatprep.subr.bf16.mxu0 0
  %1279 = vmatpush1.bf16.msra.mxu0 %v347
  %1280 = vmatprep.subr.bf16.mxu0 0
  %1281 = vmatpush1.bf16.msra.mxu0 0
  %1282 = vmatprep.subr.bf16.mxu0 0
  %1283 = vmatpush1.bf16.msra.mxu0 0
  %1284 = vmatprep.subr.bf16.mxu0 0
  %1285 = vmatpush1.bf16.msra.mxu0 0
  %1286 = vmatprep.subr.bf16.mxu0 0
  %1287 = vmatpush1.bf16.msra.mxu0 0
  %1288 = vmatprep.subr.bf16.mxu0 0
  %1289 = vmatpush1.bf16.msra.mxu0 0
  %1290 = vmatprep.subr.bf16.mxu0 0
  %1291 = vmatpush1.bf16.msra.mxu0 0
  %1292 = vmatprep.subr.bf16.mxu0 0
  %1293 = vmatpush1.bf16.msra.mxu0 0
  %1294 = vmatprep.mubr.bf16.mxu0 %v1154
  %1295 = vmatmul.mubr.bf16.gmra.mrb[0].mxu0 %v1106
  %v1296 = vpop.f32.mrb[0].mxu0
  %v1297 = vadd.f32 %v1209, %v1296
  %v1298 = vpop.f32.mrb[0].mxu0
  %v1299 = vpop.f32.mrb[0].mxu0
  %v1300 = vadd.f32 %v1212, %v1299
  %v1301 = vpop.f32.mrb[0].mxu0
  %1302 = vmatprep.mubr.bf16.mxu0 %v1157
  %1303 = vmatmul.mubr.bf16.gmra.mrb[0].mxu0 %v1110
  %v1304 = vpop.f32.mrb[0].mxu0
  %v1305 = vadd.f32 %v1217, %v1304
  %v1306 = vpop.f32.mrb[0].mxu0
  %v1307 = vpop.f32.mrb[0].mxu0
  %v1308 = vadd.f32 %v1220, %v1307
  %v1309 = vpop.f32.mrb[0].mxu0
  %1310 = vmatprep.mubr.bf16.mxu0 %v1160
  %1311 = vmatmul.mubr.bf16.gmra.mrb[0].mxu0 %v1114
  %v1312 = vpop.f32.mrb[0].mxu0
  %v1313 = vadd.f32 %v1225, %v1312
  %v1314 = vpop.f32.mrb[0].mxu0
  %v1315 = vpop.f32.mrb[0].mxu0
  %v1316 = vadd.f32 %v1228, %v1315
  %v1317 = vpop.f32.mrb[0].mxu0
  %1318 = vmatprep.mubr.bf16.mxu0 %v1163
  %1319 = vmatmul.mubr.bf16.gmra.mrb[0].mxu0 %v1118
  %v1320 = vpop.f32.mrb[0].mxu0
  %v1321 = vadd.f32 %v1233, %v1320
  %v1322 = vpop.f32.mrb[0].mxu0
  %v1323 = vpop.f32.mrb[0].mxu0
  %v1324 = vadd.f32 %v1236, %v1323
  %v1325 = vpop.f32.mrb[0].mxu0
  %1326 = vmatprep.mubr.bf16.mxu0 %v1166
  %1327 = vmatmul.mubr.bf16.gmra.mrb[0].mxu0 %v1122
  %v1328 = vpop.f32.mrb[0].mxu0
  %v1329 = vadd.f32 %v1241, %v1328
  %v1330 = vpop.f32.mrb[0].mxu0
  %v1331 = vpop.f32.mrb[0].mxu0
  %v1332 = vadd.f32 %v1244, %v1331
  %v1333 = vpop.f32.mrb[0].mxu0
  %1334 = vmatprep.mubr.bf16.mxu0 %v1169
  %1335 = vmatmul.mubr.bf16.gmra.mrb[0].mxu0 %v1126
  %v1336 = vpop.f32.mrb[0].mxu0
  %v1337 = vadd.f32 %v1249, %v1336
  %v1338 = vpop.f32.mrb[0].mxu0
  %v1339 = vpop.f32.mrb[0].mxu0
  %v1340 = vadd.f32 %v1252, %v1339
  %v1341 = vpop.f32.mrb[0].mxu0
  %1342 = vmatprep.mubr.bf16.mxu0 %v1172
  %1343 = vmatmul.mubr.bf16.gmra.mrb[0].mxu0 %v1130
  %v1344 = vpop.f32.mrb[0].mxu0
  %v1345 = vadd.f32 %v1257, %v1344
  %v1346 = vpop.f32.mrb[0].mxu0
  %v1347 = vpop.f32.mrb[0].mxu0
  %v1348 = vpop.f32.mrb[0].mxu0
  %1349 = vdwg.mxu0
  %v1350 = vmul.f32 %v1297, %v575
  %v1351 = vmul.f32 %v1300, %v575
  %v1352 = vmul.f32 %v1305, %v575
  %v1353 = vmul.f32 %v1308, %v575
  %v1354 = vmul.f32 %v1313, %v575
  %v1355 = vmul.f32 %v1316, %v575
  %v1356 = vmul.f32 %v1321, %v575
  %v1357 = vmul.f32 %v1324, %v575
  %v1358 = vmul.f32 %v1329, %v575
  %v1359 = vmul.f32 %v1332, %v575
  %v1360 = vmul.f32 %v1337, %v575
  %v1361 = vmul.f32 %v1340, %v575
  %v1362 = vmul.f32 %v1345, %v575
  %v1363 = vadd.f32 %v1350, %v594
  %v1364 = vadd.f32 %v1351, %v594
  %v1365 = vadd.f32 %v1352, %v594
  %v1366 = vadd.f32 %v1353, %v594
  %v1367 = vadd.f32 %v1354, %v594
  %v1368 = vadd.f32 %v1355, %v594
  %v1369 = vadd.f32 %v1356, %v594
  %v1370 = vadd.f32 %v1357, %v594
  %v1371 = vadd.f32 %v1358, %v594
  %v1372 = vadd.f32 %v1359, %v594
  %v1373 = vadd.f32 %v1360, %v594
  %v1374 = vadd.f32 %v1361, %v594
  %v1375 = vadd.f32 %v1362, %v594
  %s1376 = scalar_lea.vmem %s0, 624
  %v1377 = vld [vmem:[%s1376] sm:$0xff]
  %v1378 = vld [vmem:[%s1376 + $0x8] sm:$0xff]
  %v1379 = vld [vmem:[%s1376 + $0x10] sm:$0xff]
  %v1380 = vld [vmem:[%s1376 + $0x18] sm:$0xff]
  %v1381 = vld [vmem:[%s1376 + $0x20] sm:$0xff]
  %v1382 = vld [vmem:[%s1376 + $0x28] sm:$0xff]
  %v1383 = vld [vmem:[%s1376 + $0x30] sm:$0xff]
  %v1384 = vld [vmem:[%s1376 + $0x38] sm:$0xff]
  %v1385 = vld [vmem:[%s1376 + $0x40] sm:$0xff]
  %v1386 = vld [vmem:[%s1376 + $0x48] sm:$0xff]
  %v1387 = vld [vmem:[%s1376 + $0x50] sm:$0xff]
  %v1388 = vld [vmem:[%s1376 + $0x58] sm:$0xff]
  %v1389 = vld [vmem:[%s1376 + $0x60] sm:$0xff]
  %v1390 = vld [vmem:[%s1376 + $0x68] sm:$0xff]
  %v1391 = vld [vmem:[%s1376 + $0x70] sm:$0xff]
  %v1392 = vld [vmem:[%s1376 + $0x78] sm:$0xff]
  %v1393 = vld [vmem:[%s1376 + $0x80] sm:$0xff]
  %v1394 = vld [vmem:[%s1376 + $0x88] sm:$0xff]
  %v1395 = vld [vmem:[%s1376 + $0x90] sm:$0xff]
  %v1396 = vld [vmem:[%s1376 + $0x98] sm:$0xff]
  %v1397 = vld [vmem:[%s1376 + $0xa0] sm:$0xff]
  %v1398 = vld [vmem:[%s1376 + $0xa8] sm:$0xff]
  %v1399 = vld [vmem:[%s1376 + $0xb0] sm:$0xff]
  %v1400 = vld [vmem:[%s1376 + $0xb8] sm:$0xff]
  %v1401 = vld [vmem:[%s1376 + $0xc0] sm:$0x11]
  %v1402 = vld [vmem:[%s1376 + $0xc8] sm:$0x11]
  %v1429 = vunpack.c.l.b16 %v1377
  %v1430 = vunpack.c.h.b16 %v1377
  %v1431 = vunpack.c.l.b16 %v1378
  %v1432 = vunpack.c.h.b16 %v1378
  %v1433 = vunpack.c.l.b16 %v1379
  %v1434 = vunpack.c.h.b16 %v1379
  %v1435 = vunpack.c.l.b16 %v1380
  %v1436 = vunpack.c.h.b16 %v1380
  %v1437 = vunpack.c.l.b16 %v1381
  %v1438 = vunpack.c.h.b16 %v1381
  %v1439 = vunpack.c.l.b16 %v1382
  %v1440 = vunpack.c.h.b16 %v1382
  %v1441 = vunpack.c.l.b16 %v1383
  %v1442 = vunpack.c.h.b16 %v1383
  %v1443 = vunpack.c.l.b16 %v1384
  %v1444 = vunpack.c.h.b16 %v1384
  %v1445 = vunpack.c.l.b16 %v1385
  %v1446 = vunpack.c.h.b16 %v1385
  %v1447 = vunpack.c.l.b16 %v1386
  %v1448 = vunpack.c.h.b16 %v1386
  %v1449 = vunpack.c.l.b16 %v1387
  %v1450 = vunpack.c.h.b16 %v1387
  %v1451 = vunpack.c.l.b16 %v1388
  %v1452 = vunpack.c.h.b16 %v1388
  %v1453 = vunpack.c.l.b16 %v1389
  %v1454 = vunpack.c.h.b16 %v1389
  %v1455 = vunpack.c.l.b16 %v1390
  %v1456 = vunpack.c.h.b16 %v1390
  %v1457 = vunpack.c.l.b16 %v1391
  %v1458 = vunpack.c.h.b16 %v1391
  %v1459 = vunpack.c.l.b16 %v1392
  %v1460 = vunpack.c.h.b16 %v1392
  %v1461 = vunpack.c.l.b16 %v1393
  %v1462 = vunpack.c.h.b16 %v1393
  %v1463 = vunpack.c.l.b16 %v1394
  %v1464 = vunpack.c.h.b16 %v1394
  %v1465 = vunpack.c.l.b16 %v1395
  %v1466 = vunpack.c.h.b16 %v1395
  %v1467 = vunpack.c.l.b16 %v1396
  %v1468 = vunpack.c.h.b16 %v1396
  %v1469 = vunpack.c.l.b16 %v1397
  %v1470 = vunpack.c.h.b16 %v1397
  %v1471 = vunpack.c.l.b16 %v1398
  %v1472 = vunpack.c.h.b16 %v1398
  %v1473 = vunpack.c.l.b16 %v1399
  %v1474 = vunpack.c.h.b16 %v1399
  %v1475 = vunpack.c.l.b16 %v1400
  %v1476 = vunpack.c.h.b16 %v1400
  %v1477 = vunpack.c.l.b16 %v1401
  %v1478 = vunpack.c.h.b16 %v1401
  %v1479 = vunpack.c.l.b16 %v1402
  %v1480 = vunpack.c.h.b16 %v1402
  %v1481 = vpack.c.b16 %v1433, %v1429
  %v1482 = vpack.c.b16 %v1434, %v1430
  %v1483 = vpack.c.b16 %v1435, %v1431
  %v1484 = vpack.c.b16 %v1436, %v1432
  %v1485 = vpack.c.b16 %v1441, %v1437
  %v1486 = vpack.c.b16 %v1442, %v1438
  %v1487 = vpack.c.b16 %v1443, %v1439
  %v1488 = vpack.c.b16 %v1444, %v1440
  %v1489 = vpack.c.b16 %v1449, %v1445
  %v1490 = vpack.c.b16 %v1450, %v1446
  %v1491 = vpack.c.b16 %v1451, %v1447
  %v1492 = vpack.c.b16 %v1452, %v1448
  %v1493 = vpack.c.b16 %v1457, %v1453
  %v1494 = vpack.c.b16 %v1458, %v1454
  %v1495 = vpack.c.b16 %v1459, %v1455
  %v1496 = vpack.c.b16 %v1460, %v1456
  %v1497 = vpack.c.b16 %v1465, %v1461
  %v1498 = vpack.c.b16 %v1466, %v1462
  %v1499 = vpack.c.b16 %v1467, %v1463
  %v1500 = vpack.c.b16 %v1468, %v1464
  %v1501 = vpack.c.b16 %v1473, %v1469
  %v1502 = vpack.c.b16 %v1474, %v1470
  %v1503 = vpack.c.b16 %v1475, %v1471
  %v1504 = vpack.c.b16 %v1476, %v1472
  %v1505 = vpack.c.b16 %v1477, %v1477
  %v1506 = vpack.c.b16 %v1478, %v1478
  %v1507 = vpack.c.b16 %v1479, %v1479
  %v1508 = vpack.c.b16 %v1480, %v1480
  %v1531 = vsel %vm373, %v1484, 0
  %v1534 = vsel %vm373, %v1488, 0
  %v1537 = vsel %vm373, %v1492, 0
  %v1540 = vsel %vm373, %v1496, 0
  %v1543 = vsel %vm373, %v1500, 0
  %v1546 = vsel %vm373, %v1504, 0
  %v1549 = vsel %vm373, %v1508, 0
  %1551 = vmatprep.subr.bf16.mxu0 0
  %1552 = vmatpush1.bf16.msra.mxu0 %v323
  %1553 = vmatprep.subr.bf16.mxu0 0
  %1554 = vmatpush1.bf16.msra.mxu0 %v324
  %1555 = vmatprep.subr.bf16.mxu0 0
  %1556 = vmatpush1.bf16.msra.mxu0 %v325
  %1557 = vmatprep.subr.bf16.mxu0 0
  %1558 = vmatpush1.bf16.msra.mxu0 %v326
  %1559 = vmatprep.subr.bf16.mxu0 0
  %1560 = vmatpush1.bf16.msra.mxu0 %v327
  %1561 = vmatprep.subr.bf16.mxu0 0
  %1562 = vmatpush1.bf16.msra.mxu0 %v328
  %1563 = vmatprep.subr.bf16.mxu0 0
  %1564 = vmatpush1.bf16.msra.mxu0 %v329
  %1565 = vmatprep.subr.bf16.mxu0 0
  %1566 = vmatpush1.bf16.msra.mxu0 %v330
  %1567 = vmatprep.subr.bf16.mxu0 0
  %1568 = vmatpush1.bf16.msra.mxu0 %v331
  %1569 = vmatprep.subr.bf16.mxu0 0
  %1570 = vmatpush1.bf16.msra.mxu0 %v332
  %1571 = vmatprep.subr.bf16.mxu0 0
  %1572 = vmatpush1.bf16.msra.mxu0 %v333
  %1573 = vmatprep.subr.bf16.mxu0 0
  %1574 = vmatpush1.bf16.msra.mxu0 %v334
  %1575 = vmatprep.subr.bf16.mxu0 0
  %1576 = vmatpush1.bf16.msra.mxu0 %v335
  %1577 = vmatprep.subr.bf16.mxu0 0
  %1578 = vmatpush1.bf16.msra.mxu0 %v336
  %1579 = vmatprep.subr.bf16.mxu0 0
  %1580 = vmatpush1.bf16.msra.mxu0 %v337
  %1581 = vmatprep.subr.bf16.mxu0 0
  %1582 = vmatpush1.bf16.msra.mxu0 %v338
  %1583 = vmatprep.mubr.bf16.mxu0 %v1482
  %1584 = vmatmul.mubr.bf16.gmra.mrb[0].mxu0 %v1481
  %v1585 = vpop.f32.mrb[0].mxu0
  %v1586 = vadd.f32 0.0, %v1585
  %v1587 = vpop.f32.mrb[0].mxu0
  %v1588 = vpop.f32.mrb[0].mxu0
  %v1589 = vadd.f32 0.0, %v1588
  %v1590 = vpop.f32.mrb[0].mxu0
  %1591 = vmatprep.mubr.bf16.mxu0 %v1486
  %1592 = vmatmul.mubr.bf16.gmra.mrb[0].mxu0 %v1485
  %v1593 = vpop.f32.mrb[0].mxu0
  %v1594 = vadd.f32 0.0, %v1593
  %v1595 = vpop.f32.mrb[0].mxu0
  %v1596 = vpop.f32.mrb[0].mxu0
  %v1597 = vadd.f32 0.0, %v1596
  %v1598 = vpop.f32.mrb[0].mxu0
  %1599 = vmatprep.mubr.bf16.mxu0 %v1490
  %1600 = vmatmul.mubr.bf16.gmra.mrb[0].mxu0 %v1489
  %v1601 = vpop.f32.mrb[0].mxu0
  %v1602 = vadd.f32 0.0, %v1601
  %v1603 = vpop.f32.mrb[0].mxu0
  %v1604 = vpop.f32.mrb[0].mxu0
  %v1605 = vadd.f32 0.0, %v1604
  %v1606 = vpop.f32.mrb[0].mxu0
  %1607 = vmatprep.mubr.bf16.mxu0 %v1494
  %1608 = vmatmul.mubr.bf16.gmra.mrb[0].mxu0 %v1493
  %v1609 = vpop.f32.mrb[0].mxu0
  %v1610 = vadd.f32 0.0, %v1609
  %v1611 = vpop.f32.mrb[0].mxu0
  %v1612 = vpop.f32.mrb[0].mxu0
  %v1613 = vadd.f32 0.0, %v1612
  %v1614 = vpop.f32.mrb[0].mxu0
  %1615 = vmatprep.mubr.bf16.mxu0 %v1498
  %1616 = vmatmul.mubr.bf16.gmra.mrb[0].mxu0 %v1497
  %v1617 = vpop.f32.mrb[0].mxu0
  %v1618 = vadd.f32 0.0, %v1617
  %v1619 = vpop.f32.mrb[0].mxu0
  %v1620 = vpop.f32.mrb[0].mxu0
  %v1621 = vadd.f32 0.0, %v1620
  %v1622 = vpop.f32.mrb[0].mxu0
  %1623 = vmatprep.mubr.bf16.mxu0 %v1502
  %1624 = vmatmul.mubr.bf16.gmra.mrb[0].mxu0 %v1501
  %v1625 = vpop.f32.mrb[0].mxu0
  %v1626 = vadd.f32 0.0, %v1625
  %v1627 = vpop.f32.mrb[0].mxu0
  %v1628 = vpop.f32.mrb[0].mxu0
  %v1629 = vadd.f32 0.0, %v1628
  %v1630 = vpop.f32.mrb[0].mxu0
  %1631 = vmatprep.mubr.bf16.mxu0 %v1506
  %1632 = vmatmul.mubr.bf16.gmra.mrb[0].mxu0 %v1505
  %v1633 = vpop.f32.mrb[0].mxu0
  %v1634 = vadd.f32 0.0, %v1633
  %v1635 = vpop.f32.mrb[0].mxu0
  %v1636 = vpop.f32.mrb[0].mxu0
  %v1637 = vpop.f32.mrb[0].mxu0
  %1638 = vdwg.mxu0
  %1639 = vmatprep.subr.bf16.mxu0 0
  %1640 = vmatpush1.bf16.msra.mxu0 %v339
  %1641 = vmatprep.subr.bf16.mxu0 0
  %1642 = vmatpush1.bf16.msra.mxu0 %v340
  %1643 = vmatprep.subr.bf16.mxu0 0
  %1644 = vmatpush1.bf16.msra.mxu0 %v341
  %1645 = vmatprep.subr.bf16.mxu0 0
  %1646 = vmatpush1.bf16.msra.mxu0 %v342
  %1647 = vmatprep.subr.bf16.mxu0 0
  %1648 = vmatpush1.bf16.msra.mxu0 %v343
  %1649 = vmatprep.subr.bf16.mxu0 0
  %1650 = vmatpush1.bf16.msra.mxu0 %v344
  %1651 = vmatprep.subr.bf16.mxu0 0
  %1652 = vmatpush1.bf16.msra.mxu0 %v345
  %1653 = vmatprep.subr.bf16.mxu0 0
  %1654 = vmatpush1.bf16.msra.mxu0 %v346
  %1655 = vmatprep.subr.bf16.mxu0 0
  %1656 = vmatpush1.bf16.msra.mxu0 %v347
  %1657 = vmatprep.subr.bf16.mxu0 0
  %1658 = vmatpush1.bf16.msra.mxu0 0
  %1659 = vmatprep.subr.bf16.mxu0 0
  %1660 = vmatpush1.bf16.msra.mxu0 0
  %1661 = vmatprep.subr.bf16.mxu0 0
  %1662 = vmatpush1.bf16.msra.mxu0 0
  %1663 = vmatprep.subr.bf16.mxu0 0
  %1664 = vmatpush1.bf16.msra.mxu0 0
  %1665 = vmatprep.subr.bf16.mxu0 0
  %1666 = vmatpush1.bf16.msra.mxu0 0
  %1667 = vmatprep.subr.bf16.mxu0 0
  %1668 = vmatpush1.bf16.msra.mxu0 0
  %1669 = vmatprep.subr.bf16.mxu0 0
  %1670 = vmatpush1.bf16.msra.mxu0 0
  %1671 = vmatprep.mubr.bf16.mxu0 %v1531
  %1672 = vmatmul.mubr.bf16.gmra.mrb[0].mxu0 %v1483
  %v1673 = vpop.f32.mrb[0].mxu0
  %v1674 = vadd.f32 %v1586, %v1673
  %v1675 = vpop.f32.mrb[0].mxu0
  %v1676 = vpop.f32.mrb[0].mxu0
  %v1677 = vadd.f32 %v1589, %v1676
  %v1678 = vpop.f32.mrb[0].mxu0
  %1679 = vmatprep.mubr.bf16.mxu0 %v1534
  %1680 = vmatmul.mubr.bf16.gmra.mrb[0].mxu0 %v1487
  %v1681 = vpop.f32.mrb[0].mxu0
  %v1682 = vadd.f32 %v1594, %v1681
  %v1683 = vpop.f32.mrb[0].mxu0
  %v1684 = vpop.f32.mrb[0].mxu0
  %v1685 = vadd.f32 %v1597, %v1684
  %v1686 = vpop.f32.mrb[0].mxu0
  %1687 = vmatprep.mubr.bf16.mxu0 %v1537
  %1688 = vmatmul.mubr.bf16.gmra.mrb[0].mxu0 %v1491
  %v1689 = vpop.f32.mrb[0].mxu0
  %v1690 = vadd.f32 %v1602, %v1689
  %v1691 = vpop.f32.mrb[0].mxu0
  %v1692 = vpop.f32.mrb[0].mxu0
  %v1693 = vadd.f32 %v1605, %v1692
  %v1694 = vpop.f32.mrb[0].mxu0
  %1695 = vmatprep.mubr.bf16.mxu0 %v1540
  %1696 = vmatmul.mubr.bf16.gmra.mrb[0].mxu0 %v1495
  %v1697 = vpop.f32.mrb[0].mxu0
  %v1698 = vadd.f32 %v1610, %v1697
  %v1699 = vpop.f32.mrb[0].mxu0
  %v1700 = vpop.f32.mrb[0].mxu0
  %v1701 = vadd.f32 %v1613, %v1700
  %v1702 = vpop.f32.mrb[0].mxu0
  %1703 = vmatprep.mubr.bf16.mxu0 %v1543
  %1704 = vmatmul.mubr.bf16.gmra.mrb[0].mxu0 %v1499
  %v1705 = vpop.f32.mrb[0].mxu0
  %v1706 = vadd.f32 %v1618, %v1705
  %v1707 = vpop.f32.mrb[0].mxu0
  %v1708 = vpop.f32.mrb[0].mxu0
  %v1709 = vadd.f32 %v1621, %v1708
  %v1710 = vpop.f32.mrb[0].mxu0
  %1711 = vmatprep.mubr.bf16.mxu0 %v1546
  %1712 = vmatmul.mubr.bf16.gmra.mrb[0].mxu0 %v1503
  %v1713 = vpop.f32.mrb[0].mxu0
  %v1714 = vadd.f32 %v1626, %v1713
  %v1715 = vpop.f32.mrb[0].mxu0
  %v1716 = vpop.f32.mrb[0].mxu0
  %v1717 = vadd.f32 %v1629, %v1716
  %v1718 = vpop.f32.mrb[0].mxu0
  %1719 = vmatprep.mubr.bf16.mxu0 %v1549
  %1720 = vmatmul.mubr.bf16.gmra.mrb[0].mxu0 %v1507
  %v1721 = vpop.f32.mrb[0].mxu0
  %v1722 = vadd.f32 %v1634, %v1721
  %v1723 = vpop.f32.mrb[0].mxu0
  %v1724 = vpop.f32.mrb[0].mxu0
  %v1725 = vpop.f32.mrb[0].mxu0
  %1726 = vdwg.mxu0
  %v1727 = vmul.f32 %v1674, %v575
  %v1728 = vmul.f32 %v1677, %v575
  %v1729 = vmul.f32 %v1682, %v575
  %v1730 = vmul.f32 %v1685, %v575
  %v1731 = vmul.f32 %v1690, %v575
  %v1732 = vmul.f32 %v1693, %v575
  %v1733 = vmul.f32 %v1698, %v575
  %v1734 = vmul.f32 %v1701, %v575
  %v1735 = vmul.f32 %v1706, %v575
  %v1736 = vmul.f32 %v1709, %v575
  %v1737 = vmul.f32 %v1714, %v575
  %v1738 = vmul.f32 %v1717, %v575
  %v1739 = vmul.f32 %v1722, %v575
  %v1740 = vadd.f32 %v1727, %v594
  %v1741 = vadd.f32 %v1728, %v594
  %v1742 = vadd.f32 %v1729, %v594
  %v1743 = vadd.f32 %v1730, %v594
  %v1744 = vadd.f32 %v1731, %v594
  %v1745 = vadd.f32 %v1732, %v594
  %v1746 = vadd.f32 %v1733, %v594
  %v1747 = vadd.f32 %v1734, %v594
  %v1748 = vadd.f32 %v1735, %v594
  %v1749 = vadd.f32 %v1736, %v594
  %v1750 = vadd.f32 %v1737, %v594
  %v1751 = vadd.f32 %v1738, %v594
  %v1752 = vadd.f32 %v1739, %v594
  %v1753 = vmax.f32 %v1363, %v1740
  %v1754 = vmax.f32 %v1364, %v1741
  %v1755 = vmax.f32 %v1365, %v1742
  %v1756 = vmax.f32 %v1366, %v1743
  %v1757 = vmax.f32 %v1367, %v1744
  %v1758 = vmax.f32 %v1368, %v1745
  %v1759 = vmax.f32 %v1369, %v1746
  %v1760 = vmax.f32 %v1370, %v1747
  %v1761 = vmax.f32 %v1371, %v1748
  %v1762 = vmax.f32 %v1372, %v1749
  %v1763 = vmax.f32 %v1373, %v1750
  %v1764 = vmax.f32 %v1374, %v1751
  %v1765 = vmax.f32 %v1375, %v1752
  %v1766 = vmax.f32 %v986, %v1753
  %v1767 = vmax.f32 %v987, %v1754
  %v1768 = vmax.f32 %v988, %v1755
  %v1769 = vmax.f32 %v989, %v1756
  %v1770 = vmax.f32 %v990, %v1757
  %v1771 = vmax.f32 %v991, %v1758
  %v1772 = vmax.f32 %v992, %v1759
  %v1773 = vmax.f32 %v993, %v1760
  %v1774 = vmax.f32 %v994, %v1761
  %v1775 = vmax.f32 %v995, %v1762
  %v1776 = vmax.f32 %v996, %v1763
  %v1777 = vmax.f32 %v997, %v1764
  %v1778 = vmax.f32 %v998, %v1765
  %v1779 = vmax.f32 %v1766, 0.0
  %v1780 = vmax.f32 %v1767, 0.0
  %v1781 = vmax.f32 %v1768, 0.0
  %v1782 = vmax.f32 %v1769, 0.0
  %v1783 = vmax.f32 %v1770, 0.0
  %v1784 = vmax.f32 %v1771, 0.0
  %v1785 = vmax.f32 %v1772, 0.0
  %v1786 = vmax.f32 %v1773, 0.0
  %v1787 = vmax.f32 %v1774, 0.0
  %v1788 = vmax.f32 %v1775, 0.0
  %v1789 = vmax.f32 %v1776, 0.0
  %v1790 = vmax.f32 %v1777, 0.0
  %v1791 = vmax.f32 %v1778, 0.0
  %vm1792 = vcmask 261120
  %1793 = vst.msk [vmem:[%s4] sm:$0xff] %vm1792, %v1779
  %1794 = vst.msk [vmem:[%s4 + $0x8] sm:$0xff] %vm1792, %v1780
  %1795 = vst.msk [vmem:[%s4 + $0x10] sm:$0xff] %vm1792, %v1781
  %1796 = vst.msk [vmem:[%s4 + $0x18] sm:$0xff] %vm1792, %v1782
  %1797 = vst.msk [vmem:[%s4 + $0x20] sm:$0xff] %vm1792, %v1783
  %1798 = vst.msk [vmem:[%s4 + $0x28] sm:$0xff] %vm1792, %v1784
  %1799 = vst.msk [vmem:[%s4 + $0x30] sm:$0xff] %vm1792, %v1785
  %1800 = vst.msk [vmem:[%s4 + $0x38] sm:$0xff] %vm1792, %v1786
  %1801 = vst.msk [vmem:[%s4 + $0x40] sm:$0xff] %vm1792, %v1787
  %1802 = vst.msk [vmem:[%s4 + $0x48] sm:$0xff] %vm1792, %v1788
  %1803 = vst.msk [vmem:[%s4 + $0x50] sm:$0xff] %vm1792, %v1789
  %1804 = vst.msk [vmem:[%s4 + $0x58] sm:$0xff] %vm1792, %v1790
  %vm1805 = vcmask 254976
  %1806 = vst.msk [vmem:[%s4 + $0x60] sm:$0x3] %vm1805, %v1791
  // Predicated region
  $region18: #{cnn_forward.4} parent=0 // pred_check
    _
  $region19: #{cnn_forward.4} parent=0 // pred_check_branch
    %1808 = sbr.rel (0) target = $region21
  $region20: #{cnn_forward.4} parent=0 // pred_region
    _
  $region21: #{cnn_forward.4} parent=0 // pred_fallthru
    _
  // Predicated region
  $region22: #{cnn_forward.4} parent=0 // pred_check
    _
  $region23: #{cnn_forward.4} parent=0 // pred_check_branch
    %1810 = sbr.rel (0) target = $region25
  $region24: #{cnn_forward.4} parent=0 // pred_region
    _
  $region25: #{cnn_forward.4} parent=0 // pred_fallthru
    _

// kernel: cnn_forward.5
$region0: #{cnn_forward.5}
  #allocation0 [shape = 'u32[]', space=smem, size = 0x4, offset = 0x4, fixed_abs, tag = 'smem constant byte address 0x4 - core index']
  #allocation1 [shape = 'u32[144,128]{1,0:T(1,128)}', space=vmem, size = 0x12000, scoped, tag = 'internal scratch']
  %s0 = inlined_call_operand.vmem [shape: bf16[2,1568], index: 0, kind: input, shape index: {}]
  %s1 = inlined_call_operand.vmem [shape: bf16[1568,10], index: 1, kind: input, shape index: {}]
  %s2 = inlined_call_operand.vmem [shape: f32[1,10], index: 2, kind: input, shape index: {}]
  %s3 = inlined_call_operand.hbm [shape: f32[2,10], index: 3, kind: output, shape index: {}]
  %s4 = sld [smem:[#allocation0]]
  $region22: #{cnn_forward.5} parent=0
    _
  %s6 = ssub.s32 1, %s4
  %s7 = scalar_select 0, %s6, %s4
  $region1: #{cnn_forward.5} parent=0
    #allocation2 [shape = 'u8[1024]{0}', space=vmem, size = 0x400, scoped, tag = 'output window, operand 0, single buffered']
    #allocation3 [shape = 's32[1]{0}', space=sflag, size = 0x4, scoped, tag = 'scoped memory for cnn_forward.5']
    %8 = vsyncpa [#allocation3], 0
    // Predicated region
    $region2: #{cnn_forward.5} parent=1 // pred_check
      _
    $region3: #{cnn_forward.5} parent=1 // pred_check_branch
      %10 = sbr.rel (0) target = $region5
    $region4: #{cnn_forward.5} parent=1 // pred_region
      _
    $region5: #{cnn_forward.5} parent=1 // pred_fallthru
      _
    // Predicated region
    $region6: #{cnn_forward.5} parent=1 // pred_check
      _
    $region7: #{cnn_forward.5} parent=1 // pred_check_branch
      %12 = sbr.rel (0) target = $region9
    $region8: #{cnn_forward.5} parent=1 // pred_region
      _
    $region9: #{cnn_forward.5} parent=1 // pred_fallthru
      _
    // Predicated region
    $region10: #{cnn_forward.5} parent=1 // pred_check
      _
    $region11: #{cnn_forward.5} parent=1 // pred_check_branch
      %14 = sbr.rel (0) target = $region13
    $region12: #{cnn_forward.5} parent=1 // pred_region
      _
    $region13: #{cnn_forward.5} parent=1 // pred_fallthru
      _
    %v16 = vld [vmem:[%s0] sm:$0xff]
    %v17 = vld [vmem:[%s0 + $0x8] sm:$0x1f]
    %v18 = vld [vmem:[%s1] sm:$0xf]
    %v19 = vld [vmem:[%s1 + $0x4] sm:$0xf]
    %v20 = vld [vmem:[%s1 + $0x8] sm:$0xf]
    %v21 = vld [vmem:[%s1 + $0xc] sm:$0xf]
    %v22 = vld [vmem:[%s1 + $0x10] sm:$0xf]
    %v23 = vld [vmem:[%s1 + $0x14] sm:$0xf]
    %v24 = vld [vmem:[%s1 + $0x18] sm:$0xf]
    %v25 = vld [vmem:[%s1 + $0x1c] sm:$0xf]
    %v26 = vld [vmem:[%s1 + $0x20] sm:$0xf]
    %v27 = vld [vmem:[%s1 + $0x24] sm:$0xf]
    %v28 = vld [vmem:[%s1 + $0x28] sm:$0xf]
    %v29 = vld [vmem:[%s1 + $0x2c] sm:$0xf]
    %v30 = vld [vmem:[%s1 + $0x30] sm:$0xf]
    %v31 = vld [vmem:[%s1 + $0x34] sm:$0xf]
    %v32 = vld [vmem:[%s1 + $0x38] sm:$0xf]
    %v33 = vld [vmem:[%s1 + $0x3c] sm:$0xf]
    %v34 = vld [vmem:[%s1 + $0x40] sm:$0xf]
    %v35 = vld [vmem:[%s1 + $0x44] sm:$0xf]
    %v36 = vld [vmem:[%s1 + $0x48] sm:$0xf]
    %v37 = vld [vmem:[%s1 + $0x4c] sm:$0xf]
    %v38 = vld [vmem:[%s1 + $0x50] sm:$0xf]
    %v39 = vld [vmem:[%s1 + $0x54] sm:$0xf]
    %v40 = vld [vmem:[%s1 + $0x58] sm:$0xf]
    %v41 = vld [vmem:[%s1 + $0x5c] sm:$0xf]
    %v42 = vld [vmem:[%s1 + $0x60] sm:$0xf]
    %v43 = vld [vmem:[%s1 + $0x64] sm:$0xf]
    %v44 = vld [vmem:[%s1 + $0x68] sm:$0xf]
    %v45 = vld [vmem:[%s1 + $0x6c] sm:$0xf]
    %v46 = vld [vmem:[%s1 + $0x70] sm:$0xf]
    %v47 = vld [vmem:[%s1 + $0x74] sm:$0xf]
    %v48 = vld [vmem:[%s1 + $0x78] sm:$0xf]
    %v49 = vld [vmem:[%s1 + $0x7c] sm:$0xf]
    %v50 = vld [vmem:[%s1 + $0x80] sm:$0xf]
    %v51 = vld [vmem:[%s1 + $0x84] sm:$0xf]
    %v52 = vld [vmem:[%s1 + $0x88] sm:$0xf]
    %v53 = vld [vmem:[%s1 + $0x8c] sm:$0xf]
    %v54 = vld [vmem:[%s1 + $0x90] sm:$0xf]
    %v55 = vld [vmem:[%s1 + $0x94] sm:$0xf]
    %v56 = vld [vmem:[%s1 + $0x98] sm:$0xf]
    %v57 = vld [vmem:[%s1 + $0x9c] sm:$0xf]
    %v58 = vld [vmem:[%s1 + $0xa0] sm:$0xf]
    %v59 = vld [vmem:[%s1 + $0xa4] sm:$0xf]
    %v60 = vld [vmem:[%s1 + $0xa8] sm:$0xf]
    %v61 = vld [vmem:[%s1 + $0xac] sm:$0xf]
    %v62 = vld [vmem:[%s1 + $0xb0] sm:$0xf]
    %v63 = vld [vmem:[%s1 + $0xb4] sm:$0xf]
    %v64 = vld [vmem:[%s1 + $0xb8] sm:$0xf]
    %v65 = vld [vmem:[%s1 + $0xbc] sm:$0xf]
    %v66 = vld [vmem:[%s1 + $0xc0] sm:$0xf]
    %v67 = vld [vmem:[%s1 + $0xc4] sm:$0xf]
    %v68 = vld [vmem:[%s1 + $0xc8] sm:$0xf]
    %v69 = vld [vmem:[%s1 + $0xcc] sm:$0xf]
    %v70 = vld [vmem:[%s1 + $0xd0] sm:$0xf]
    %v71 = vld [vmem:[%s1 + $0xd4] sm:$0xf]
    %v72 = vld [vmem:[%s1 + $0xd8] sm:$0xf]
    %v73 = vld [vmem:[%s1 + $0xdc] sm:$0xf]
    %v74 = vld [vmem:[%s1 + $0xe0] sm:$0xf]
    %v75 = vld [vmem:[%s1 + $0xe4] sm:$0xf]
    %v76 = vld [vmem:[%s1 + $0xe8] sm:$0xf]
    %v77 = vld [vmem:[%s1 + $0xec] sm:$0xf]
    %v78 = vld [vmem:[%s1 + $0xf0] sm:$0xf]
    %v79 = vld [vmem:[%s1 + $0xf4] sm:$0xf]
    %v80 = vld [vmem:[%s1 + $0xf8] sm:$0xf]
    %v81 = vld [vmem:[%s1 + $0xfc] sm:$0xf]
    %v82 = vld [vmem:[%s1 + $0x100] sm:$0xf]
    %v83 = vld [vmem:[%s1 + $0x104] sm:$0xf]
    %v84 = vld [vmem:[%s1 + $0x108] sm:$0xf]
    %v85 = vld [vmem:[%s1 + $0x10c] sm:$0xf]
    %v86 = vld [vmem:[%s1 + $0x110] sm:$0xf]
    %v87 = vld [vmem:[%s1 + $0x114] sm:$0xf]
    %v88 = vld [vmem:[%s1 + $0x118] sm:$0xf]
    %v89 = vld [vmem:[%s1 + $0x11c] sm:$0xf]
    %v90 = vld [vmem:[%s1 + $0x120] sm:$0xf]
    %v91 = vld [vmem:[%s1 + $0x124] sm:$0xf]
    %v92 = vld [vmem:[%s1 + $0x128] sm:$0xf]
    %v93 = vld [vmem:[%s1 + $0x12c] sm:$0xf]
    %v94 = vld [vmem:[%s1 + $0x130] sm:$0xf]
    %v95 = vld [vmem:[%s1 + $0x134] sm:$0xf]
    %v96 = vld [vmem:[%s1 + $0x138] sm:$0xf]
    %v97 = vld [vmem:[%s1 + $0x13c] sm:$0xf]
    %v98 = vld [vmem:[%s1 + $0x140] sm:$0xf]
    %v99 = vld [vmem:[%s1 + $0x144] sm:$0xf]
    %v100 = vld [vmem:[%s1 + $0x148] sm:$0xf]
    %v101 = vld [vmem:[%s1 + $0x14c] sm:$0xf]
    %v102 = vld [vmem:[%s1 + $0x150] sm:$0xf]
    %v103 = vld [vmem:[%s1 + $0x154] sm:$0xf]
    %v104 = vld [vmem:[%s1 + $0x158] sm:$0xf]
    %v105 = vld [vmem:[%s1 + $0x15c] sm:$0xf]
    %v106 = vld [vmem:[%s1 + $0x160] sm:$0xf]
    %v107 = vld [vmem:[%s1 + $0x164] sm:$0xf]
    %v108 = vld [vmem:[%s1 + $0x168] sm:$0xf]
    %v109 = vld [vmem:[%s1 + $0x16c] sm:$0xf]
    %v110 = vld [vmem:[%s1 + $0x170] sm:$0xf]
    %v111 = vld [vmem:[%s1 + $0x174] sm:$0xf]
    %v112 = vld [vmem:[%s1 + $0x178] sm:$0xf]
    %v113 = vld [vmem:[%s1 + $0x17c] sm:$0xf]
    %v114 = vld [vmem:[%s1 + $0x180] sm:$0xf]
    %v115 = vld [vmem:[%s1 + $0x184] sm:$0xf]
    %v116 = vld [vmem:[%s1 + $0x188] sm:$0xf]
    %v117 = vld [vmem:[%s1 + $0x18c] sm:$0xf]
    %v118 = vld [vmem:[%s1 + $0x190] sm:$0xf]
    %v119 = vld [vmem:[%s1 + $0x194] sm:$0xf]
    %v120 = vld [vmem:[%s1 + $0x198] sm:$0xf]
    %v121 = vld [vmem:[%s1 + $0x19c] sm:$0xf]
    %v122 = vld [vmem:[%s1 + $0x1a0] sm:$0xf]
    %v123 = vld [vmem:[%s1 + $0x1a4] sm:$0xf]
    %v124 = vld [vmem:[%s1 + $0x1a8] sm:$0xf]
    %v125 = vld [vmem:[%s1 + $0x1ac] sm:$0xf]
    %v126 = vld [vmem:[%s1 + $0x1b0] sm:$0xf]
    %v127 = vld [vmem:[%s1 + $0x1b4] sm:$0xf]
    %v128 = vld [vmem:[%s1 + $0x1b8] sm:$0xf]
    %v129 = vld [vmem:[%s1 + $0x1bc] sm:$0xf]
    %v130 = vld [vmem:[%s1 + $0x1c0] sm:$0xf]
    %v131 = vld [vmem:[%s1 + $0x1c4] sm:$0xf]
    %v132 = vld [vmem:[%s1 + $0x1c8] sm:$0xf]
    %v133 = vld [vmem:[%s1 + $0x1cc] sm:$0xf]
    %v134 = vld [vmem:[%s1 + $0x1d0] sm:$0xf]
    %v135 = vld [vmem:[%s1 + $0x1d4] sm:$0xf]
    %v136 = vld [vmem:[%s1 + $0x1d8] sm:$0xf]
    %v137 = vld [vmem:[%s1 + $0x1dc] sm:$0xf]
    %v138 = vld [vmem:[%s1 + $0x1e0] sm:$0xf]
    %v139 = vld [vmem:[%s1 + $0x1e4] sm:$0xf]
    %v140 = vld [vmem:[%s1 + $0x1e8] sm:$0xf]
    %v141 = vld [vmem:[%s1 + $0x1ec] sm:$0xf]
    %v142 = vld [vmem:[%s1 + $0x1f0] sm:$0xf]
    %v143 = vld [vmem:[%s1 + $0x1f4] sm:$0xf]
    %v144 = vld [vmem:[%s1 + $0x1f8] sm:$0xf]
    %v145 = vld [vmem:[%s1 + $0x1fc] sm:$0xf]
    %v146 = vld [vmem:[%s1 + $0x200] sm:$0xf]
    %v147 = vld [vmem:[%s1 + $0x204] sm:$0xf]
    %v148 = vld [vmem:[%s1 + $0x208] sm:$0xf]
    %v149 = vld [vmem:[%s1 + $0x20c] sm:$0xf]
    %v150 = vld [vmem:[%s1 + $0x210] sm:$0xf]
    %v151 = vld [vmem:[%s1 + $0x214] sm:$0xf]
    %v152 = vld [vmem:[%s1 + $0x218] sm:$0xf]
    %v153 = vld [vmem:[%s1 + $0x21c] sm:$0xf]
    %v154 = vld [vmem:[%s1 + $0x220] sm:$0xf]
    %v155 = vld [vmem:[%s1 + $0x224] sm:$0xf]
    %v156 = vld [vmem:[%s1 + $0x228] sm:$0xf]
    %v157 = vld [vmem:[%s1 + $0x22c] sm:$0xf]
    %v158 = vld [vmem:[%s1 + $0x230] sm:$0xf]
    %v159 = vld [vmem:[%s1 + $0x234] sm:$0xf]
    %v160 = vld [vmem:[%s1 + $0x238] sm:$0xf]
    %v161 = vld [vmem:[%s1 + $0x23c] sm:$0xf]
    %v162 = vld [vmem:[%s1 + $0x240] sm:$0xf]
    %v163 = vld [vmem:[%s1 + $0x244] sm:$0xf]
    %v164 = vld [vmem:[%s1 + $0x248] sm:$0xf]
    %v165 = vld [vmem:[%s1 + $0x24c] sm:$0xf]
    %v166 = vld [vmem:[%s1 + $0x250] sm:$0xf]
    %v167 = vld [vmem:[%s1 + $0x254] sm:$0xf]
    %v168 = vld [vmem:[%s1 + $0x258] sm:$0xf]
    %v169 = vld [vmem:[%s1 + $0x25c] sm:$0xf]
    %v170 = vld [vmem:[%s1 + $0x260] sm:$0xf]
    %v171 = vld [vmem:[%s1 + $0x264] sm:$0xf]
    %v172 = vld [vmem:[%s1 + $0x268] sm:$0xf]
    %v173 = vld [vmem:[%s1 + $0x26c] sm:$0xf]
    %v174 = vld [vmem:[%s1 + $0x270] sm:$0xf]
    %v175 = vld [vmem:[%s1 + $0x274] sm:$0xf]
    %v176 = vld [vmem:[%s1 + $0x278] sm:$0xf]
    %v177 = vld [vmem:[%s1 + $0x27c] sm:$0xf]
    %v178 = vld [vmem:[%s1 + $0x280] sm:$0xf]
    %v179 = vld [vmem:[%s1 + $0x284] sm:$0xf]
    %v180 = vld [vmem:[%s1 + $0x288] sm:$0xf]
    %v181 = vld [vmem:[%s1 + $0x28c] sm:$0xf]
    %v182 = vld [vmem:[%s1 + $0x290] sm:$0xf]
    %v183 = vld [vmem:[%s1 + $0x294] sm:$0xf]
    %v184 = vld [vmem:[%s1 + $0x298] sm:$0xf]
    %v185 = vld [vmem:[%s1 + $0x29c] sm:$0xf]
    %v186 = vld [vmem:[%s1 + $0x2a0] sm:$0xf]
    %v187 = vld [vmem:[%s1 + $0x2a4] sm:$0xf]
    %v188 = vld [vmem:[%s1 + $0x2a8] sm:$0xf]
    %v189 = vld [vmem:[%s1 + $0x2ac] sm:$0xf]
    %v190 = vld [vmem:[%s1 + $0x2b0] sm:$0xf]
    %v191 = vld [vmem:[%s1 + $0x2b4] sm:$0xf]
    %v192 = vld [vmem:[%s1 + $0x2b8] sm:$0xf]
    %v193 = vld [vmem:[%s1 + $0x2bc] sm:$0xf]
    %v194 = vld [vmem:[%s1 + $0x2c0] sm:$0xf]
    %v195 = vld [vmem:[%s1 + $0x2c4] sm:$0xf]
    %v196 = vld [vmem:[%s1 + $0x2c8] sm:$0xf]
    %v197 = vld [vmem:[%s1 + $0x2cc] sm:$0xf]
    %v198 = vld [vmem:[%s1 + $0x2d0] sm:$0xf]
    %v199 = vld [vmem:[%s1 + $0x2d4] sm:$0xf]
    %v200 = vld [vmem:[%s1 + $0x2d8] sm:$0xf]
    %v201 = vld [vmem:[%s1 + $0x2dc] sm:$0xf]
    %v202 = vld [vmem:[%s1 + $0x2e0] sm:$0xf]
    %v203 = vld [vmem:[%s1 + $0x2e4] sm:$0xf]
    %v204 = vld [vmem:[%s1 + $0x2e8] sm:$0xf]
    %v205 = vld [vmem:[%s1 + $0x2ec] sm:$0xf]
    %v206 = vld [vmem:[%s1 + $0x2f0] sm:$0xf]
    %v207 = vld [vmem:[%s1 + $0x2f4] sm:$0xf]
    %v208 = vld [vmem:[%s1 + $0x2f8] sm:$0xf]
    %v209 = vld [vmem:[%s1 + $0x2fc] sm:$0xf]
    %v210 = vld [vmem:[%s1 + $0x300] sm:$0xf]
    %v211 = vld [vmem:[%s1 + $0x304] sm:$0xf]
    %v212 = vld [vmem:[%s1 + $0x308] sm:$0xf]
    %v213 = vld [vmem:[%s1 + $0x30c] sm:$0xf]
    %v214 = vld [vmem:[%s2] sm:$0x1]
    %v216 = vlaneseq
    %v217 = vshrl.u32 %v216, 7
    %v218 = vsub.s32 0, %v217
    %v219 = vrot.slane %v214, %v218
    %v223 = vcombine.high %v16, %v16
    %v225 = vunpack.c.l.s4 1966171168
    %v226 = vunpack.c.0.s8 %v225
    %v227 = vlaneseq
    %v228 = vshrl.u32 %v227, 7
    %v229 = vsub.s32 %v226, %v228
    %v230 = vrot.slane %v16, %v229
    %v232 = vunpack.c.l.s4 1966171168
    %v233 = vunpack.c.0.s8 %v232
    %v234 = vlaneseq
    %v235 = vshrl.u32 %v234, 7
    %v236 = vsub.s32 %v233, %v235
    %v237 = vrot.slane %v223, %v236
    %v238 = vcombine.high %v230, %v230
    %v239 = vcombine.high %v237, %v237
    %v241 = vunpack.c.l.s4 1966171168
    %v242 = vunpack.c.0.s8 %v241
    %v243 = vlaneseq
    %v244 = vshrl.u32 %v243, 7
    %v245 = vsub.s32 %v242, %v244
    %v246 = vrot.slane %v230, %v245
    %v248 = vunpack.c.l.s4 1966171168
    %v249 = vunpack.c.0.s8 %v248
    %v250 = vlaneseq
    %v251 = vshrl.u32 %v250, 7
    %v252 = vsub.s32 %v249, %v251
    %v253 = vrot.slane %v237, %v252
    %v255 = vunpack.c.l.s4 1966171168
    %v256 = vunpack.c.0.s8 %v255
    %v257 = vlaneseq
    %v258 = vshrl.u32 %v257, 7
    %v259 = vsub.s32 %v256, %v258
    %v260 = vrot.slane %v238, %v259
    %v262 = vunpack.c.l.s4 1966171168
    %v263 = vunpack.c.0.s8 %v262
    %v264 = vlaneseq
    %v265 = vshrl.u32 %v264, 7
    %v266 = vsub.s32 %v263, %v265
    %v267 = vrot.slane %v239, %v266
    %v268 = vcombine.high %v246, %v246
    %v269 = vcombine.high %v253, %v253
    %v270 = vcombine.high %v260, %v260
    %v271 = vcombine.high %v267, %v267
    %v272 = vcombine.high %v17, %v17
    %v274 = vunpack.c.l.s4 1966171168
    %v275 = vunpack.c.0.s8 %v274
    %v276 = vlaneseq
    %v277 = vshrl.u32 %v276, 7
    %v278 = vsub.s32 %v275, %v277
    %v279 = vrot.slane %v17, %v278
    %v281 = vunpack.c.l.s4 1966171168
    %v282 = vunpack.c.0.s8 %v281
    %v283 = vlaneseq
    %v284 = vshrl.u32 %v283, 7
    %v285 = vsub.s32 %v282, %v284
    %v286 = vrot.slane %v272, %v285
    %v287 = vcombine.high %v279, %v279
    %v289 = vunpack.c.l.s4 1966171168
    %v290 = vunpack.c.0.s8 %v289
    %v291 = vlaneseq
    %v292 = vshrl.u32 %v291, 7
    %v293 = vsub.s32 %v290, %v292
    %v294 = vrot.slane %v279, %v293
    %v296 = vunpack.c.l.s4 1966171168
    %v297 = vunpack.c.0.s8 %v296
    %v298 = vlaneseq
    %v299 = vshrl.u32 %v298, 7
    %v300 = vsub.s32 %v297, %v299
    %v301 = vrot.slane %v286, %v300
    %v303 = vunpack.c.l.s4 1966171168
    %v304 = vunpack.c.0.s8 %v303
    %v305 = vlaneseq
    %v306 = vshrl.u32 %v305, 7
    %v307 = vsub.s32 %v304, %v306
    %v308 = vrot.slane %v287, %v307
    %v309 = vcombine.high %v294, %v294
    %v310 = vcombine.high %v308, %v308
    %v519 = vunpack.c.l.b16 %v18
    %v520 = vunpack.c.l.b16 %v19
    %v521 = vunpack.c.l.b16 %v20
    %v522 = vunpack.c.l.b16 %v21
    %v523 = vunpack.c.l.b16 %v22
    %v524 = vunpack.c.l.b16 %v23
    %v525 = vunpack.c.l.b16 %v24
    %v526 = vunpack.c.l.b16 %v25
    %v527 = vunpack.c.l.b16 %v26
    %v528 = vunpack.c.l.b16 %v27
    %v529 = vunpack.c.l.b16 %v28
    %v530 = vunpack.c.l.b16 %v29
    %v531 = vunpack.c.l.b16 %v30
    %v532 = vunpack.c.l.b16 %v31
    %v533 = vunpack.c.l.b16 %v32
    %v534 = vunpack.c.l.b16 %v33
    %v535 = vunpack.c.l.b16 %v34
    %v536 = vunpack.c.l.b16 %v35
    %v537 = vunpack.c.l.b16 %v36
    %v538 = vunpack.c.l.b16 %v37
    %v539 = vunpack.c.l.b16 %v38
    %v540 = vunpack.c.l.b16 %v39
    %v541 = vunpack.c.l.b16 %v40
    %v542 = vunpack.c.l.b16 %v41
    %v543 = vunpack.c.l.b16 %v42
    %v544 = vunpack.c.l.b16 %v43
    %v545 = vunpack.c.l.b16 %v44
    %v546 = vunpack.c.l.b16 %v45
    %v547 = vunpack.c.l.b16 %v46
    %v548 = vunpack.c.l.b16 %v47
    %v549 = vunpack.c.l.b16 %v48
    %v550 = vunpack.c.l.b16 %v49
    %v551 = vunpack.c.l.b16 %v50
    %v552 = vunpack.c.l.b16 %v51
    %v553 = vunpack.c.l.b16 %v52
    %v554 = vunpack.c.l.b16 %v53
    %v555 = vunpack.c.l.b16 %v54
    %v556 = vunpack.c.l.b16 %v55
    %v557 = vunpack.c.l.b16 %v56
    %v558 = vunpack.c.l.b16 %v57
    %v559 = vunpack.c.l.b16 %v58
    %v560 = vunpack.c.l.b16 %v59
    %v561 = vunpack.c.l.b16 %v60
    %v562 = vunpack.c.l.b16 %v61
    %v563 = vunpack.c.l.b16 %v62
    %v564 = vunpack.c.l.b16 %v63
    %v565 = vunpack.c.l.b16 %v64
    %v566 = vunpack.c.l.b16 %v65
    %v567 = vunpack.c.l.b16 %v66
    %v568 = vunpack.c.l.b16 %v67
    %v569 = vunpack.c.l.b16 %v68
    %v570 = vunpack.c.l.b16 %v69
    %v571 = vunpack.c.l.b16 %v70
    %v572 = vunpack.c.l.b16 %v71
    %v573 = vunpack.c.l.b16 %v72
    %v574 = vunpack.c.l.b16 %v73
    %v575 = vunpack.c.l.b16 %v74
    %v576 = vunpack.c.l.b16 %v75
    %v577 = vunpack.c.l.b16 %v76
    %v578 = vunpack.c.l.b16 %v77
    %v579 = vunpack.c.l.b16 %v78
    %v580 = vunpack.c.l.b16 %v79
    %v581 = vunpack.c.l.b16 %v80
    %v582 = vunpack.c.l.b16 %v81
    %v583 = vunpack.c.l.b16 %v82
    %v584 = vunpack.c.l.b16 %v83
    %v585 = vunpack.c.l.b16 %v84
    %v586 = vunpack.c.l.b16 %v85
    %v587 = vunpack.c.l.b16 %v86
    %v588 = vunpack.c.l.b16 %v87
    %v589 = vunpack.c.l.b16 %v88
    %v590 = vunpack.c.l.b16 %v89
    %v591 = vunpack.c.l.b16 %v90
    %v592 = vunpack.c.l.b16 %v91
    %v593 = vunpack.c.l.b16 %v92
    %v594 = vunpack.c.l.b16 %v93
    %v595 = vunpack.c.l.b16 %v94
    %v596 = vunpack.c.l.b16 %v95
    %v597 = vunpack.c.l.b16 %v96
    %v598 = vunpack.c.l.b16 %v97
    %v599 = vunpack.c.l.b16 %v98
    %v600 = vunpack.c.l.b16 %v99
    %v601 = vunpack.c.l.b16 %v100
    %v602 = vunpack.c.l.b16 %v101
    %v603 = vunpack.c.l.b16 %v102
    %v604 = vunpack.c.l.b16 %v103
    %v605 = vunpack.c.l.b16 %v104
    %v606 = vunpack.c.l.b16 %v105
    %v607 = vunpack.c.l.b16 %v106
    %v608 = vunpack.c.l.b16 %v107
    %v609 = vunpack.c.l.b16 %v108
    %v610 = vunpack.c.l.b16 %v109
    %v611 = vunpack.c.l.b16 %v110
    %v612 = vunpack.c.l.b16 %v111
    %v613 = vunpack.c.l.b16 %v112
    %v614 = vunpack.c.l.b16 %v113
    %v615 = vunpack.c.l.b16 %v114
    %v616 = vunpack.c.l.b16 %v115
    %v617 = vunpack.c.l.b16 %v116
    %v618 = vunpack.c.l.b16 %v117
    %v619 = vunpack.c.l.b16 %v118
    %v620 = vunpack.c.l.b16 %v119
    %v621 = vunpack.c.l.b16 %v120
    %v622 = vunpack.c.l.b16 %v121
    %v623 = vunpack.c.l.b16 %v122
    %v624 = vunpack.c.l.b16 %v123
    %v625 = vunpack.c.l.b16 %v124
    %v626 = vunpack.c.l.b16 %v125
    %v627 = vunpack.c.l.b16 %v126
    %v628 = vunpack.c.l.b16 %v127
    %v629 = vunpack.c.l.b16 %v128
    %v630 = vunpack.c.l.b16 %v129
    %v631 = vunpack.c.l.b16 %v130
    %v632 = vunpack.c.l.b16 %v131
    %v633 = vunpack.c.l.b16 %v132
    %v634 = vunpack.c.l.b16 %v133
    %v635 = vunpack.c.l.b16 %v134
    %v636 = vunpack.c.l.b16 %v135
    %v637 = vunpack.c.l.b16 %v136
    %v638 = vunpack.c.l.b16 %v137
    %v639 = vunpack.c.l.b16 %v138
    %v640 = vunpack.c.l.b16 %v139
    %v641 = vunpack.c.l.b16 %v140
    %v642 = vunpack.c.l.b16 %v141
    %v643 = vunpack.c.l.b16 %v142
    %v644 = vunpack.c.l.b16 %v143
    %v645 = vunpack.c.l.b16 %v144
    %v646 = vunpack.c.l.b16 %v145
    %v647 = vunpack.c.l.b16 %v146
    %v648 = vunpack.c.l.b16 %v147
    %v649 = vunpack.c.l.b16 %v148
    %v650 = vunpack.c.l.b16 %v149
    %v651 = vunpack.c.l.b16 %v150
    %v652 = vunpack.c.l.b16 %v151
    %v653 = vunpack.c.l.b16 %v152
    %v654 = vunpack.c.l.b16 %v153
    %v655 = vunpack.c.l.b16 %v154
    %v656 = vunpack.c.l.b16 %v155
    %v657 = vunpack.c.l.b16 %v156
    %v658 = vunpack.c.l.b16 %v157
    %v659 = vunpack.c.l.b16 %v158
    %v660 = vunpack.c.l.b16 %v159
    %v661 = vunpack.c.l.b16 %v160
    %v662 = vunpack.c.l.b16 %v161
    %v663 = vunpack.c.l.b16 %v162
    %v664 = vunpack.c.l.b16 %v163
    %v665 = vunpack.c.l.b16 %v164
    %v666 = vunpack.c.l.b16 %v165
    %v667 = vunpack.c.l.b16 %v166
    %v668 = vunpack.c.l.b16 %v167
    %v669 = vunpack.c.l.b16 %v168
    %v670 = vunpack.c.l.b16 %v169
    %v671 = vunpack.c.l.b16 %v170
    %v672 = vunpack.c.l.b16 %v171
    %v673 = vunpack.c.l.b16 %v172
    %v674 = vunpack.c.l.b16 %v173
    %v675 = vunpack.c.l.b16 %v174
    %v676 = vunpack.c.l.b16 %v175
    %v677 = vunpack.c.l.b16 %v176
    %v678 = vunpack.c.l.b16 %v177
    %v679 = vunpack.c.l.b16 %v178
    %v680 = vunpack.c.l.b16 %v179
    %v681 = vunpack.c.l.b16 %v180
    %v682 = vunpack.c.l.b16 %v181
    %v683 = vunpack.c.l.b16 %v182
    %v684 = vunpack.c.l.b16 %v183
    %v685 = vunpack.c.l.b16 %v184
    %v686 = vunpack.c.l.b16 %v185
    %v687 = vunpack.c.l.b16 %v186
    %v688 = vunpack.c.l.b16 %v187
    %v689 = vunpack.c.l.b16 %v188
    %v690 = vunpack.c.l.b16 %v189
    %v691 = vunpack.c.l.b16 %v190
    %v692 = vunpack.c.l.b16 %v191
    %v693 = vunpack.c.l.b16 %v192
    %v694 = vunpack.c.l.b16 %v193
    %v695 = vunpack.c.l.b16 %v194
    %v696 = vunpack.c.l.b16 %v195
    %v697 = vunpack.c.l.b16 %v196
    %v698 = vunpack.c.l.b16 %v197
    %v699 = vunpack.c.l.b16 %v198
    %v700 = vunpack.c.l.b16 %v199
    %v701 = vunpack.c.l.b16 %v200
    %v702 = vunpack.c.l.b16 %v201
    %v703 = vunpack.c.l.b16 %v202
    %v704 = vunpack.c.l.b16 %v203
    %v705 = vunpack.c.l.b16 %v204
    %v706 = vunpack.c.l.b16 %v205
    %v707 = vunpack.c.l.b16 %v206
    %v708 = vunpack.c.l.b16 %v207
    %v709 = vunpack.c.l.b16 %v208
    %v710 = vunpack.c.l.b16 %v209
    %v711 = vunpack.c.l.b16 %v210
    %v712 = vunpack.c.l.b16 %v211
    %v713 = vunpack.c.l.b16 %v212
    %v714 = vunpack.c.l.b16 %v213
    %v715 = vpack.c.b16 %v520, %v519
    %v716 = vpack.c.b16 %v522, %v521
    %v717 = vpack.c.b16 %v524, %v523
    %v718 = vpack.c.b16 %v526, %v525
    %v719 = vpack.c.b16 %v528, %v527
    %v720 = vpack.c.b16 %v530, %v529
    %v721 = vpack.c.b16 %v532, %v531
    %v722 = vpack.c.b16 %v534, %v533
    %v723 = vpack.c.b16 %v536, %v535
    %v724 = vpack.c.b16 %v538, %v537
    %v725 = vpack.c.b16 %v540, %v539
    %v726 = vpack.c.b16 %v542, %v541
    %v727 = vpack.c.b16 %v544, %v543
    %v728 = vpack.c.b16 %v546, %v545
    %v729 = vpack.c.b16 %v548, %v547
    %v730 = vpack.c.b16 %v550, %v549
    %v731 = vpack.c.b16 %v552, %v551
    %v732 = vpack.c.b16 %v554, %v553
    %v733 = vpack.c.b16 %v556, %v555
    %v734 = vpack.c.b16 %v558, %v557
    %v735 = vpack.c.b16 %v560, %v559
    %v736 = vpack.c.b16 %v562, %v561
    %v737 = vpack.c.b16 %v564, %v563
    %v738 = vpack.c.b16 %v566, %v565
    %v739 = vpack.c.b16 %v568, %v567
    %v740 = vpack.c.b16 %v570, %v569
    %v741 = vpack.c.b16 %v572, %v571
    %v742 = vpack.c.b16 %v574, %v573
    %v743 = vpack.c.b16 %v576, %v575
    %v744 = vpack.c.b16 %v578, %v577
    %v745 = vpack.c.b16 %v580, %v579
    %v746 = vpack.c.b16 %v582, %v581
    %v747 = vpack.c.b16 %v584, %v583
    %v748 = vpack.c.b16 %v586, %v585
    %v749 = vpack.c.b16 %v588, %v587
    %v750 = vpack.c.b16 %v590, %v589
    %v751 = vpack.c.b16 %v592, %v591
    %v752 = vpack.c.b16 %v594, %v593
    %v753 = vpack.c.b16 %v596, %v595
    %v754 = vpack.c.b16 %v598, %v597
    %v755 = vpack.c.b16 %v600, %v599
    %v756 = vpack.c.b16 %v602, %v601
    %v757 = vpack.c.b16 %v604, %v603
    %v758 = vpack.c.b16 %v606, %v605
    %v759 = vpack.c.b16 %v608, %v607
    %v760 = vpack.c.b16 %v610, %v609
    %v761 = vpack.c.b16 %v612, %v611
    %v762 = vpack.c.b16 %v614, %v613
    %v763 = vpack.c.b16 %v616, %v615
    %v764 = vpack.c.b16 %v618, %v617
    %v765 = vpack.c.b16 %v620, %v619
    %v766 = vpack.c.b16 %v622, %v621
    %v767 = vpack.c.b16 %v624, %v623
    %v768 = vpack.c.b16 %v626, %v625
    %v769 = vpack.c.b16 %v628, %v627
    %v770 = vpack.c.b16 %v630, %v629
    %v771 = vpack.c.b16 %v632, %v631
    %v772 = vpack.c.b16 %v634, %v633
    %v773 = vpack.c.b16 %v636, %v635
    %v774 = vpack.c.b16 %v638, %v637
    %v775 = vpack.c.b16 %v640, %v639
    %v776 = vpack.c.b16 %v642, %v641
    %v777 = vpack.c.b16 %v644, %v643
    %v778 = vpack.c.b16 %v646, %v645
    %v779 = vpack.c.b16 %v648, %v647
    %v780 = vpack.c.b16 %v650, %v649
    %v781 = vpack.c.b16 %v652, %v651
    %v782 = vpack.c.b16 %v654, %v653
    %v783 = vpack.c.b16 %v656, %v655
    %v784 = vpack.c.b16 %v658, %v657
    %v785 = vpack.c.b16 %v660, %v659
    %v786 = vpack.c.b16 %v662, %v661
    %v787 = vpack.c.b16 %v664, %v663
    %v788 = vpack.c.b16 %v666, %v665
    %v789 = vpack.c.b16 %v668, %v667
    %v790 = vpack.c.b16 %v670, %v669
    %v791 = vpack.c.b16 %v672, %v671
    %v792 = vpack.c.b16 %v674, %v673
    %v793 = vpack.c.b16 %v676, %v675
    %v794 = vpack.c.b16 %v678, %v677
    %v795 = vpack.c.b16 %v680, %v679
    %v796 = vpack.c.b16 %v682, %v681
    %v797 = vpack.c.b16 %v684, %v683
    %v798 = vpack.c.b16 %v686, %v685
    %v799 = vpack.c.b16 %v688, %v687
    %v800 = vpack.c.b16 %v690, %v689
    %v801 = vpack.c.b16 %v692, %v691
    %v802 = vpack.c.b16 %v694, %v693
    %v803 = vpack.c.b16 %v696, %v695
    %v804 = vpack.c.b16 %v698, %v697
    %v805 = vpack.c.b16 %v700, %v699
    %v806 = vpack.c.b16 %v702, %v701
    %v807 = vpack.c.b16 %v704, %v703
    %v808 = vpack.c.b16 %v706, %v705
    %v809 = vpack.c.b16 %v708, %v707
    %v810 = vpack.c.b16 %v710, %v709
    %v811 = vpack.c.b16 %v712, %v711
    %v812 = vpack.c.b16 %v714, %v713
    %vm911 = vcmask 261120
    %v913 = vsel %vm911, %v301, 0
    %915 = vmatprep.subr.bf16.mxu0 0
    %916 = vmatpush1.bf16.msra.mxu0 %v715
    %917 = vmatprep.subr.bf16.mxu0 0
    %918 = vmatpush1.bf16.msra.mxu0 %v716
    %919 = vmatprep.subr.bf16.mxu0 0
    %920 = vmatpush1.bf16.msra.mxu0 %v717
    %921 = vmatprep.subr.bf16.mxu0 0
    %922 = vmatpush1.bf16.msra.mxu0 %v718
    %923 = vmatprep.subr.bf16.mxu0 0
    %924 = vmatpush1.bf16.msra.mxu0 %v719
    %925 = vmatprep.subr.bf16.mxu0 0
    %926 = vmatpush1.bf16.msra.mxu0 %v720
    %927 = vmatprep.subr.bf16.mxu0 0
    %928 = vmatpush1.bf16.msra.mxu0 %v721
    %929 = vmatprep.subr.bf16.mxu0 0
    %930 = vmatpush1.bf16.msra.mxu0 %v722
    %931 = vmatprep.subr.bf16.mxu0 0
    %932 = vmatpush1.bf16.msra.mxu0 %v723
    %933 = vmatprep.subr.bf16.mxu0 0
    %934 = vmatpush1.bf16.msra.mxu0 %v724
    %935 = vmatprep.subr.bf16.mxu0 0
    %936 = vmatpush1.bf16.msra.mxu0 %v725
    %937 = vmatprep.subr.bf16.mxu0 0
    %938 = vmatpush1.bf16.msra.mxu0 %v726
    %939 = vmatprep.subr.bf16.mxu0 0
    %940 = vmatpush1.bf16.msra.mxu0 %v727
    %941 = vmatprep.subr.bf16.mxu0 0
    %942 = vmatpush1.bf16.msra.mxu0 %v728
    %943 = vmatprep.subr.bf16.mxu0 0
    %944 = vmatpush1.bf16.msra.mxu0 %v729
    %945 = vmatprep.subr.bf16.mxu0 0
    %946 = vmatpush1.bf16.msra.mxu0 %v730
    %947 = vmatprep.mubr.bf16.mxu0 %v260
    %948 = vmatmul.mubr.bf16.gmra.mrb[0].mxu0 %v246
    %v949 = vpop.f32.mrb[0].mxu0
    %v950 = vadd.f32 %v219, %v949
    %v951 = vpop.f32.mrb[0].mxu0
    %v952 = vpop.f32.mrb[0].mxu0
    %v953 = vpop.f32.mrb[0].mxu0
    %954 = vdwg.mxu0
    %955 = vmatprep.subr.bf16.mxu0 0
    %956 = vmatpush1.bf16.msra.mxu0 %v731
    %957 = vmatprep.subr.bf16.mxu0 0
    %958 = vmatpush1.bf16.msra.mxu0 %v732
    %959 = vmatprep.subr.bf16.mxu0 0
    %960 = vmatpush1.bf16.msra.mxu0 %v733
    %961 = vmatprep.subr.bf16.mxu0 0
    %962 = vmatpush1.bf16.msra.mxu0 %v734
    %963 = vmatprep.subr.bf16.mxu0 0
    %964 = vmatpush1.bf16.msra.mxu0 %v735
    %965 = vmatprep.subr.bf16.mxu0 0
    %966 = vmatpush1.bf16.msra.mxu0 %v736
    %967 = vmatprep.subr.bf16.mxu0 0
    %968 = vmatpush1.bf16.msra.mxu0 %v737
    %969 = vmatprep.subr.bf16.mxu0 0
    %970 = vmatpush1.bf16.msra.mxu0 %v738
    %971 = vmatprep.subr.bf16.mxu0 0
    %972 = vmatpush1.bf16.msra.mxu0 %v739
    %973 = vmatprep.subr.bf16.mxu0 0
    %974 = vmatpush1.bf16.msra.mxu0 %v740
    %975 = vmatprep.subr.bf16.mxu0 0
    %976 = vmatpush1.bf16.msra.mxu0 %v741
    %977 = vmatprep.subr.bf16.mxu0 0
    %978 = vmatpush1.bf16.msra.mxu0 %v742
    %979 = vmatprep.subr.bf16.mxu0 0
    %980 = vmatpush1.bf16.msra.mxu0 %v743
    %981 = vmatprep.subr.bf16.mxu0 0
    %982 = vmatpush1.bf16.msra.mxu0 %v744
    %983 = vmatprep.subr.bf16.mxu0 0
    %984 = vmatpush1.bf16.msra.mxu0 %v745
    %985 = vmatprep.subr.bf16.mxu0 0
    %986 = vmatpush1.bf16.msra.mxu0 %v746
    %987 = vmatprep.mubr.bf16.mxu0 %v270
    %988 = vmatmul.mubr.bf16.gmra.mrb[0].mxu0 %v268
    %v989 = vpop.f32.mrb[0].mxu0
    %v990 = vadd.f32 %v950, %v989
    %v991 = vpop.f32.mrb[0].mxu0
    %v992 = vpop.f32.mrb[0].mxu0
    %v993 = vpop.f32.mrb[0].mxu0
    %994 = vdwg.mxu0
    %995 = vmatprep.subr.bf16.mxu0 0
    %996 = vmatpush1.bf16.msra.mxu0 %v747
    %997 = vmatprep.subr.bf16.mxu0 0
    %998 = vmatpush1.bf16.msra.mxu0 %v748
    %999 = vmatprep.subr.bf16.mxu0 0
    %1000 = vmatpush1.bf16.msra.mxu0 %v749
    %1001 = vmatprep.subr.bf16.mxu0 0
    %1002 = vmatpush1.bf16.msra.mxu0 %v750
    %1003 = vmatprep.subr.bf16.mxu0 0
    %1004 = vmatpush1.bf16.msra.mxu0 %v751
    %1005 = vmatprep.subr.bf16.mxu0 0
    %1006 = vmatpush1.bf16.msra.mxu0 %v752
    %1007 = vmatprep.subr.bf16.mxu0 0
    %1008 = vmatpush1.bf16.msra.mxu0 %v753
    %1009 = vmatprep.subr.bf16.mxu0 0
    %1010 = vmatpush1.bf16.msra.mxu0 %v754
    %1011 = vmatprep.subr.bf16.mxu0 0
    %1012 = vmatpush1.bf16.msra.mxu0 %v755
    %1013 = vmatprep.subr.bf16.mxu0 0
    %1014 = vmatpush1.bf16.msra.mxu0 %v756
    %1015 = vmatprep.subr.bf16.mxu0 0
    %1016 = vmatpush1.bf16.msra.mxu0 %v757
    %1017 = vmatprep.subr.bf16.mxu0 0
    %1018 = vmatpush1.bf16.msra.mxu0 %v758
    %1019 = vmatprep.subr.bf16.mxu0 0
    %1020 = vmatpush1.bf16.msra.mxu0 %v759
    %1021 = vmatprep.subr.bf16.mxu0 0
    %1022 = vmatpush1.bf16.msra.mxu0 %v760
    %1023 = vmatprep.subr.bf16.mxu0 0
    %1024 = vmatpush1.bf16.msra.mxu0 %v761
    %1025 = vmatprep.subr.bf16.mxu0 0
    %1026 = vmatpush1.bf16.msra.mxu0 %v762
    %1027 = vmatprep.mubr.bf16.mxu0 %v267
    %1028 = vmatmul.mubr.bf16.gmra.mrb[0].mxu0 %v253
    %v1029 = vpop.f32.mrb[0].mxu0
    %v1030 = vadd.f32 %v990, %v1029
    %v1031 = vpop.f32.mrb[0].mxu0
    %v1032 = vpop.f32.mrb[0].mxu0
    %v1033 = vpop.f32.mrb[0].mxu0
    %1034 = vdwg.mxu0
    %1035 = vmatprep.subr.bf16.mxu0 0
    %1036 = vmatpush1.bf16.msra.mxu0 %v763
    %1037 = vmatprep.subr.bf16.mxu0 0
    %1038 = vmatpush1.bf16.msra.mxu0 %v764
    %1039 = vmatprep.subr.bf16.mxu0 0
    %1040 = vmatpush1.bf16.msra.mxu0 %v765
    %1041 = vmatprep.subr.bf16.mxu0 0
    %1042 = vmatpush1.bf16.msra.mxu0 %v766
    %1043 = vmatprep.subr.bf16.mxu0 0
    %1044 = vmatpush1.bf16.msra.mxu0 %v767
    %1045 = vmatprep.subr.bf16.mxu0 0
    %1046 = vmatpush1.bf16.msra.mxu0 %v768
    %1047 = vmatprep.subr.bf16.mxu0 0
    %1048 = vmatpush1.bf16.msra.mxu0 %v769
    %1049 = vmatprep.subr.bf16.mxu0 0
    %1050 = vmatpush1.bf16.msra.mxu0 %v770
    %1051 = vmatprep.subr.bf16.mxu0 0
    %1052 = vmatpush1.bf16.msra.mxu0 %v771
    %1053 = vmatprep.subr.bf16.mxu0 0
    %1054 = vmatpush1.bf16.msra.mxu0 %v772
    %1055 = vmatprep.subr.bf16.mxu0 0
    %1056 = vmatpush1.bf16.msra.mxu0 %v773
    %1057 = vmatprep.subr.bf16.mxu0 0
    %1058 = vmatpush1.bf16.msra.mxu0 %v774
    %1059 = vmatprep.subr.bf16.mxu0 0
    %1060 = vmatpush1.bf16.msra.mxu0 %v775
    %1061 = vmatprep.subr.bf16.mxu0 0
    %1062 = vmatpush1.bf16.msra.mxu0 %v776
    %1063 = vmatprep.subr.bf16.mxu0 0
    %1064 = vmatpush1.bf16.msra.mxu0 %v777
    %1065 = vmatprep.subr.bf16.mxu0 0
    %1066 = vmatpush1.bf16.msra.mxu0 %v778
    %1067 = vmatprep.mubr.bf16.mxu0 %v271
    %1068 = vmatmul.mubr.bf16.gmra.mrb[0].mxu0 %v269
    %v1069 = vpop.f32.mrb[0].mxu0
    %v1070 = vadd.f32 %v1030, %v1069
    %v1071 = vpop.f32.mrb[0].mxu0
    %v1072 = vpop.f32.mrb[0].mxu0
    %v1073 = vpop.f32.mrb[0].mxu0
    %1074 = vdwg.mxu0
    %1075 = vmatprep.subr.bf16.mxu0 0
    %1076 = vmatpush1.bf16.msra.mxu0 %v779
    %1077 = vmatprep.subr.bf16.mxu0 0
    %1078 = vmatpush1.bf16.msra.mxu0 %v780
    %1079 = vmatprep.subr.bf16.mxu0 0
    %1080 = vmatpush1.bf16.msra.mxu0 %v781
    %1081 = vmatprep.subr.bf16.mxu0 0
    %1082 = vmatpush1.bf16.msra.mxu0 %v782
    %1083 = vmatprep.subr.bf16.mxu0 0
    %1084 = vmatpush1.bf16.msra.mxu0 %v783
    %1085 = vmatprep.subr.bf16.mxu0 0
    %1086 = vmatpush1.bf16.msra.mxu0 %v784
    %1087 = vmatprep.subr.bf16.mxu0 0
    %1088 = vmatpush1.bf16.msra.mxu0 %v785
    %1089 = vmatprep.subr.bf16.mxu0 0
    %1090 = vmatpush1.bf16.msra.mxu0 %v786
    %1091 = vmatprep.subr.bf16.mxu0 0
    %1092 = vmatpush1.bf16.msra.mxu0 %v787
    %1093 = vmatprep.subr.bf16.mxu0 0
    %1094 = vmatpush1.bf16.msra.mxu0 %v788
    %1095 = vmatprep.subr.bf16.mxu0 0
    %1096 = vmatpush1.bf16.msra.mxu0 %v789
    %1097 = vmatprep.subr.bf16.mxu0 0
    %1098 = vmatpush1.bf16.msra.mxu0 %v790
    %1099 = vmatprep.subr.bf16.mxu0 0
    %1100 = vmatpush1.bf16.msra.mxu0 %v791
    %1101 = vmatprep.subr.bf16.mxu0 0
    %1102 = vmatpush1.bf16.msra.mxu0 %v792
    %1103 = vmatprep.subr.bf16.mxu0 0
    %1104 = vmatpush1.bf16.msra.mxu0 %v793
    %1105 = vmatprep.subr.bf16.mxu0 0
    %1106 = vmatpush1.bf16.msra.mxu0 %v794
    %1107 = vmatprep.mubr.bf16.mxu0 %v308
    %1108 = vmatmul.mubr.bf16.gmra.mrb[0].mxu0 %v294
    %v1109 = vpop.f32.mrb[0].mxu0
    %v1110 = vadd.f32 %v1070, %v1109
    %v1111 = vpop.f32.mrb[0].mxu0
    %v1112 = vpop.f32.mrb[0].mxu0
    %v1113 = vpop.f32.mrb[0].mxu0
    %1114 = vdwg.mxu0
    %1115 = vmatprep.subr.bf16.mxu0 0
    %1116 = vmatpush1.bf16.msra.mxu0 %v795
    %1117 = vmatprep.subr.bf16.mxu0 0
    %1118 = vmatpush1.bf16.msra.mxu0 %v796
    %1119 = vmatprep.subr.bf16.mxu0 0
    %1120 = vmatpush1.bf16.msra.mxu0 %v797
    %1121 = vmatprep.subr.bf16.mxu0 0
    %1122 = vmatpush1.bf16.msra.mxu0 %v798
    %1123 = vmatprep.subr.bf16.mxu0 0
    %1124 = vmatpush1.bf16.msra.mxu0 %v799
    %1125 = vmatprep.subr.bf16.mxu0 0
    %1126 = vmatpush1.bf16.msra.mxu0 %v800
    %1127 = vmatprep.subr.bf16.mxu0 0
    %1128 = vmatpush1.bf16.msra.mxu0 %v801
    %1129 = vmatprep.subr.bf16.mxu0 0
    %1130 = vmatpush1.bf16.msra.mxu0 %v802
    %1131 = vmatprep.subr.bf16.mxu0 0
    %1132 = vmatpush1.bf16.msra.mxu0 %v803
    %1133 = vmatprep.subr.bf16.mxu0 0
    %1134 = vmatpush1.bf16.msra.mxu0 %v804
    %1135 = vmatprep.subr.bf16.mxu0 0
    %1136 = vmatpush1.bf16.msra.mxu0 %v805
    %1137 = vmatprep.subr.bf16.mxu0 0
    %1138 = vmatpush1.bf16.msra.mxu0 %v806
    %1139 = vmatprep.subr.bf16.mxu0 0
    %1140 = vmatpush1.bf16.msra.mxu0 %v807
    %1141 = vmatprep.subr.bf16.mxu0 0
    %1142 = vmatpush1.bf16.msra.mxu0 %v808
    %1143 = vmatprep.subr.bf16.mxu0 0
    %1144 = vmatpush1.bf16.msra.mxu0 %v809
    %1145 = vmatprep.subr.bf16.mxu0 0
    %1146 = vmatpush1.bf16.msra.mxu0 %v810
    %1147 = vmatprep.mubr.bf16.mxu0 %v310
    %1148 = vmatmul.mubr.bf16.gmra.mrb[0].mxu0 %v309
    %v1149 = vpop.f32.mrb[0].mxu0
    %v1150 = vadd.f32 %v1110, %v1149
    %v1151 = vpop.f32.mrb[0].mxu0
    %v1152 = vpop.f32.mrb[0].mxu0
    %v1153 = vpop.f32.mrb[0].mxu0
    %1154 = vdwg.mxu0
    %1155 = vmatprep.subr.bf16.mxu0 0
    %1156 = vmatpush1.bf16.msra.mxu0 %v811
    %1157 = vmatprep.subr.bf16.mxu0 0
    %1158 = vmatpush1.bf16.msra.mxu0 %v812
    %1159 = vmatprep.subr.bf16.mxu0 0
    %1160 = vmatpush1.bf16.msra.mxu0 0
    %1161 = vmatprep.subr.bf16.mxu0 0
    %1162 = vmatpush1.bf16.msra.mxu0 0
    %1163 = vmatprep.subr.bf16.mxu0 0
    %1164 = vmatpush1.bf16.msra.mxu0 0
    %1165 = vmatprep.subr.bf16.mxu0 0
    %1166 = vmatpush1.bf16.msra.mxu0 0
    %1167 = vmatprep.subr.bf16.mxu0 0
    %1168 = vmatpush1.bf16.msra.mxu0 0
    %1169 = vmatprep.subr.bf16.mxu0 0
    %1170 = vmatpush1.bf16.msra.mxu0 0
    %1171 = vmatprep.subr.bf16.mxu0 0
    %1172 = vmatpush1.bf16.msra.mxu0 0
    %1173 = vmatprep.subr.bf16.mxu0 0
    %1174 = vmatpush1.bf16.msra.mxu0 0
    %1175 = vmatprep.subr.bf16.mxu0 0
    %1176 = vmatpush1.bf16.msra.mxu0 0
    %1177 = vmatprep.subr.bf16.mxu0 0
    %1178 = vmatpush1.bf16.msra.mxu0 0
    %1179 = vmatprep.subr.bf16.mxu0 0
    %1180 = vmatpush1.bf16.msra.mxu0 0
    %1181 = vmatprep.subr.bf16.mxu0 0
    %1182 = vmatpush1.bf16.msra.mxu0 0
    %1183 = vmatprep.subr.bf16.mxu0 0
    %1184 = vmatpush1.bf16.msra.mxu0 0
    %1185 = vmatprep.subr.bf16.mxu0 0
    %1186 = vmatpush1.bf16.msra.mxu0 0
    %1187 = vmatprep.mubr.bf16.mxu0 0
    %1188 = vmatmul.mubr.bf16.gmra.mrb[0].mxu0 %v913
    %v1189 = vpop.f32.mrb[0].mxu0
    %v1190 = vadd.f32 %v1150, %v1189
    %v1191 = vpop.f32.mrb[0].mxu0
    %v1192 = vpop.f32.mrb[0].mxu0
    %v1193 = vpop.f32.mrb[0].mxu0
    %1194 = vdwg.mxu0
    %vm1195 = vcmask 74752
    %1196 = vst.msk [vmem:[#allocation2] sm:$0x3] %vm1195, %v1190
    // Predicated region
    $region14: #{cnn_forward.5} parent=1 // pred_check
      _
    $region15: #{cnn_forward.5} parent=1 // pred_check_branch
      %1198 = sbr.rel (0) target = $region17
    $region16: #{cnn_forward.5} parent=1 // pred_region
      %s1200 = ssub.s32 32, 32
      %1201 = vsyncadd [#allocation3], %s1200
      %s1203 = sshll.u32 [#allocation2], 4
      %s1204 = int_to_ptr.vmem [resolvable:$true] %s1203
      %1206 = dma.vmem_to_hbm [thread:$0]  %s1204, 32, %s3, [#allocation3]
    $region17: #{cnn_forward.5} parent=1 // pred_fallthru
      _
    // Predicated region
    $region18: #{cnn_forward.5} parent=1 // pred_check
      _
    $region19: #{cnn_forward.5} parent=1 // pred_check_branch
      %1208 = sbr.rel (0) target = $region21
    $region20: #{cnn_forward.5} parent=1 // pred_region
      %1209 = dma.done [#allocation3], 32
    $region21: #{cnn_forward.5} parent=1 // pred_fallthru
      _
    %1210 = vsyncpa [#allocation3], 1

</llo_original>
